<compile_context>
chip_gen: v7x
topology: tpu7x:2x2x1
jax: 0.10.0
libtpu: 0.0.40
codegen_flags: <defaults>
</compile_context>

<pallas_src>
import functools

import jax
import jax.numpy as jnp
from jax import lax
from jax.experimental import pallas as pl
from jax.experimental.pallas import tpu as pltpu


def _lstm_kernel(x_ref, wih_ref, b_ref,
                 whh_i_ref, whh_f_ref, whh_g_ref, whh_o_ref,
                 wout_ref, bout_ref,
                 out_ref, *, seq_len, batch):
    """LSTM recurrence + tanh/maxpool/tanh + linear + softmax (all in VMEM).

    Refs:
      x_ref     : (S*B, E)   input sequence, flattened (seq-major)
      wih_ref   : (E, 4H)    fused W_ih^T, gate order i, f, g, o (128 lanes)
      b_ref     : (1, 4H)    fused bias (b_ih + b_hh)
      whh_*_ref : (H, H)     per-gate W_hh^T blocks
      wout_ref  : (H, C)     hidden2label.weight^T
      bout_ref  : (1, C)     hidden2label.bias
      out_ref   : (B, C)     softmax probabilities
    """
    S = seq_len
    B = batch
    H = whh_i_ref.shape[0]

    # ---- Input projection for ALL timesteps: ONE lane-dense MXU matmul. ----
    xg = jnp.dot(x_ref[...], wih_ref[...],
                 preferred_element_type=jnp.float32) + b_ref[...]   # (S*B, 4H)

    # Per-gate split done once, hoisted out of the recurrence.
    xg_i = xg[:, 0 * H:1 * H].reshape(S, B, H)
    xg_f = xg[:, 1 * H:2 * H].reshape(S, B, H)
    xg_g = xg[:, 2 * H:3 * H].reshape(S, B, H)
    xg_o = xg[:, 3 * H:4 * H].reshape(S, B, H)

    # Hoist recurrent weight loads out of the loop.
    w_i = whh_i_ref[...]
    w_f = whh_f_ref[...]
    w_g = whh_g_ref[...]
    w_o = whh_o_ref[...]

    # ---- Recurrence: fully unrolled, state carried in vregs. ----
    # t = 0 specialized: h0 = c0 = 0  =>  gates = xg[0], and f*c0 == 0.
    i0 = jax.nn.sigmoid(xg_i[0])
    g0 = jnp.tanh(xg_g[0])
    o0 = jax.nn.sigmoid(xg_o[0])
    c = i0 * g0
    h = o0 * jnp.tanh(c)
    m = h                                                  # running max of h_t

    for t in range(1, S):                                  # static trip count
        i = jax.nn.sigmoid(xg_i[t] + jnp.dot(h, w_i,
                                             preferred_element_type=jnp.float32))
        f = jax.nn.sigmoid(xg_f[t] + jnp.dot(h, w_f,
                                             preferred_element_type=jnp.float32))
        g = jnp.tanh(xg_g[t] + jnp.dot(h, w_g,
                                       preferred_element_type=jnp.float32))
        o = jax.nn.sigmoid(xg_o[t] + jnp.dot(h, w_o,
                                             preferred_element_type=jnp.float32))
        c = f * c + i * g
        h = o * jnp.tanh(c)
        # tanh hoisted out of the pool: max_t(tanh(h_t)) == tanh(max_t(h_t))
        m = jnp.maximum(m, h)

    # tanh(max_pool(tanh(lstm_out))) == tanh(tanh(max_t h_t))
    pooled = jnp.tanh(jnp.tanh(m))                         # (B, H)
    # TODO(synk): nn.Dropout is identity at inference (training=False); omitted.
    logits = jnp.dot(pooled, wout_ref[...],
                     preferred_element_type=jnp.float32) + bout_ref[...]
    out_ref[...] = jax.nn.softmax(logits, axis=-1)


def prepare_params(w_ih, w_hh, b_ih, b_hh, w_out, b_out):
    """One-time weight preparation (outside the per-call path).

    PyTorch layouts in: w_ih (4H,E), w_hh (4H,H), b_ih/b_hh (4H,),
    w_out (C,H), b_out (C,).  Gate order i, f, g, o.
    """
    H4, _ = w_ih.shape
    H = H4 // 4
    C = w_out.shape[0]

    wih_t = jnp.asarray(w_ih, jnp.float32).T               # (E, 4H) fused
    whh_t = jnp.asarray(w_hh, jnp.float32).T               # (H, 4H)
    bias = (jnp.asarray(b_ih, jnp.float32) +
            jnp.asarray(b_hh, jnp.float32)).reshape(1, 4 * H)

    whh_split = tuple(whh_t[:, k * H:(k + 1) * H] for k in range(4))
    wout_t = jnp.asarray(w_out, jnp.float32).T              # (H, C)
    bout = jnp.asarray(b_out, jnp.float32).reshape(1, C)

    return (wih_t, bias) + whh_split + (wout_t, bout)


@jax.jit
def lstm_forward(x, params):
    """x: (S, B, E) float32; params: output of prepare_params()."""
    S, B, E = x.shape
    assert S >= 1, "empty sequence: max-pool over seq is undefined"
    H = params[2].shape[0]          # whh_i is (H, H)
    C = params[-2].shape[1]         # wout_t is (H, C)

    x2d = x.astype(jnp.float32).reshape(S * B, E)           # free view in XLA

    vmem = pl.BlockSpec(memory_space=pltpu.MemorySpace.VMEM)
    kernel = functools.partial(_lstm_kernel, seq_len=S, batch=B)
    return pl.pallas_call(
        kernel,
        out_shape=jax.ShapeDtypeStruct((B, C), jnp.float32),
        in_specs=[vmem] * (1 + len(params)),
        out_specs=vmem,
    )(x2d, *params)


def ref_forward(x, w_ih, w_hh, b_ih, b_hh, w_out, b_out):
    """Pure-JAX reference with identical semantics (for validation)."""
    S, B, E = x.shape
    H = w_hh.shape[1]

    def step(carry, x_t):
        h, c = carry
        gates = x_t @ w_ih.T + b_ih + h @ w_hh.T + b_hh
        i, f, g, o = jnp.split(gates, 4, axis=-1)
        i = jax.nn.sigmoid(i)
        f = jax.nn.sigmoid(f)
        g = jnp.tanh(g)
        o = jax.nn.sigmoid(o)
        c = f * c + i * g
        h = o * jnp.tanh(c)
        return (h, c), h

    init = (jnp.zeros((B, H), jnp.float32), jnp.zeros((B, H), jnp.float32))
    _, hs = lax.scan(step, init, x)                         # (S, B, H)
    pooled = jnp.tanh(jnp.max(jnp.tanh(hs), axis=0))        # (B, H)
    logits = pooled @ w_out.T + b_out
    return jax.nn.softmax(logits, axis=-1)


if __name__ == "__main__":
    # Small shapes consistent with the module's forward:
    #   seq=8, batch=4, embed_dim=32, lstm_hidden_dim=32, class_num=4
    S, B, E, H, C = 8, 4, 32, 32, 4

    key = jax.random.PRNGKey(0)
    kx, k1, k2, k3, k4, k5, k6 = jax.random.split(key, 7)

    x = jax.random.normal(kx, (S, B, E), dtype=jnp.float32)

    # Deterministic synthetic parameters (xavier-normal-ish scaling).
    w_ih = jax.random.normal(k1, (4 * H, E), dtype=jnp.float32) * (6.0 / (4 * H + E)) ** 0.5
    w_hh = jax.random.normal(k2, (4 * H, H), dtype=jnp.float32) * (6.0 / (4 * H + H)) ** 0.5
    b_ih = jax.random.normal(k3, (4 * H,), dtype=jnp.float32) * 0.1
    b_hh = jax.random.normal(k4, (4 * H,), dtype=jnp.float32) * 0.1
    w_out = jax.random.normal(k5, (C, H), dtype=jnp.float32) * (2.0 / (C + H)) ** 0.5
    b_out = jax.random.normal(k6, (C,), dtype=jnp.float32) * 0.1

    params = prepare_params(w_ih, w_hh, b_ih, b_hh, w_out, b_out)

    out = jax.block_until_ready(lstm_forward(x, params))
    ref = jax.block_until_ready(
        ref_forward(x, w_ih, w_hh, b_ih, b_hh, w_out, b_out))

    assert out.shape == (B, C), out.shape
    assert jnp.allclose(out, ref, atol=3e-5, rtol=1e-5), (out, ref)
    assert jnp.allclose(out.sum(axis=-1), 1.0, atol=1e-5)

    print("KERNEL_OK")
</pallas_src>

<mosaic_0001>
module attributes {stable_mosaic.version = 11 : i64} {
  func.func @_lstm_kernel(%arg0: memref<32x32xf32, #tpu.memory_space<vmem>>, %arg1: memref<32x128xf32, #tpu.memory_space<vmem>>, %arg2: memref<1x128xf32, #tpu.memory_space<vmem>>, %arg3: memref<32x32xf32, #tpu.memory_space<vmem>>, %arg4: memref<32x32xf32, #tpu.memory_space<vmem>>, %arg5: memref<32x32xf32, #tpu.memory_space<vmem>>, %arg6: memref<32x32xf32, #tpu.memory_space<vmem>>, %arg7: memref<32x4xf32, #tpu.memory_space<vmem>>, %arg8: memref<1x4xf32, #tpu.memory_space<vmem>>, %arg9: memref<4x4xf32, #tpu.memory_space<vmem>>) attributes {dimension_semantics = [], scalar_prefetch = 0 : i64, scratch_operands = 0 : i64, tpu.core_type = #tpu.core_type<tc>} {
    %c0 = arith.constant 0 : index
    %c0_0 = arith.constant 0 : index
    %0 = vector.load %arg0[%c0, %c0_0] : memref<32x32xf32, #tpu.memory_space<vmem>>, vector<32x32xf32>
    %c0_1 = arith.constant 0 : index
    %c0_2 = arith.constant 0 : index
    %1 = vector.load %arg1[%c0_1, %c0_2] : memref<32x128xf32, #tpu.memory_space<vmem>>, vector<32x128xf32>
    %cst = arith.constant dense<0.000000e+00> : vector<32x128xf32>
    %2 = tpu.matmul %0, %1, %cst {dimension_numbers = #tpu.dot_dimension_numbers<[1], [0], [0], [1], [0, 0, 1, 1], [], []>} : vector<32x32xf32>, vector<32x128xf32>, vector<32x128xf32> -> vector<32x128xf32>
    %c0_3 = arith.constant 0 : index
    %c0_4 = arith.constant 0 : index
    %3 = vector.load %arg2[%c0_3, %c0_4] : memref<1x128xf32, #tpu.memory_space<vmem>>, vector<1x128xf32>
    %4 = vector.broadcast %3 : vector<1x128xf32> to vector<32x128xf32>
    %5 = arith.addf %2, %4 : vector<32x128xf32>
    %6 = vector.extract_strided_slice %5 {offsets = [0, 0], sizes = [32, 32], strides = [1, 1]} : vector<32x128xf32> to vector<32x32xf32>
    %7 = vector.shape_cast %6 : vector<32x32xf32> to vector<8x4x32xf32>
    %8 = vector.extract_strided_slice %5 {offsets = [0, 32], sizes = [32, 32], strides = [1, 1]} : vector<32x128xf32> to vector<32x32xf32>
    %9 = vector.shape_cast %8 : vector<32x32xf32> to vector<8x4x32xf32>
    %10 = vector.extract_strided_slice %5 {offsets = [0, 64], sizes = [32, 32], strides = [1, 1]} : vector<32x128xf32> to vector<32x32xf32>
    %11 = vector.shape_cast %10 : vector<32x32xf32> to vector<8x4x32xf32>
    %12 = vector.extract_strided_slice %5 {offsets = [0, 96], sizes = [32, 32], strides = [1, 1]} : vector<32x128xf32> to vector<32x32xf32>
    %13 = vector.shape_cast %12 : vector<32x32xf32> to vector<8x4x32xf32>
    %c0_5 = arith.constant 0 : index
    %c0_6 = arith.constant 0 : index
    %14 = vector.load %arg3[%c0_5, %c0_6] : memref<32x32xf32, #tpu.memory_space<vmem>>, vector<32x32xf32>
    %c0_7 = arith.constant 0 : index
    %c0_8 = arith.constant 0 : index
    %15 = vector.load %arg4[%c0_7, %c0_8] : memref<32x32xf32, #tpu.memory_space<vmem>>, vector<32x32xf32>
    %c0_9 = arith.constant 0 : index
    %c0_10 = arith.constant 0 : index
    %16 = vector.load %arg5[%c0_9, %c0_10] : memref<32x32xf32, #tpu.memory_space<vmem>>, vector<32x32xf32>
    %c0_11 = arith.constant 0 : index
    %c0_12 = arith.constant 0 : index
    %17 = vector.load %arg6[%c0_11, %c0_12] : memref<32x32xf32, #tpu.memory_space<vmem>>, vector<32x32xf32>
    %18 = vector.extract_strided_slice %7 {offsets = [0, 0, 0], sizes = [1, 4, 32], strides = [1, 1, 1]} : vector<8x4x32xf32> to vector<1x4x32xf32>
    %19 = vector.shape_cast %18 : vector<1x4x32xf32> to vector<4x32xf32>
    %20 = arith.negf %19 : vector<4x32xf32>
    %21 = math.exp %20 : vector<4x32xf32>
    %cst_13 = arith.constant 1.000000e+00 : f32
    %22 = vector.broadcast %cst_13 : f32 to vector<4x32xf32>
    %23 = arith.addf %22, %21 : vector<4x32xf32>
    %24 = arith.divf %22, %23 : vector<4x32xf32>
    %25 = vector.extract_strided_slice %11 {offsets = [0, 0, 0], sizes = [1, 4, 32], strides = [1, 1, 1]} : vector<8x4x32xf32> to vector<1x4x32xf32>
    %26 = vector.shape_cast %25 : vector<1x4x32xf32> to vector<4x32xf32>
    %27 = math.tanh %26 : vector<4x32xf32>
    %28 = vector.extract_strided_slice %13 {offsets = [0, 0, 0], sizes = [1, 4, 32], strides = [1, 1, 1]} : vector<8x4x32xf32> to vector<1x4x32xf32>
    %29 = vector.shape_cast %28 : vector<1x4x32xf32> to vector<4x32xf32>
    %30 = arith.negf %29 : vector<4x32xf32>
    %31 = math.exp %30 : vector<4x32xf32>
    %cst_14 = arith.constant 1.000000e+00 : f32
    %32 = vector.broadcast %cst_14 : f32 to vector<4x32xf32>
    %33 = arith.addf %32, %31 : vector<4x32xf32>
    %34 = arith.divf %32, %33 : vector<4x32xf32>
    %35 = arith.mulf %24, %27 : vector<4x32xf32>
    %36 = math.tanh %35 : vector<4x32xf32>
    %37 = arith.mulf %34, %36 : vector<4x32xf32>
    %38 = vector.extract_strided_slice %7 {offsets = [1, 0, 0], sizes = [1, 4, 32], strides = [1, 1, 1]} : vector<8x4x32xf32> to vector<1x4x32xf32>
    %39 = vector.shape_cast %38 : vector<1x4x32xf32> to vector<4x32xf32>
    %cst_15 = arith.constant dense<0.000000e+00> : vector<4x32xf32>
    %40 = tpu.matmul %37, %14, %cst_15 {dimension_numbers = #tpu.dot_dimension_numbers<[1], [0], [0], [1], [0, 0, 1, 1], [], []>} : vector<4x32xf32>, vector<32x32xf32>, vector<4x32xf32> -> vector<4x32xf32>
    %41 = arith.addf %39, %40 : vector<4x32xf32>
    %42 = arith.negf %41 : vector<4x32xf32>
    %43 = math.exp %42 : vector<4x32xf32>
    %cst_16 = arith.constant 1.000000e+00 : f32
    %44 = vector.broadcast %cst_16 : f32 to vector<4x32xf32>
    %45 = arith.addf %44, %43 : vector<4x32xf32>
    %46 = arith.divf %44, %45 : vector<4x32xf32>
    %47 = vector.extract_strided_slice %9 {offsets = [1, 0, 0], sizes = [1, 4, 32], strides = [1, 1, 1]} : vector<8x4x32xf32> to vector<1x4x32xf32>
    %48 = vector.shape_cast %47 : vector<1x4x32xf32> to vector<4x32xf32>
    %cst_17 = arith.constant dense<0.000000e+00> : vector<4x32xf32>
    %49 = tpu.matmul %37, %15, %cst_17 {dimension_numbers = #tpu.dot_dimension_numbers<[1], [0], [0], [1], [0, 0, 1, 1], [], []>} : vector<4x32xf32>, vector<32x32xf32>, vector<4x32xf32> -> vector<4x32xf32>
    %50 = arith.addf %48, %49 : vector<4x32xf32>
    %51 = arith.negf %50 : vector<4x32xf32>
    %52 = math.exp %51 : vector<4x32xf32>
    %cst_18 = arith.constant 1.000000e+00 : f32
    %53 = vector.broadcast %cst_18 : f32 to vector<4x32xf32>
    %54 = arith.addf %53, %52 : vector<4x32xf32>
    %55 = arith.divf %53, %54 : vector<4x32xf32>
    %56 = vector.extract_strided_slice %11 {offsets = [1, 0, 0], sizes = [1, 4, 32], strides = [1, 1, 1]} : vector<8x4x32xf32> to vector<1x4x32xf32>
    %57 = vector.shape_cast %56 : vector<1x4x32xf32> to vector<4x32xf32>
    %cst_19 = arith.constant dense<0.000000e+00> : vector<4x32xf32>
    %58 = tpu.matmul %37, %16, %cst_19 {dimension_numbers = #tpu.dot_dimension_numbers<[1], [0], [0], [1], [0, 0, 1, 1], [], []>} : vector<4x32xf32>, vector<32x32xf32>, vector<4x32xf32> -> vector<4x32xf32>
    %59 = arith.addf %57, %58 : vector<4x32xf32>
    %60 = math.tanh %59 : vector<4x32xf32>
    %61 = vector.extract_strided_slice %13 {offsets = [1, 0, 0], sizes = [1, 4, 32], strides = [1, 1, 1]} : vector<8x4x32xf32> to vector<1x4x32xf32>
    %62 = vector.shape_cast %61 : vector<1x4x32xf32> to vector<4x32xf32>
    %cst_20 = arith.constant dense<0.000000e+00> : vector<4x32xf32>
    %63 = tpu.matmul %37, %17, %cst_20 {dimension_numbers = #tpu.dot_dimension_numbers<[1], [0], [0], [1], [0, 0, 1, 1], [], []>} : vector<4x32xf32>, vector<32x32xf32>, vector<4x32xf32> -> vector<4x32xf32>
    %64 = arith.addf %62, %63 : vector<4x32xf32>
    %65 = arith.negf %64 : vector<4x32xf32>
    %66 = math.exp %65 : vector<4x32xf32>
    %cst_21 = arith.constant 1.000000e+00 : f32
    %67 = vector.broadcast %cst_21 : f32 to vector<4x32xf32>
    %68 = arith.addf %67, %66 : vector<4x32xf32>
    %69 = arith.divf %67, %68 : vector<4x32xf32>
    %70 = arith.mulf %55, %35 : vector<4x32xf32>
    %71 = arith.mulf %46, %60 : vector<4x32xf32>
    %72 = arith.addf %70, %71 : vector<4x32xf32>
    %73 = math.tanh %72 : vector<4x32xf32>
    %74 = arith.mulf %69, %73 : vector<4x32xf32>
    %75 = arith.maximumf %37, %74 : vector<4x32xf32>
    %76 = vector.extract_strided_slice %7 {offsets = [2, 0, 0], sizes = [1, 4, 32], strides = [1, 1, 1]} : vector<8x4x32xf32> to vector<1x4x32xf32>
    %77 = vector.shape_cast %76 : vector<1x4x32xf32> to vector<4x32xf32>
    %cst_22 = arith.constant dense<0.000000e+00> : vector<4x32xf32>
    %78 = tpu.matmul %74, %14, %cst_22 {dimension_numbers = #tpu.dot_dimension_numbers<[1], [0], [0], [1], [0, 0, 1, 1], [], []>} : vector<4x32xf32>, vector<32x32xf32>, vector<4x32xf32> -> vector<4x32xf32>
    %79 = arith.addf %77, %78 : vector<4x32xf32>
    %80 = arith.negf %79 : vector<4x32xf32>
    %81 = math.exp %80 : vector<4x32xf32>
    %cst_23 = arith.constant 1.000000e+00 : f32
    %82 = vector.broadcast %cst_23 : f32 to vector<4x32xf32>
    %83 = arith.addf %82, %81 : vector<4x32xf32>
    %84 = arith.divf %82, %83 : vector<4x32xf32>
    %85 = vector.extract_strided_slice %9 {offsets = [2, 0, 0], sizes = [1, 4, 32], strides = [1, 1, 1]} : vector<8x4x32xf32> to vector<1x4x32xf32>
    %86 = vector.shape_cast %85 : vector<1x4x32xf32> to vector<4x32xf32>
    %cst_24 = arith.constant dense<0.000000e+00> : vector<4x32xf32>
    %87 = tpu.matmul %74, %15, %cst_24 {dimension_numbers = #tpu.dot_dimension_numbers<[1], [0], [0], [1], [0, 0, 1, 1], [], []>} : vector<4x32xf32>, vector<32x32xf32>, vector<4x32xf32> -> vector<4x32xf32>
    %88 = arith.addf %86, %87 : vector<4x32xf32>
    %89 = arith.negf %88 : vector<4x32xf32>
    %90 = math.exp %89 : vector<4x32xf32>
    %cst_25 = arith.constant 1.000000e+00 : f32
    %91 = vector.broadcast %cst_25 : f32 to vector<4x32xf32>
    %92 = arith.addf %91, %90 : vector<4x32xf32>
    %93 = arith.divf %91, %92 : vector<4x32xf32>
    %94 = vector.extract_strided_slice %11 {offsets = [2, 0, 0], sizes = [1, 4, 32], strides = [1, 1, 1]} : vector<8x4x32xf32> to vector<1x4x32xf32>
    %95 = vector.shape_cast %94 : vector<1x4x32xf32> to vector<4x32xf32>
    %cst_26 = arith.constant dense<0.000000e+00> : vector<4x32xf32>
    %96 = tpu.matmul %74, %16, %cst_26 {dimension_numbers = #tpu.dot_dimension_numbers<[1], [0], [0], [1], [0, 0, 1, 1], [], []>} : vector<4x32xf32>, vector<32x32xf32>, vector<4x32xf32> -> vector<4x32xf32>
    %97 = arith.addf %95, %96 : vector<4x32xf32>
    %98 = math.tanh %97 : vector<4x32xf32>
    %99 = vector.extract_strided_slice %13 {offsets = [2, 0, 0], sizes = [1, 4, 32], strides = [1, 1, 1]} : vector<8x4x32xf32> to vector<1x4x32xf32>
    %100 = vector.shape_cast %99 : vector<1x4x32xf32> to vector<4x32xf32>
    %cst_27 = arith.constant dense<0.000000e+00> : vector<4x32xf32>
    %101 = tpu.matmul %74, %17, %cst_27 {dimension_numbers = #tpu.dot_dimension_numbers<[1], [0], [0], [1], [0, 0, 1, 1], [], []>} : vector<4x32xf32>, vector<32x32xf32>, vector<4x32xf32> -> vector<4x32xf32>
    %102 = arith.addf %100, %101 : vector<4x32xf32>
    %103 = arith.negf %102 : vector<4x32xf32>
    %104 = math.exp %103 : vector<4x32xf32>
    %cst_28 = arith.constant 1.000000e+00 : f32
    %105 = vector.broadcast %cst_28 : f32 to vector<4x32xf32>
    %106 = arith.addf %105, %104 : vector<4x32xf32>
    %107 = arith.divf %105, %106 : vector<4x32xf32>
    %108 = arith.mulf %93, %72 : vector<4x32xf32>
    %109 = arith.mulf %84, %98 : vector<4x32xf32>
    %110 = arith.addf %108, %109 : vector<4x32xf32>
    %111 = math.tanh %110 : vector<4x32xf32>
    %112 = arith.mulf %107, %111 : vector<4x32xf32>
    %113 = arith.maximumf %75, %112 : vector<4x32xf32>
    %114 = vector.extract_strided_slice %7 {offsets = [3, 0, 0], sizes = [1, 4, 32], strides = [1, 1, 1]} : vector<8x4x32xf32> to vector<1x4x32xf32>
    %115 = vector.shape_cast %114 : vector<1x4x32xf32> to vector<4x32xf32>
    %cst_29 = arith.constant dense<0.000000e+00> : vector<4x32xf32>
    %116 = tpu.matmul %112, %14, %cst_29 {dimension_numbers = #tpu.dot_dimension_numbers<[1], [0], [0], [1], [0, 0, 1, 1], [], []>} : vector<4x32xf32>, vector<32x32xf32>, vector<4x32xf32> -> vector<4x32xf32>
    %117 = arith.addf %115, %116 : vector<4x32xf32>
    %118 = arith.negf %117 : vector<4x32xf32>
    %119 = math.exp %118 : vector<4x32xf32>
    %cst_30 = arith.constant 1.000000e+00 : f32
    %120 = vector.broadcast %cst_30 : f32 to vector<4x32xf32>
    %121 = arith.addf %120, %119 : vector<4x32xf32>
    %122 = arith.divf %120, %121 : vector<4x32xf32>
    %123 = vector.extract_strided_slice %9 {offsets = [3, 0, 0], sizes = [1, 4, 32], strides = [1, 1, 1]} : vector<8x4x32xf32> to vector<1x4x32xf32>
    %124 = vector.shape_cast %123 : vector<1x4x32xf32> to vector<4x32xf32>
    %cst_31 = arith.constant dense<0.000000e+00> : vector<4x32xf32>
    %125 = tpu.matmul %112, %15, %cst_31 {dimension_numbers = #tpu.dot_dimension_numbers<[1], [0], [0], [1], [0, 0, 1, 1], [], []>} : vector<4x32xf32>, vector<32x32xf32>, vector<4x32xf32> -> vector<4x32xf32>
    %126 = arith.addf %124, %125 : vector<4x32xf32>
    %127 = arith.negf %126 : vector<4x32xf32>
    %128 = math.exp %127 : vector<4x32xf32>
    %cst_32 = arith.constant 1.000000e+00 : f32
    %129 = vector.broadcast %cst_32 : f32 to vector<4x32xf32>
    %130 = arith.addf %129, %128 : vector<4x32xf32>
    %131 = arith.divf %129, %130 : vector<4x32xf32>
    %132 = vector.extract_strided_slice %11 {offsets = [3, 0, 0], sizes = [1, 4, 32], strides = [1, 1, 1]} : vector<8x4x32xf32> to vector<1x4x32xf32>
    %133 = vector.shape_cast %132 : vector<1x4x32xf32> to vector<4x32xf32>
    %cst_33 = arith.constant dense<0.000000e+00> : vector<4x32xf32>
    %134 = tpu.matmul %112, %16, %cst_33 {dimension_numbers = #tpu.dot_dimension_numbers<[1], [0], [0], [1], [0, 0, 1, 1], [], []>} : vector<4x32xf32>, vector<32x32xf32>, vector<4x32xf32> -> vector<4x32xf32>
    %135 = arith.addf %133, %134 : vector<4x32xf32>
    %136 = math.tanh %135 : vector<4x32xf32>
    %137 = vector.extract_strided_slice %13 {offsets = [3, 0, 0], sizes = [1, 4, 32], strides = [1, 1, 1]} : vector<8x4x32xf32> to vector<1x4x32xf32>
    %138 = vector.shape_cast %137 : vector<1x4x32xf32> to vector<4x32xf32>
    %cst_34 = arith.constant dense<0.000000e+00> : vector<4x32xf32>
    %139 = tpu.matmul %112, %17, %cst_34 {dimension_numbers = #tpu.dot_dimension_numbers<[1], [0], [0], [1], [0, 0, 1, 1], [], []>} : vector<4x32xf32>, vector<32x32xf32>, vector<4x32xf32> -> vector<4x32xf32>
    %140 = arith.addf %138, %139 : vector<4x32xf32>
    %141 = arith.negf %140 : vector<4x32xf32>
    %142 = math.exp %141 : vector<4x32xf32>
    %cst_35 = arith.constant 1.000000e+00 : f32
    %143 = vector.broadcast %cst_35 : f32 to vector<4x32xf32>
    %144 = arith.addf %143, %142 : vector<4x32xf32>
    %145 = arith.divf %143, %144 : vector<4x32xf32>
    %146 = arith.mulf %131, %110 : vector<4x32xf32>
    %147 = arith.mulf %122, %136 : vector<4x32xf32>
    %148 = arith.addf %146, %147 : vector<4x32xf32>
    %149 = math.tanh %148 : vector<4x32xf32>
    %150 = arith.mulf %145, %149 : vector<4x32xf32>
    %151 = arith.maximumf %113, %150 : vector<4x32xf32>
    %152 = vector.extract_strided_slice %7 {offsets = [4, 0, 0], sizes = [1, 4, 32], strides = [1, 1, 1]} : vector<8x4x32xf32> to vector<1x4x32xf32>
    %153 = vector.shape_cast %152 : vector<1x4x32xf32> to vector<4x32xf32>
    %cst_36 = arith.constant dense<0.000000e+00> : vector<4x32xf32>
    %154 = tpu.matmul %150, %14, %cst_36 {dimension_numbers = #tpu.dot_dimension_numbers<[1], [0], [0], [1], [0, 0, 1, 1], [], []>} : vector<4x32xf32>, vector<32x32xf32>, vector<4x32xf32> -> vector<4x32xf32>
    %155 = arith.addf %153, %154 : vector<4x32xf32>
    %156 = arith.negf %155 : vector<4x32xf32>
    %157 = math.exp %156 : vector<4x32xf32>
    %cst_37 = arith.constant 1.000000e+00 : f32
    %158 = vector.broadcast %cst_37 : f32 to vector<4x32xf32>
    %159 = arith.addf %158, %157 : vector<4x32xf32>
    %160 = arith.divf %158, %159 : vector<4x32xf32>
    %161 = vector.extract_strided_slice %9 {offsets = [4, 0, 0], sizes = [1, 4, 32], strides = [1, 1, 1]} : vector<8x4x32xf32> to vector<1x4x32xf32>
    %162 = vector.shape_cast %161 : vector<1x4x32xf32> to vector<4x32xf32>
    %cst_38 = arith.constant dense<0.000000e+00> : vector<4x32xf32>
    %163 = tpu.matmul %150, %15, %cst_38 {dimension_numbers = #tpu.dot_dimension_numbers<[1], [0], [0], [1], [0, 0, 1, 1], [], []>} : vector<4x32xf32>, vector<32x32xf32>, vector<4x32xf32> -> vector<4x32xf32>
    %164 = arith.addf %162, %163 : vector<4x32xf32>
    %165 = arith.negf %164 : vector<4x32xf32>
    %166 = math.exp %165 : vector<4x32xf32>
    %cst_39 = arith.constant 1.000000e+00 : f32
    %167 = vector.broadcast %cst_39 : f32 to vector<4x32xf32>
    %168 = arith.addf %167, %166 : vector<4x32xf32>
    %169 = arith.divf %167, %168 : vector<4x32xf32>
    %170 = vector.extract_strided_slice %11 {offsets = [4, 0, 0], sizes = [1, 4, 32], strides = [1, 1, 1]} : vector<8x4x32xf32> to vector<1x4x32xf32>
    %171 = vector.shape_cast %170 : vector<1x4x32xf32> to vector<4x32xf32>
    %cst_40 = arith.constant dense<0.000000e+00> : vector<4x32xf32>
    %172 = tpu.matmul %150, %16, %cst_40 {dimension_numbers = #tpu.dot_dimension_numbers<[1], [0], [0], [1], [0, 0, 1, 1], [], []>} : vector<4x32xf32>, vector<32x32xf32>, vector<4x32xf32> -> vector<4x32xf32>
    %173 = arith.addf %171, %172 : vector<4x32xf32>
    %174 = math.tanh %173 : vector<4x32xf32>
    %175 = vector.extract_strided_slice %13 {offsets = [4, 0, 0], sizes = [1, 4, 32], strides = [1, 1, 1]} : vector<8x4x32xf32> to vector<1x4x32xf32>
    %176 = vector.shape_cast %175 : vector<1x4x32xf32> to vector<4x32xf32>
    %cst_41 = arith.constant dense<0.000000e+00> : vector<4x32xf32>
    %177 = tpu.matmul %150, %17, %cst_41 {dimension_numbers = #tpu.dot_dimension_numbers<[1], [0], [0], [1], [0, 0, 1, 1], [], []>} : vector<4x32xf32>, vector<32x32xf32>, vector<4x32xf32> -> vector<4x32xf32>
    %178 = arith.addf %176, %177 : vector<4x32xf32>
    %179 = arith.negf %178 : vector<4x32xf32>
    %180 = math.exp %179 : vector<4x32xf32>
    %cst_42 = arith.constant 1.000000e+00 : f32
    %181 = vector.broadcast %cst_42 : f32 to vector<4x32xf32>
    %182 = arith.addf %181, %180 : vector<4x32xf32>
    %183 = arith.divf %181, %182 : vector<4x32xf32>
    %184 = arith.mulf %169, %148 : vector<4x32xf32>
    %185 = arith.mulf %160, %174 : vector<4x32xf32>
    %186 = arith.addf %184, %185 : vector<4x32xf32>
    %187 = math.tanh %186 : vector<4x32xf32>
    %188 = arith.mulf %183, %187 : vector<4x32xf32>
    %189 = arith.maximumf %151, %188 : vector<4x32xf32>
    %190 = vector.extract_strided_slice %7 {offsets = [5, 0, 0], sizes = [1, 4, 32], strides = [1, 1, 1]} : vector<8x4x32xf32> to vector<1x4x32xf32>
    %191 = vector.shape_cast %190 : vector<1x4x32xf32> to vector<4x32xf32>
    %cst_43 = arith.constant dense<0.000000e+00> : vector<4x32xf32>
    %192 = tpu.matmul %188, %14, %cst_43 {dimension_numbers = #tpu.dot_dimension_numbers<[1], [0], [0], [1], [0, 0, 1, 1], [], []>} : vector<4x32xf32>, vector<32x32xf32>, vector<4x32xf32> -> vector<4x32xf32>
    %193 = arith.addf %191, %192 : vector<4x32xf32>
    %194 = arith.negf %193 : vector<4x32xf32>
    %195 = math.exp %194 : vector<4x32xf32>
    %cst_44 = arith.constant 1.000000e+00 : f32
    %196 = vector.broadcast %cst_44 : f32 to vector<4x32xf32>
    %197 = arith.addf %196, %195 : vector<4x32xf32>
    %198 = arith.divf %196, %197 : vector<4x32xf32>
    %199 = vector.extract_strided_slice %9 {offsets = [5, 0, 0], sizes = [1, 4, 32], strides = [1, 1, 1]} : vector<8x4x32xf32> to vector<1x4x32xf32>
    %200 = vector.shape_cast %199 : vector<1x4x32xf32> to vector<4x32xf32>
    %cst_45 = arith.constant dense<0.000000e+00> : vector<4x32xf32>
    %201 = tpu.matmul %188, %15, %cst_45 {dimension_numbers = #tpu.dot_dimension_numbers<[1], [0], [0], [1], [0, 0, 1, 1], [], []>} : vector<4x32xf32>, vector<32x32xf32>, vector<4x32xf32> -> vector<4x32xf32>
    %202 = arith.addf %200, %201 : vector<4x32xf32>
    %203 = arith.negf %202 : vector<4x32xf32>
    %204 = math.exp %203 : vector<4x32xf32>
    %cst_46 = arith.constant 1.000000e+00 : f32
    %205 = vector.broadcast %cst_46 : f32 to vector<4x32xf32>
    %206 = arith.addf %205, %204 : vector<4x32xf32>
    %207 = arith.divf %205, %206 : vector<4x32xf32>
    %208 = vector.extract_strided_slice %11 {offsets = [5, 0, 0], sizes = [1, 4, 32], strides = [1, 1, 1]} : vector<8x4x32xf32> to vector<1x4x32xf32>
    %209 = vector.shape_cast %208 : vector<1x4x32xf32> to vector<4x32xf32>
    %cst_47 = arith.constant dense<0.000000e+00> : vector<4x32xf32>
    %210 = tpu.matmul %188, %16, %cst_47 {dimension_numbers = #tpu.dot_dimension_numbers<[1], [0], [0], [1], [0, 0, 1, 1], [], []>} : vector<4x32xf32>, vector<32x32xf32>, vector<4x32xf32> -> vector<4x32xf32>
    %211 = arith.addf %209, %210 : vector<4x32xf32>
    %212 = math.tanh %211 : vector<4x32xf32>
    %213 = vector.extract_strided_slice %13 {offsets = [5, 0, 0], sizes = [1, 4, 32], strides = [1, 1, 1]} : vector<8x4x32xf32> to vector<1x4x32xf32>
    %214 = vector.shape_cast %213 : vector<1x4x32xf32> to vector<4x32xf32>
    %cst_48 = arith.constant dense<0.000000e+00> : vector<4x32xf32>
    %215 = tpu.matmul %188, %17, %cst_48 {dimension_numbers = #tpu.dot_dimension_numbers<[1], [0], [0], [1], [0, 0, 1, 1], [], []>} : vector<4x32xf32>, vector<32x32xf32>, vector<4x32xf32> -> vector<4x32xf32>
    %216 = arith.addf %214, %215 : vector<4x32xf32>
    %217 = arith.negf %216 : vector<4x32xf32>
    %218 = math.exp %217 : vector<4x32xf32>
    %cst_49 = arith.constant 1.000000e+00 : f32
    %219 = vector.broadcast %cst_49 : f32 to vector<4x32xf32>
    %220 = arith.addf %219, %218 : vector<4x32xf32>
    %221 = arith.divf %219, %220 : vector<4x32xf32>
    %222 = arith.mulf %207, %186 : vector<4x32xf32>
    %223 = arith.mulf %198, %212 : vector<4x32xf32>
    %224 = arith.addf %222, %223 : vector<4x32xf32>
    %225 = math.tanh %224 : vector<4x32xf32>
    %226 = arith.mulf %221, %225 : vector<4x32xf32>
    %227 = arith.maximumf %189, %226 : vector<4x32xf32>
    %228 = vector.extract_strided_slice %7 {offsets = [6, 0, 0], sizes = [1, 4, 32], strides = [1, 1, 1]} : vector<8x4x32xf32> to vector<1x4x32xf32>
    %229 = vector.shape_cast %228 : vector<1x4x32xf32> to vector<4x32xf32>
    %cst_50 = arith.constant dense<0.000000e+00> : vector<4x32xf32>
    %230 = tpu.matmul %226, %14, %cst_50 {dimension_numbers = #tpu.dot_dimension_numbers<[1], [0], [0], [1], [0, 0, 1, 1], [], []>} : vector<4x32xf32>, vector<32x32xf32>, vector<4x32xf32> -> vector<4x32xf32>
    %231 = arith.addf %229, %230 : vector<4x32xf32>
    %232 = arith.negf %231 : vector<4x32xf32>
    %233 = math.exp %232 : vector<4x32xf32>
    %cst_51 = arith.constant 1.000000e+00 : f32
    %234 = vector.broadcast %cst_51 : f32 to vector<4x32xf32>
    %235 = arith.addf %234, %233 : vector<4x32xf32>
    %236 = arith.divf %234, %235 : vector<4x32xf32>
    %237 = vector.extract_strided_slice %9 {offsets = [6, 0, 0], sizes = [1, 4, 32], strides = [1, 1, 1]} : vector<8x4x32xf32> to vector<1x4x32xf32>
    %238 = vector.shape_cast %237 : vector<1x4x32xf32> to vector<4x32xf32>
    %cst_52 = arith.constant dense<0.000000e+00> : vector<4x32xf32>
    %239 = tpu.matmul %226, %15, %cst_52 {dimension_numbers = #tpu.dot_dimension_numbers<[1], [0], [0], [1], [0, 0, 1, 1], [], []>} : vector<4x32xf32>, vector<32x32xf32>, vector<4x32xf32> -> vector<4x32xf32>
    %240 = arith.addf %238, %239 : vector<4x32xf32>
    %241 = arith.negf %240 : vector<4x32xf32>
    %242 = math.exp %241 : vector<4x32xf32>
    %cst_53 = arith.constant 1.000000e+00 : f32
    %243 = vector.broadcast %cst_53 : f32 to vector<4x32xf32>
    %244 = arith.addf %243, %242 : vector<4x32xf32>
    %245 = arith.divf %243, %244 : vector<4x32xf32>
    %246 = vector.extract_strided_slice %11 {offsets = [6, 0, 0], sizes = [1, 4, 32], strides = [1, 1, 1]} : vector<8x4x32xf32> to vector<1x4x32xf32>
    %247 = vector.shape_cast %246 : vector<1x4x32xf32> to vector<4x32xf32>
    %cst_54 = arith.constant dense<0.000000e+00> : vector<4x32xf32>
    %248 = tpu.matmul %226, %16, %cst_54 {dimension_numbers = #tpu.dot_dimension_numbers<[1], [0], [0], [1], [0, 0, 1, 1], [], []>} : vector<4x32xf32>, vector<32x32xf32>, vector<4x32xf32> -> vector<4x32xf32>
    %249 = arith.addf %247, %248 : vector<4x32xf32>
    %250 = math.tanh %249 : vector<4x32xf32>
    %251 = vector.extract_strided_slice %13 {offsets = [6, 0, 0], sizes = [1, 4, 32], strides = [1, 1, 1]} : vector<8x4x32xf32> to vector<1x4x32xf32>
    %252 = vector.shape_cast %251 : vector<1x4x32xf32> to vector<4x32xf32>
    %cst_55 = arith.constant dense<0.000000e+00> : vector<4x32xf32>
    %253 = tpu.matmul %226, %17, %cst_55 {dimension_numbers = #tpu.dot_dimension_numbers<[1], [0], [0], [1], [0, 0, 1, 1], [], []>} : vector<4x32xf32>, vector<32x32xf32>, vector<4x32xf32> -> vector<4x32xf32>
    %254 = arith.addf %252, %253 : vector<4x32xf32>
    %255 = arith.negf %254 : vector<4x32xf32>
    %256 = math.exp %255 : vector<4x32xf32>
    %cst_56 = arith.constant 1.000000e+00 : f32
    %257 = vector.broadcast %cst_56 : f32 to vector<4x32xf32>
    %258 = arith.addf %257, %256 : vector<4x32xf32>
    %259 = arith.divf %257, %258 : vector<4x32xf32>
    %260 = arith.mulf %245, %224 : vector<4x32xf32>
    %261 = arith.mulf %236, %250 : vector<4x32xf32>
    %262 = arith.addf %260, %261 : vector<4x32xf32>
    %263 = math.tanh %262 : vector<4x32xf32>
    %264 = arith.mulf %259, %263 : vector<4x32xf32>
    %265 = arith.maximumf %227, %264 : vector<4x32xf32>
    %266 = vector.extract_strided_slice %7 {offsets = [7, 0, 0], sizes = [1, 4, 32], strides = [1, 1, 1]} : vector<8x4x32xf32> to vector<1x4x32xf32>
    %267 = vector.shape_cast %266 : vector<1x4x32xf32> to vector<4x32xf32>
    %cst_57 = arith.constant dense<0.000000e+00> : vector<4x32xf32>
    %268 = tpu.matmul %264, %14, %cst_57 {dimension_numbers = #tpu.dot_dimension_numbers<[1], [0], [0], [1], [0, 0, 1, 1], [], []>} : vector<4x32xf32>, vector<32x32xf32>, vector<4x32xf32> -> vector<4x32xf32>
    %269 = arith.addf %267, %268 : vector<4x32xf32>
    %270 = arith.negf %269 : vector<4x32xf32>
    %271 = math.exp %270 : vector<4x32xf32>
    %cst_58 = arith.constant 1.000000e+00 : f32
    %272 = vector.broadcast %cst_58 : f32 to vector<4x32xf32>
    %273 = arith.addf %272, %271 : vector<4x32xf32>
    %274 = arith.divf %272, %273 : vector<4x32xf32>
    %275 = vector.extract_strided_slice %9 {offsets = [7, 0, 0], sizes = [1, 4, 32], strides = [1, 1, 1]} : vector<8x4x32xf32> to vector<1x4x32xf32>
    %276 = vector.shape_cast %275 : vector<1x4x32xf32> to vector<4x32xf32>
    %cst_59 = arith.constant dense<0.000000e+00> : vector<4x32xf32>
    %277 = tpu.matmul %264, %15, %cst_59 {dimension_numbers = #tpu.dot_dimension_numbers<[1], [0], [0], [1], [0, 0, 1, 1], [], []>} : vector<4x32xf32>, vector<32x32xf32>, vector<4x32xf32> -> vector<4x32xf32>
    %278 = arith.addf %276, %277 : vector<4x32xf32>
    %279 = arith.negf %278 : vector<4x32xf32>
    %280 = math.exp %279 : vector<4x32xf32>
    %cst_60 = arith.constant 1.000000e+00 : f32
    %281 = vector.broadcast %cst_60 : f32 to vector<4x32xf32>
    %282 = arith.addf %281, %280 : vector<4x32xf32>
    %283 = arith.divf %281, %282 : vector<4x32xf32>
    %284 = vector.extract_strided_slice %11 {offsets = [7, 0, 0], sizes = [1, 4, 32], strides = [1, 1, 1]} : vector<8x4x32xf32> to vector<1x4x32xf32>
    %285 = vector.shape_cast %284 : vector<1x4x32xf32> to vector<4x32xf32>
    %cst_61 = arith.constant dense<0.000000e+00> : vector<4x32xf32>
    %286 = tpu.matmul %264, %16, %cst_61 {dimension_numbers = #tpu.dot_dimension_numbers<[1], [0], [0], [1], [0, 0, 1, 1], [], []>} : vector<4x32xf32>, vector<32x32xf32>, vector<4x32xf32> -> vector<4x32xf32>
    %287 = arith.addf %285, %286 : vector<4x32xf32>
    %288 = math.tanh %287 : vector<4x32xf32>
    %289 = vector.extract_strided_slice %13 {offsets = [7, 0, 0], sizes = [1, 4, 32], strides = [1, 1, 1]} : vector<8x4x32xf32> to vector<1x4x32xf32>
    %290 = vector.shape_cast %289 : vector<1x4x32xf32> to vector<4x32xf32>
    %cst_62 = arith.constant dense<0.000000e+00> : vector<4x32xf32>
    %291 = tpu.matmul %264, %17, %cst_62 {dimension_numbers = #tpu.dot_dimension_numbers<[1], [0], [0], [1], [0, 0, 1, 1], [], []>} : vector<4x32xf32>, vector<32x32xf32>, vector<4x32xf32> -> vector<4x32xf32>
    %292 = arith.addf %290, %291 : vector<4x32xf32>
    %293 = arith.negf %292 : vector<4x32xf32>
    %294 = math.exp %293 : vector<4x32xf32>
    %cst_63 = arith.constant 1.000000e+00 : f32
    %295 = vector.broadcast %cst_63 : f32 to vector<4x32xf32>
    %296 = arith.addf %295, %294 : vector<4x32xf32>
    %297 = arith.divf %295, %296 : vector<4x32xf32>
    %298 = arith.mulf %283, %262 : vector<4x32xf32>
    %299 = arith.mulf %274, %288 : vector<4x32xf32>
    %300 = arith.addf %298, %299 : vector<4x32xf32>
    %301 = math.tanh %300 : vector<4x32xf32>
    %302 = arith.mulf %297, %301 : vector<4x32xf32>
    %303 = arith.maximumf %265, %302 : vector<4x32xf32>
    %304 = math.tanh %303 : vector<4x32xf32>
    %305 = math.tanh %304 : vector<4x32xf32>
    %c0_64 = arith.constant 0 : index
    %c0_65 = arith.constant 0 : index
    %306 = vector.load %arg7[%c0_64, %c0_65] : memref<32x4xf32, #tpu.memory_space<vmem>>, vector<32x4xf32>
    %cst_66 = arith.constant dense<0.000000e+00> : vector<4x4xf32>
    %307 = tpu.matmul %305, %306, %cst_66 {dimension_numbers = #tpu.dot_dimension_numbers<[1], [0], [0], [1], [0, 0, 1, 1], [], []>} : vector<4x32xf32>, vector<32x4xf32>, vector<4x4xf32> -> vector<4x4xf32>
    %c0_67 = arith.constant 0 : index
    %c0_68 = arith.constant 0 : index
    %308 = vector.load %arg8[%c0_67, %c0_68] : memref<1x4xf32, #tpu.memory_space<vmem>>, vector<1x4xf32>
    %309 = vector.broadcast %308 : vector<1x4xf32> to vector<4x4xf32>
    %310 = arith.addf %307, %309 : vector<4x4xf32>
    %cst_69 = arith.constant dense<0xFF800000> : vector<4xf32>
    %311 = vector.multi_reduction <maximumf>, %310, %cst_69 [1] : vector<4x4xf32> to vector<4xf32>
    %cst_70 = arith.constant 0xFF800000 : f32
    %312 = vector.broadcast %cst_70 : f32 to vector<4xf32>
    %313 = arith.maximumf %312, %311 : vector<4xf32>
    %314 = vector.shape_cast %313 : vector<4xf32> to vector<4x1xf32>
    %315 = vector.broadcast %314 : vector<4x1xf32> to vector<4x4xf32>
    %316 = arith.subf %310, %315 : vector<4x4xf32>
    %317 = math.exp %316 : vector<4x4xf32>
    %cst_71 = arith.constant dense<0.000000e+00> : vector<4xf32>
    %318 = vector.multi_reduction <add>, %317, %cst_71 [1] : vector<4x4xf32> to vector<4xf32>
    %319 = vector.shape_cast %318 : vector<4xf32> to vector<4x1xf32>
    %320 = vector.broadcast %319 : vector<4x1xf32> to vector<4x4xf32>
    %321 = arith.divf %317, %320 : vector<4x4xf32>
    %c0_72 = arith.constant 0 : index
    %c0_73 = arith.constant 0 : index
    %322 = vector.load %arg9[%c0_72, %c0_73] : memref<4x4xf32, #tpu.memory_space<vmem>>, vector<4x4xf32>
    tpu.vector_store %arg9[%c0_72, %c0_73], %321 {strides = array<i32>} : memref<4x4xf32, #tpu.memory_space<vmem>>, vector<4x4xf32>,
    return
  }
}

</mosaic_0001>

<llo_original>
// kernel: lstm_forward.1
$region0: #{lstm_forward.1}
  #allocation0 [shape = 'u32[]', space=smem, size = 0x4, offset = 0x4, fixed_abs, tag = 'smem constant byte address 0x4 - core index']
  #allocation1 [shape = 'u32[144,128]{1,0:T(1,128)}', space=vmem, size = 0x12000, scoped, tag = 'internal scratch']
  %s0 = inlined_call_operand.vmem [shape: f32[32,32], index: 0, kind: input, shape index: {}]
  %s1 = inlined_call_operand.hbm [shape: f32[32,128], index: 1, kind: input, shape index: {}]
  %s2 = inlined_call_operand.vmem [shape: f32[1,128], index: 2, kind: input, shape index: {}]
  %s3 = inlined_call_operand.hbm [shape: f32[32,32], index: 3, kind: input, shape index: {}]
  %s4 = inlined_call_operand.hbm [shape: f32[32,32], index: 4, kind: input, shape index: {}]
  %s5 = inlined_call_operand.hbm [shape: f32[32,32], index: 5, kind: input, shape index: {}]
  %s6 = inlined_call_operand.hbm [shape: f32[32,32], index: 6, kind: input, shape index: {}]
  %s7 = inlined_call_operand.vmem [shape: f32[32,4], index: 7, kind: input, shape index: {}]
  %s8 = inlined_call_operand.vmem [shape: f32[1,4], index: 8, kind: input, shape index: {}]
  %s9 = inlined_call_operand.hbm [shape: f32[4,4], index: 9, kind: output, shape index: {}]
  %s10 = sld [smem:[#allocation0]]
  $region66: #{lstm_forward.1} parent=0
    _
  %s12 = ssub.s32 1, %s10
  %s13 = scalar_select 0, %s12, %s10
  $region1: #{lstm_forward.1} parent=0
    #allocation2 [shape = 'u8[16384]{0}', space=vmem, size = 0x4000, scoped, tag = 'input window, operand 1, single buffered']
    #allocation3 [shape = 's32[1]{0}', space=sflag, size = 0x4, scoped, tag = 'scoped memory for lstm_forward.1']
    #allocation4 [shape = 's32[1]{0}', space=sflag, size = 0x4, scoped, tag = 'scoped memory for lstm_forward.1']
    #allocation5 [shape = 'u8[16384]{0}', space=vmem, size = 0x4000, scoped, tag = 'input window, operand 3, single buffered']
    #allocation6 [shape = 's32[1]{0}', space=sflag, size = 0x4, scoped, tag = 'scoped memory for lstm_forward.1']
    #allocation7 [shape = 'u8[16384]{0}', space=vmem, size = 0x4000, scoped, tag = 'input window, operand 4, single buffered']
    #allocation8 [shape = 'u8[16384]{0}', space=vmem, size = 0x4000, scoped, tag = 'input window, operand 5, single buffered']
    #allocation9 [shape = 's32[1]{0}', space=sflag, size = 0x4, scoped, tag = 'scoped memory for lstm_forward.1']
    #allocation10 [shape = 'u8[16384]{0}', space=vmem, size = 0x4000, scoped, tag = 'input window, operand 6, single buffered']
    #allocation11 [shape = 'u8[2048]{0}', space=vmem, size = 0x800, scoped, tag = 'output window, operand 0, single buffered']
    %14 = vsyncpa [#allocation3], 0
    %15 = vsyncpa [#allocation6], 0
    %16 = vsyncpa [#allocation9], 0
    %17 = vsyncpa [#allocation4], 0
    // Predicated region
    $region2: #{lstm_forward.1} parent=1 // pred_check
      _
    $region3: #{lstm_forward.1} parent=1 // pred_check_branch
      %19 = sbr.rel (0) target = $region5
    $region4: #{lstm_forward.1} parent=1 // pred_region
      _
    $region5: #{lstm_forward.1} parent=1 // pred_fallthru
      _
    // Predicated region
    $region6: #{lstm_forward.1} parent=1 // pred_check
      _
    $region7: #{lstm_forward.1} parent=1 // pred_check_branch
      %21 = sbr.rel (0) target = $region9
    $region8: #{lstm_forward.1} parent=1 // pred_region
      %s23 = ssub.s32 512, 512
      %24 = vsyncadd [#allocation3], %s23
      %s25 = sshll.u32 [#allocation2], 4
      %s26 = int_to_ptr.vmem [resolvable:$true] %s25
      %31 = dma.hbm_to_vmem [thread:$0]  %s1, 512, %s26, [#allocation3], 128, 128, 8
    $region9: #{lstm_forward.1} parent=1 // pred_fallthru
      _
    // Predicated region
    $region10: #{lstm_forward.1} parent=1 // pred_check
      _
    $region11: #{lstm_forward.1} parent=1 // pred_check_branch
      %33 = sbr.rel (0) target = $region13
    $region12: #{lstm_forward.1} parent=1 // pred_region
      _
    $region13: #{lstm_forward.1} parent=1 // pred_fallthru
      _
    // Predicated region
    $region14: #{lstm_forward.1} parent=1 // pred_check
      _
    $region15: #{lstm_forward.1} parent=1 // pred_check_branch
      %35 = sbr.rel (0) target = $region17
    $region16: #{lstm_forward.1} parent=1 // pred_region
      %s37 = ssub.s32 512, 512
      %38 = vsyncadd [#allocation6], %s37
      %s39 = sshll.u32 [#allocation5], 4
      %s40 = int_to_ptr.vmem [resolvable:$true] %s39
      %45 = dma.hbm_to_vmem [thread:$0]  %s3, 512, %s40, [#allocation6], 128, 128, 8
    $region17: #{lstm_forward.1} parent=1 // pred_fallthru
      _
    // Predicated region
    $region18: #{lstm_forward.1} parent=1 // pred_check
      _
    $region19: #{lstm_forward.1} parent=1 // pred_check_branch
      %47 = sbr.rel (0) target = $region21
    $region20: #{lstm_forward.1} parent=1 // pred_region
      %s49 = ssub.s32 512, 512
      %50 = vsyncadd [#allocation6], %s49
      %s51 = sshll.u32 [#allocation7], 4
      %s52 = int_to_ptr.vmem [resolvable:$true] %s51
      %57 = dma.hbm_to_vmem [thread:$0]  %s4, 512, %s52, [#allocation6], 128, 128, 8
    $region21: #{lstm_forward.1} parent=1 // pred_fallthru
      _
    // Predicated region
    $region22: #{lstm_forward.1} parent=1 // pred_check
      _
    $region23: #{lstm_forward.1} parent=1 // pred_check_branch
      %59 = sbr.rel (0) target = $region25
    $region24: #{lstm_forward.1} parent=1 // pred_region
      %s61 = ssub.s32 512, 512
      %62 = vsyncadd [#allocation9], %s61
      %s63 = sshll.u32 [#allocation8], 4
      %s64 = int_to_ptr.vmem [resolvable:$true] %s63
      %69 = dma.hbm_to_vmem [thread:$0]  %s5, 512, %s64, [#allocation9], 128, 128, 8
    $region25: #{lstm_forward.1} parent=1 // pred_fallthru
      _
    // Predicated region
    $region26: #{lstm_forward.1} parent=1 // pred_check
      _
    $region27: #{lstm_forward.1} parent=1 // pred_check_branch
      %71 = sbr.rel (0) target = $region29
    $region28: #{lstm_forward.1} parent=1 // pred_region
      %s73 = ssub.s32 512, 512
      %74 = vsyncadd [#allocation9], %s73
      %s75 = sshll.u32 [#allocation10], 4
      %s76 = int_to_ptr.vmem [resolvable:$true] %s75
      %81 = dma.hbm_to_vmem [thread:$0]  %s6, 512, %s76, [#allocation9], 128, 128, 8
    $region29: #{lstm_forward.1} parent=1 // pred_fallthru
      _
    // Predicated region
    $region30: #{lstm_forward.1} parent=1 // pred_check
      _
    $region31: #{lstm_forward.1} parent=1 // pred_check_branch
      %83 = sbr.rel (0) target = $region33
    $region32: #{lstm_forward.1} parent=1 // pred_region
      _
    $region33: #{lstm_forward.1} parent=1 // pred_fallthru
      _
    // Predicated region
    $region34: #{lstm_forward.1} parent=1 // pred_check
      _
    $region35: #{lstm_forward.1} parent=1 // pred_check_branch
      %85 = sbr.rel (0) target = $region37
    $region36: #{lstm_forward.1} parent=1 // pred_region
      _
    $region37: #{lstm_forward.1} parent=1 // pred_fallthru
      _
    // Predicated region
    $region38: #{lstm_forward.1} parent=1 // pred_check
      _
    $region39: #{lstm_forward.1} parent=1 // pred_check_branch
      %87 = sbr.rel (0) target = $region41
    $region40: #{lstm_forward.1} parent=1 // pred_region
      %88 = dma.done [#allocation3], 512
    $region41: #{lstm_forward.1} parent=1 // pred_fallthru
      _
    // Predicated region
    $region42: #{lstm_forward.1} parent=1 // pred_check
      _
    $region43: #{lstm_forward.1} parent=1 // pred_check_branch
      %90 = sbr.rel (0) target = $region45
    $region44: #{lstm_forward.1} parent=1 // pred_region
      %91 = dma.done [#allocation6], 512
    $region45: #{lstm_forward.1} parent=1 // pred_fallthru
      _
    // Predicated region
    $region46: #{lstm_forward.1} parent=1 // pred_check
      _
    $region47: #{lstm_forward.1} parent=1 // pred_check_branch
      %93 = sbr.rel (0) target = $region49
    $region48: #{lstm_forward.1} parent=1 // pred_region
      %94 = dma.done [#allocation6], 512
    $region49: #{lstm_forward.1} parent=1 // pred_fallthru
      _
    // Predicated region
    $region50: #{lstm_forward.1} parent=1 // pred_check
      _
    $region51: #{lstm_forward.1} parent=1 // pred_check_branch
      %96 = sbr.rel (0) target = $region53
    $region52: #{lstm_forward.1} parent=1 // pred_region
      %97 = dma.done [#allocation9], 512
    $region53: #{lstm_forward.1} parent=1 // pred_fallthru
      _
    // Predicated region
    $region54: #{lstm_forward.1} parent=1 // pred_check
      _
    $region55: #{lstm_forward.1} parent=1 // pred_check_branch
      %99 = sbr.rel (0) target = $region57
    $region56: #{lstm_forward.1} parent=1 // pred_region
      %100 = dma.done [#allocation9], 512
    $region57: #{lstm_forward.1} parent=1 // pred_fallthru
      _
    %v101 = vld [vmem:[%s0] sm:$0xff]
    %v102 = vld [vmem:[%s0 + $0x8] sm:$0xff]
    %v103 = vld [vmem:[%s0 + $0x10] sm:$0xff]
    %v104 = vld [vmem:[%s0 + $0x18] sm:$0xff]
    %v105 = vld [vmem:[#allocation2] sm:$0xff]
    %v106 = vld [vmem:[#allocation2 + $0x8] sm:$0xff]
    %v107 = vld [vmem:[#allocation2 + $0x10] sm:$0xff]
    %v108 = vld [vmem:[#allocation2 + $0x18] sm:$0xff]
    %v109 = vld [vmem:[%s2] sm:$0x1]
    %v111 = vlaneseq
    %v112 = vshrl.u32 %v111, 7
    %v113 = vsub.s32 0, %v112
    %v114 = vrot.slane %v109, %v113
    %vm116 = vcmask 261120
    %v118 = vsel %vm116, %v101, 0
    %v121 = vsel %vm116, %v102, 0
    %v124 = vsel %vm116, %v103, 0
    %v127 = vsel %vm116, %v104, 0
    %129 = vmatprep.subr.mxu0 0.0
    %130 = vmatpush1.msra.mxu0 %v105
    %131 = vmatprep.subr.mxu0 0.0
    %132 = vmatpush1.msra.mxu0 %v106
    %133 = vmatprep.subr.mxu0 0.0
    %134 = vmatpush1.msra.mxu0 %v107
    %135 = vmatprep.subr.mxu0 0.0
    %136 = vmatpush1.msra.mxu0 %v108
    %137 = vmatprep.subr.mxu0 0.0
    %138 = vmatpush1.msra.mxu0 0.0
    %139 = vmatprep.subr.mxu0 0.0
    %140 = vmatpush1.msra.mxu0 0.0
    %141 = vmatprep.subr.mxu0 0.0
    %142 = vmatpush1.msra.mxu0 0.0
    %143 = vmatprep.subr.mxu0 0.0
    %144 = vmatpush1.msra.mxu0 0.0
    %145 = vmatprep.subr.mxu0 0.0
    %146 = vmatpush1.msra.mxu0 0.0
    %147 = vmatprep.subr.mxu0 0.0
    %148 = vmatpush1.msra.mxu0 0.0
    %149 = vmatprep.subr.mxu0 0.0
    %150 = vmatpush1.msra.mxu0 0.0
    %151 = vmatprep.subr.mxu0 0.0
    %152 = vmatpush1.msra.mxu0 0.0
    %153 = vmatprep.subr.mxu0 0.0
    %154 = vmatpush1.msra.mxu0 0.0
    %155 = vmatprep.subr.mxu0 0.0
    %156 = vmatpush1.msra.mxu0 0.0
    %157 = vmatprep.subr.mxu0 0.0
    %158 = vmatpush1.msra.mxu0 0.0
    %159 = vmatprep.subr.mxu0 0.0
    %160 = vmatpush1.msra.mxu0 0.0
    %161 = vmatprep.subr.mxu0 0.0
    %162 = vmatpush1.msra.mxu0 0.0
    %163 = vmatprep.subr.mxu0 0.0
    %164 = vmatpush1.msra.mxu0 0.0
    %165 = vmatprep.subr.mxu0 0.0
    %166 = vmatpush1.msra.mxu0 0.0
    %167 = vmatprep.subr.mxu0 0.0
    %168 = vmatpush1.msra.mxu0 0.0
    %169 = vmatprep.subr.mxu0 0.0
    %170 = vmatpush1.msra.mxu0 0.0
    %171 = vmatprep.subr.mxu0 0.0
    %172 = vmatpush1.msra.mxu0 0.0
    %173 = vmatprep.subr.mxu0 0.0
    %174 = vmatpush1.msra.mxu0 0.0
    %175 = vmatprep.subr.mxu0 0.0
    %176 = vmatpush1.msra.mxu0 0.0
    %177 = vmatprep.subr.mxu0 0.0
    %178 = vmatpush1.msra.mxu0 0.0
    %179 = vmatprep.subr.mxu0 0.0
    %180 = vmatpush1.msra.mxu0 0.0
    %181 = vmatprep.subr.mxu0 0.0
    %182 = vmatpush1.msra.mxu0 0.0
    %183 = vmatprep.subr.mxu0 0.0
    %184 = vmatpush1.msra.mxu0 0.0
    %185 = vmatprep.subr.mxu0 0.0
    %186 = vmatpush1.msra.mxu0 0.0
    %187 = vmatprep.subr.mxu0 0.0
    %188 = vmatpush1.msra.mxu0 0.0
    %189 = vmatprep.subr.mxu0 0.0
    %190 = vmatpush1.msra.mxu0 0.0
    %191 = vmatprep.subr.mxu0 0.0
    %192 = vmatpush1.msra.mxu0 0.0
    %193 = vmatprep.mubr.f32.mxu0 0.0
    %194 = vmatmul.mubr.f32.gmra.mrb[0].mxu0 %v118
    %v195 = vpop.f32.mrb[0].mxu0
    %v196 = vadd.f32 %v114, %v195
    %v197 = vpop.f32.mrb[0].mxu0
    %198 = vmatprep.mubr.f32.mxu0 0.0
    %199 = vmatmul.mubr.f32.gmra.mrb[0].mxu0 %v121
    %v200 = vpop.f32.mrb[0].mxu0
    %v201 = vadd.f32 %v114, %v200
    %v202 = vpop.f32.mrb[0].mxu0
    %203 = vmatprep.mubr.f32.mxu0 0.0
    %204 = vmatmul.mubr.f32.gmra.mrb[0].mxu0 %v124
    %v205 = vpop.f32.mrb[0].mxu0
    %v206 = vadd.f32 %v114, %v205
    %v207 = vpop.f32.mrb[0].mxu0
    %208 = vmatprep.mubr.f32.mxu0 0.0
    %209 = vmatmul.mubr.f32.gmra.mrb[0].mxu0 %v127
    %v210 = vpop.f32.mrb[0].mxu0
    %v211 = vadd.f32 %v114, %v210
    %v212 = vpop.f32.mrb[0].mxu0
    %213 = vdwg.mxu0
    %v218 = vcombine.high %v196, %v196
    %v219 = vcombine.high %v201, %v201
    %v220 = vcombine.high %v206, %v206
    %v221 = vcombine.high %v211, %v211
    %v226 = vld [vmem:[#allocation5] sm:$0xff]
    %v227 = vld [vmem:[#allocation5 + $0x8] sm:$0xff]
    %v228 = vld [vmem:[#allocation5 + $0x10] sm:$0xff]
    %v229 = vld [vmem:[#allocation5 + $0x18] sm:$0xff]
    %v230 = vld [vmem:[#allocation7] sm:$0xff]
    %v231 = vld [vmem:[#allocation7 + $0x8] sm:$0xff]
    %v232 = vld [vmem:[#allocation7 + $0x10] sm:$0xff]
    %v233 = vld [vmem:[#allocation7 + $0x18] sm:$0xff]
    %v234 = vld [vmem:[#allocation8] sm:$0xff]
    %v235 = vld [vmem:[#allocation8 + $0x8] sm:$0xff]
    %v236 = vld [vmem:[#allocation8 + $0x10] sm:$0xff]
    %v237 = vld [vmem:[#allocation8 + $0x18] sm:$0xff]
    %v238 = vld [vmem:[#allocation10] sm:$0xff]
    %v239 = vld [vmem:[#allocation10 + $0x8] sm:$0xff]
    %v240 = vld [vmem:[#allocation10 + $0x10] sm:$0xff]
    %v241 = vld [vmem:[#allocation10 + $0x18] sm:$0xff]
    %v242 = vxor.u32 %v196, 2147483648
    %v243 = vmul.f32 %v242, 1.442695
    %v244 = vpow.pop %v243
    %v245 = vadd.f32 %v244, 1.0
    %v246 = vrcp.pop %v245
    %v247 = vmul.f32 1.0, %v246
    %v248 = vtanh.pop %v196
    %250 = vrot.lane.b32.xlu0 %v248, 64
    %v251 = vpop.permute.xlu0 %250
    %v253 = vmul.f32 %v247, %v251
    %v254 = vtanh.pop %v253
    %256 = vrot.lane.b32.xlu0 %v254, 96
    %v257 = vpop.permute.xlu0 %256
    %v259 = vmul.f32 %v247, %v257
    %261 = vrot.lane.b32.xlu0 %v259, 32
    %v262 = vpop.permute.xlu0 %261
    %v263 = vsel %vm116, %v262, 0
    %265 = vmatprep.subr.mxu0 0.0
    %266 = vmatpush1.msra.mxu0 %v226
    %267 = vmatprep.subr.mxu0 0.0
    %268 = vmatpush1.msra.mxu0 %v227
    %269 = vmatprep.subr.mxu0 0.0
    %270 = vmatpush1.msra.mxu0 %v228
    %271 = vmatprep.subr.mxu0 0.0
    %272 = vmatpush1.msra.mxu0 %v229
    %273 = vmatprep.subr.mxu0 0.0
    %274 = vmatpush1.msra.mxu0 0.0
    %275 = vmatprep.subr.mxu0 0.0
    %276 = vmatpush1.msra.mxu0 0.0
    %277 = vmatprep.subr.mxu0 0.0
    %278 = vmatpush1.msra.mxu0 0.0
    %279 = vmatprep.subr.mxu0 0.0
    %280 = vmatpush1.msra.mxu0 0.0
    %281 = vmatprep.subr.mxu0 0.0
    %282 = vmatpush1.msra.mxu0 0.0
    %283 = vmatprep.subr.mxu0 0.0
    %284 = vmatpush1.msra.mxu0 0.0
    %285 = vmatprep.subr.mxu0 0.0
    %286 = vmatpush1.msra.mxu0 0.0
    %287 = vmatprep.subr.mxu0 0.0
    %288 = vmatpush1.msra.mxu0 0.0
    %289 = vmatprep.subr.mxu0 0.0
    %290 = vmatpush1.msra.mxu0 0.0
    %291 = vmatprep.subr.mxu0 0.0
    %292 = vmatpush1.msra.mxu0 0.0
    %293 = vmatprep.subr.mxu0 0.0
    %294 = vmatpush1.msra.mxu0 0.0
    %295 = vmatprep.subr.mxu0 0.0
    %296 = vmatpush1.msra.mxu0 0.0
    %297 = vmatprep.subr.mxu0 0.0
    %298 = vmatpush1.msra.mxu0 0.0
    %299 = vmatprep.subr.mxu0 0.0
    %300 = vmatpush1.msra.mxu0 0.0
    %301 = vmatprep.subr.mxu0 0.0
    %302 = vmatpush1.msra.mxu0 0.0
    %303 = vmatprep.subr.mxu0 0.0
    %304 = vmatpush1.msra.mxu0 0.0
    %305 = vmatprep.subr.mxu0 0.0
    %306 = vmatpush1.msra.mxu0 0.0
    %307 = vmatprep.subr.mxu0 0.0
    %308 = vmatpush1.msra.mxu0 0.0
    %309 = vmatprep.subr.mxu0 0.0
    %310 = vmatpush1.msra.mxu0 0.0
    %311 = vmatprep.subr.mxu0 0.0
    %312 = vmatpush1.msra.mxu0 0.0
    %313 = vmatprep.subr.mxu0 0.0
    %314 = vmatpush1.msra.mxu0 0.0
    %315 = vmatprep.subr.mxu0 0.0
    %316 = vmatpush1.msra.mxu0 0.0
    %317 = vmatprep.subr.mxu0 0.0
    %318 = vmatpush1.msra.mxu0 0.0
    %319 = vmatprep.subr.mxu0 0.0
    %320 = vmatpush1.msra.mxu0 0.0
    %321 = vmatprep.subr.mxu0 0.0
    %322 = vmatpush1.msra.mxu0 0.0
    %323 = vmatprep.subr.mxu0 0.0
    %324 = vmatpush1.msra.mxu0 0.0
    %325 = vmatprep.subr.mxu0 0.0
    %326 = vmatpush1.msra.mxu0 0.0
    %327 = vmatprep.subr.mxu0 0.0
    %328 = vmatpush1.msra.mxu0 0.0
    %329 = vmatprep.mubr.f32.mxu0 0.0
    %330 = vmatmul.mubr.f32.gmra.mrb[0].mxu0 %v263
    %v331 = vpop.f32.mrb[0].mxu0
    %v332 = vadd.f32 0.0, %v331
    %v333 = vpop.f32.mrb[0].mxu0
    %334 = vdwg.mxu0
    %v335 = vadd.f32 %v218, %v332
    %v336 = vxor.u32 %v335, 2147483648
    %v337 = vmul.f32 %v336, 1.442695
    %v338 = vpow.pop %v337
    %v339 = vadd.f32 %v338, 1.0
    %v340 = vrcp.pop %v339
    %v341 = vmul.f32 1.0, %v340
    %342 = vmatprep.subr.mxu0 0.0
    %343 = vmatpush1.msra.mxu0 %v230
    %344 = vmatprep.subr.mxu0 0.0
    %345 = vmatpush1.msra.mxu0 %v231
    %346 = vmatprep.subr.mxu0 0.0
    %347 = vmatpush1.msra.mxu0 %v232
    %348 = vmatprep.subr.mxu0 0.0
    %349 = vmatpush1.msra.mxu0 %v233
    %350 = vmatprep.subr.mxu0 0.0
    %351 = vmatpush1.msra.mxu0 0.0
    %352 = vmatprep.subr.mxu0 0.0
    %353 = vmatpush1.msra.mxu0 0.0
    %354 = vmatprep.subr.mxu0 0.0
    %355 = vmatpush1.msra.mxu0 0.0
    %356 = vmatprep.subr.mxu0 0.0
    %357 = vmatpush1.msra.mxu0 0.0
    %358 = vmatprep.subr.mxu0 0.0
    %359 = vmatpush1.msra.mxu0 0.0
    %360 = vmatprep.subr.mxu0 0.0
    %361 = vmatpush1.msra.mxu0 0.0
    %362 = vmatprep.subr.mxu0 0.0
    %363 = vmatpush1.msra.mxu0 0.0
    %364 = vmatprep.subr.mxu0 0.0
    %365 = vmatpush1.msra.mxu0 0.0
    %366 = vmatprep.subr.mxu0 0.0
    %367 = vmatpush1.msra.mxu0 0.0
    %368 = vmatprep.subr.mxu0 0.0
    %369 = vmatpush1.msra.mxu0 0.0
    %370 = vmatprep.subr.mxu0 0.0
    %371 = vmatpush1.msra.mxu0 0.0
    %372 = vmatprep.subr.mxu0 0.0
    %373 = vmatpush1.msra.mxu0 0.0
    %374 = vmatprep.subr.mxu0 0.0
    %375 = vmatpush1.msra.mxu0 0.0
    %376 = vmatprep.subr.mxu0 0.0
    %377 = vmatpush1.msra.mxu0 0.0
    %378 = vmatprep.subr.mxu0 0.0
    %379 = vmatpush1.msra.mxu0 0.0
    %380 = vmatprep.subr.mxu0 0.0
    %381 = vmatpush1.msra.mxu0 0.0
    %382 = vmatprep.subr.mxu0 0.0
    %383 = vmatpush1.msra.mxu0 0.0
    %384 = vmatprep.subr.mxu0 0.0
    %385 = vmatpush1.msra.mxu0 0.0
    %386 = vmatprep.subr.mxu0 0.0
    %387 = vmatpush1.msra.mxu0 0.0
    %388 = vmatprep.subr.mxu0 0.0
    %389 = vmatpush1.msra.mxu0 0.0
    %390 = vmatprep.subr.mxu0 0.0
    %391 = vmatpush1.msra.mxu0 0.0
    %392 = vmatprep.subr.mxu0 0.0
    %393 = vmatpush1.msra.mxu0 0.0
    %394 = vmatprep.subr.mxu0 0.0
    %395 = vmatpush1.msra.mxu0 0.0
    %396 = vmatprep.subr.mxu0 0.0
    %397 = vmatpush1.msra.mxu0 0.0
    %398 = vmatprep.subr.mxu0 0.0
    %399 = vmatpush1.msra.mxu0 0.0
    %400 = vmatprep.subr.mxu0 0.0
    %401 = vmatpush1.msra.mxu0 0.0
    %402 = vmatprep.subr.mxu0 0.0
    %403 = vmatpush1.msra.mxu0 0.0
    %404 = vmatprep.subr.mxu0 0.0
    %405 = vmatpush1.msra.mxu0 0.0
    %406 = vmatprep.mubr.f32.mxu0 0.0
    %407 = vmatmul.mubr.f32.gmra.mrb[0].mxu0 %v263
    %v408 = vpop.f32.mrb[0].mxu0
    %v409 = vadd.f32 0.0, %v408
    %v410 = vpop.f32.mrb[0].mxu0
    %411 = vdwg.mxu0
    %413 = vrot.lane.b32.xlu0 %v409, 32
    %v414 = vpop.permute.xlu0 %413
    %v416 = vadd.f32 %v218, %v414
    %v417 = vxor.u32 %v416, 2147483648
    %v418 = vmul.f32 %v417, 1.442695
    %v419 = vpow.pop %v418
    %v420 = vadd.f32 %v419, 1.0
    %v421 = vrcp.pop %v420
    %v422 = vmul.f32 1.0, %v421
    %423 = vmatprep.subr.mxu0 0.0
    %424 = vmatpush1.msra.mxu0 %v234
    %425 = vmatprep.subr.mxu0 0.0
    %426 = vmatpush1.msra.mxu0 %v235
    %427 = vmatprep.subr.mxu0 0.0
    %428 = vmatpush1.msra.mxu0 %v236
    %429 = vmatprep.subr.mxu0 0.0
    %430 = vmatpush1.msra.mxu0 %v237
    %431 = vmatprep.subr.mxu0 0.0
    %432 = vmatpush1.msra.mxu0 0.0
    %433 = vmatprep.subr.mxu0 0.0
    %434 = vmatpush1.msra.mxu0 0.0
    %435 = vmatprep.subr.mxu0 0.0
    %436 = vmatpush1.msra.mxu0 0.0
    %437 = vmatprep.subr.mxu0 0.0
    %438 = vmatpush1.msra.mxu0 0.0
    %439 = vmatprep.subr.mxu0 0.0
    %440 = vmatpush1.msra.mxu0 0.0
    %441 = vmatprep.subr.mxu0 0.0
    %442 = vmatpush1.msra.mxu0 0.0
    %443 = vmatprep.subr.mxu0 0.0
    %444 = vmatpush1.msra.mxu0 0.0
    %445 = vmatprep.subr.mxu0 0.0
    %446 = vmatpush1.msra.mxu0 0.0
    %447 = vmatprep.subr.mxu0 0.0
    %448 = vmatpush1.msra.mxu0 0.0
    %449 = vmatprep.subr.mxu0 0.0
    %450 = vmatpush1.msra.mxu0 0.0
    %451 = vmatprep.subr.mxu0 0.0
    %452 = vmatpush1.msra.mxu0 0.0
    %453 = vmatprep.subr.mxu0 0.0
    %454 = vmatpush1.msra.mxu0 0.0
    %455 = vmatprep.subr.mxu0 0.0
    %456 = vmatpush1.msra.mxu0 0.0
    %457 = vmatprep.subr.mxu0 0.0
    %458 = vmatpush1.msra.mxu0 0.0
    %459 = vmatprep.subr.mxu0 0.0
    %460 = vmatpush1.msra.mxu0 0.0
    %461 = vmatprep.subr.mxu0 0.0
    %462 = vmatpush1.msra.mxu0 0.0
    %463 = vmatprep.subr.mxu0 0.0
    %464 = vmatpush1.msra.mxu0 0.0
    %465 = vmatprep.subr.mxu0 0.0
    %466 = vmatpush1.msra.mxu0 0.0
    %467 = vmatprep.subr.mxu0 0.0
    %468 = vmatpush1.msra.mxu0 0.0
    %469 = vmatprep.subr.mxu0 0.0
    %470 = vmatpush1.msra.mxu0 0.0
    %471 = vmatprep.subr.mxu0 0.0
    %472 = vmatpush1.msra.mxu0 0.0
    %473 = vmatprep.subr.mxu0 0.0
    %474 = vmatpush1.msra.mxu0 0.0
    %475 = vmatprep.subr.mxu0 0.0
    %476 = vmatpush1.msra.mxu0 0.0
    %477 = vmatprep.subr.mxu0 0.0
    %478 = vmatpush1.msra.mxu0 0.0
    %479 = vmatprep.subr.mxu0 0.0
    %480 = vmatpush1.msra.mxu0 0.0
    %481 = vmatprep.subr.mxu0 0.0
    %482 = vmatpush1.msra.mxu0 0.0
    %483 = vmatprep.subr.mxu0 0.0
    %484 = vmatpush1.msra.mxu0 0.0
    %485 = vmatprep.subr.mxu0 0.0
    %486 = vmatpush1.msra.mxu0 0.0
    %487 = vmatprep.mubr.f32.mxu0 0.0
    %488 = vmatmul.mubr.f32.gmra.mrb[0].mxu0 %v263
    %v489 = vpop.f32.mrb[0].mxu0
    %v490 = vadd.f32 0.0, %v489
    %v491 = vpop.f32.mrb[0].mxu0
    %492 = vdwg.mxu0
    %494 = vrot.lane.b32.xlu0 %v490, 64
    %v495 = vpop.permute.xlu0 %494
    %v497 = vadd.f32 %v218, %v495
    %v498 = vtanh.pop %v497
    %499 = vmatprep.subr.mxu0 0.0
    %500 = vmatpush1.msra.mxu0 %v238
    %501 = vmatprep.subr.mxu0 0.0
    %502 = vmatpush1.msra.mxu0 %v239
    %503 = vmatprep.subr.mxu0 0.0
    %504 = vmatpush1.msra.mxu0 %v240
    %505 = vmatprep.subr.mxu0 0.0
    %506 = vmatpush1.msra.mxu0 %v241
    %507 = vmatprep.subr.mxu0 0.0
    %508 = vmatpush1.msra.mxu0 0.0
    %509 = vmatprep.subr.mxu0 0.0
    %510 = vmatpush1.msra.mxu0 0.0
    %511 = vmatprep.subr.mxu0 0.0
    %512 = vmatpush1.msra.mxu0 0.0
    %513 = vmatprep.subr.mxu0 0.0
    %514 = vmatpush1.msra.mxu0 0.0
    %515 = vmatprep.subr.mxu0 0.0
    %516 = vmatpush1.msra.mxu0 0.0
    %517 = vmatprep.subr.mxu0 0.0
    %518 = vmatpush1.msra.mxu0 0.0
    %519 = vmatprep.subr.mxu0 0.0
    %520 = vmatpush1.msra.mxu0 0.0
    %521 = vmatprep.subr.mxu0 0.0
    %522 = vmatpush1.msra.mxu0 0.0
    %523 = vmatprep.subr.mxu0 0.0
    %524 = vmatpush1.msra.mxu0 0.0
    %525 = vmatprep.subr.mxu0 0.0
    %526 = vmatpush1.msra.mxu0 0.0
    %527 = vmatprep.subr.mxu0 0.0
    %528 = vmatpush1.msra.mxu0 0.0
    %529 = vmatprep.subr.mxu0 0.0
    %530 = vmatpush1.msra.mxu0 0.0
    %531 = vmatprep.subr.mxu0 0.0
    %532 = vmatpush1.msra.mxu0 0.0
    %533 = vmatprep.subr.mxu0 0.0
    %534 = vmatpush1.msra.mxu0 0.0
    %535 = vmatprep.subr.mxu0 0.0
    %536 = vmatpush1.msra.mxu0 0.0
    %537 = vmatprep.subr.mxu0 0.0
    %538 = vmatpush1.msra.mxu0 0.0
    %539 = vmatprep.subr.mxu0 0.0
    %540 = vmatpush1.msra.mxu0 0.0
    %541 = vmatprep.subr.mxu0 0.0
    %542 = vmatpush1.msra.mxu0 0.0
    %543 = vmatprep.subr.mxu0 0.0
    %544 = vmatpush1.msra.mxu0 0.0
    %545 = vmatprep.subr.mxu0 0.0
    %546 = vmatpush1.msra.mxu0 0.0
    %547 = vmatprep.subr.mxu0 0.0
    %548 = vmatpush1.msra.mxu0 0.0
    %549 = vmatprep.subr.mxu0 0.0
    %550 = vmatpush1.msra.mxu0 0.0
    %551 = vmatprep.subr.mxu0 0.0
    %552 = vmatpush1.msra.mxu0 0.0
    %553 = vmatprep.subr.mxu0 0.0
    %554 = vmatpush1.msra.mxu0 0.0
    %555 = vmatprep.subr.mxu0 0.0
    %556 = vmatpush1.msra.mxu0 0.0
    %557 = vmatprep.subr.mxu0 0.0
    %558 = vmatpush1.msra.mxu0 0.0
    %559 = vmatprep.subr.mxu0 0.0
    %560 = vmatpush1.msra.mxu0 0.0
    %561 = vmatprep.subr.mxu0 0.0
    %562 = vmatpush1.msra.mxu0 0.0
    %563 = vmatprep.mubr.f32.mxu0 0.0
    %564 = vmatmul.mubr.f32.gmra.mrb[0].mxu0 %v263
    %v565 = vpop.f32.mrb[0].mxu0
    %v566 = vadd.f32 0.0, %v565
    %v567 = vpop.f32.mrb[0].mxu0
    %568 = vdwg.mxu0
    %570 = vrot.lane.b32.xlu0 %v566, 96
    %v571 = vpop.permute.xlu0 %570
    %v573 = vadd.f32 %v218, %v571
    %v574 = vxor.u32 %v573, 2147483648
    %v575 = vmul.f32 %v574, 1.442695
    %v576 = vpow.pop %v575
    %v577 = vadd.f32 %v576, 1.0
    %v578 = vrcp.pop %v577
    %v579 = vmul.f32 1.0, %v578
    %581 = vrot.lane.b32.xlu0 %v253, 32
    %v582 = vpop.permute.xlu0 %581
    %v584 = vmul.f32 %v422, %v582
    %586 = vrot.lane.b32.xlu0 %v498, 64
    %v587 = vpop.permute.xlu0 %586
    %v589 = vmul.f32 %v341, %v587
    %591 = vrot.lane.b32.xlu0 %v589, 32
    %v592 = vpop.permute.xlu0 %591
    %v594 = vadd.f32 %v584, %v592
    %v595 = vtanh.pop %v594
    %597 = vrot.lane.b32.xlu0 %v595, 64
    %v598 = vpop.permute.xlu0 %597
    %v600 = vmul.f32 %v579, %v598
    %v601 = vmax.f32 %v259, %v600
    %603 = vrot.lane.b32.xlu0 %v600, 32
    %v604 = vpop.permute.xlu0 %603
    %v605 = vsel %vm116, %v604, 0
    %607 = vmatprep.subr.mxu0 0.0
    %608 = vmatpush1.msra.mxu0 %v226
    %609 = vmatprep.subr.mxu0 0.0
    %610 = vmatpush1.msra.mxu0 %v227
    %611 = vmatprep.subr.mxu0 0.0
    %612 = vmatpush1.msra.mxu0 %v228
    %613 = vmatprep.subr.mxu0 0.0
    %614 = vmatpush1.msra.mxu0 %v229
    %615 = vmatprep.subr.mxu0 0.0
    %616 = vmatpush1.msra.mxu0 0.0
    %617 = vmatprep.subr.mxu0 0.0
    %618 = vmatpush1.msra.mxu0 0.0
    %619 = vmatprep.subr.mxu0 0.0
    %620 = vmatpush1.msra.mxu0 0.0
    %621 = vmatprep.subr.mxu0 0.0
    %622 = vmatpush1.msra.mxu0 0.0
    %623 = vmatprep.subr.mxu0 0.0
    %624 = vmatpush1.msra.mxu0 0.0
    %625 = vmatprep.subr.mxu0 0.0
    %626 = vmatpush1.msra.mxu0 0.0
    %627 = vmatprep.subr.mxu0 0.0
    %628 = vmatpush1.msra.mxu0 0.0
    %629 = vmatprep.subr.mxu0 0.0
    %630 = vmatpush1.msra.mxu0 0.0
    %631 = vmatprep.subr.mxu0 0.0
    %632 = vmatpush1.msra.mxu0 0.0
    %633 = vmatprep.subr.mxu0 0.0
    %634 = vmatpush1.msra.mxu0 0.0
    %635 = vmatprep.subr.mxu0 0.0
    %636 = vmatpush1.msra.mxu0 0.0
    %637 = vmatprep.subr.mxu0 0.0
    %638 = vmatpush1.msra.mxu0 0.0
    %639 = vmatprep.subr.mxu0 0.0
    %640 = vmatpush1.msra.mxu0 0.0
    %641 = vmatprep.subr.mxu0 0.0
    %642 = vmatpush1.msra.mxu0 0.0
    %643 = vmatprep.subr.mxu0 0.0
    %644 = vmatpush1.msra.mxu0 0.0
    %645 = vmatprep.subr.mxu0 0.0
    %646 = vmatpush1.msra.mxu0 0.0
    %647 = vmatprep.subr.mxu0 0.0
    %648 = vmatpush1.msra.mxu0 0.0
    %649 = vmatprep.subr.mxu0 0.0
    %650 = vmatpush1.msra.mxu0 0.0
    %651 = vmatprep.subr.mxu0 0.0
    %652 = vmatpush1.msra.mxu0 0.0
    %653 = vmatprep.subr.mxu0 0.0
    %654 = vmatpush1.msra.mxu0 0.0
    %655 = vmatprep.subr.mxu0 0.0
    %656 = vmatpush1.msra.mxu0 0.0
    %657 = vmatprep.subr.mxu0 0.0
    %658 = vmatpush1.msra.mxu0 0.0
    %659 = vmatprep.subr.mxu0 0.0
    %660 = vmatpush1.msra.mxu0 0.0
    %661 = vmatprep.subr.mxu0 0.0
    %662 = vmatpush1.msra.mxu0 0.0
    %663 = vmatprep.subr.mxu0 0.0
    %664 = vmatpush1.msra.mxu0 0.0
    %665 = vmatprep.subr.mxu0 0.0
    %666 = vmatpush1.msra.mxu0 0.0
    %667 = vmatprep.subr.mxu0 0.0
    %668 = vmatpush1.msra.mxu0 0.0
    %669 = vmatprep.subr.mxu0 0.0
    %670 = vmatpush1.msra.mxu0 0.0
    %671 = vmatprep.mubr.f32.mxu0 0.0
    %672 = vmatmul.mubr.f32.gmra.mrb[0].mxu0 %v605
    %v673 = vpop.f32.mrb[0].mxu0
    %v674 = vadd.f32 0.0, %v673
    %v675 = vpop.f32.mrb[0].mxu0
    %676 = vdwg.mxu0
    %v677 = vadd.f32 %v201, %v674
    %v678 = vxor.u32 %v677, 2147483648
    %v679 = vmul.f32 %v678, 1.442695
    %v680 = vpow.pop %v679
    %v681 = vadd.f32 %v680, 1.0
    %v682 = vrcp.pop %v681
    %v683 = vmul.f32 1.0, %v682
    %684 = vmatprep.subr.mxu0 0.0
    %685 = vmatpush1.msra.mxu0 %v230
    %686 = vmatprep.subr.mxu0 0.0
    %687 = vmatpush1.msra.mxu0 %v231
    %688 = vmatprep.subr.mxu0 0.0
    %689 = vmatpush1.msra.mxu0 %v232
    %690 = vmatprep.subr.mxu0 0.0
    %691 = vmatpush1.msra.mxu0 %v233
    %692 = vmatprep.subr.mxu0 0.0
    %693 = vmatpush1.msra.mxu0 0.0
    %694 = vmatprep.subr.mxu0 0.0
    %695 = vmatpush1.msra.mxu0 0.0
    %696 = vmatprep.subr.mxu0 0.0
    %697 = vmatpush1.msra.mxu0 0.0
    %698 = vmatprep.subr.mxu0 0.0
    %699 = vmatpush1.msra.mxu0 0.0
    %700 = vmatprep.subr.mxu0 0.0
    %701 = vmatpush1.msra.mxu0 0.0
    %702 = vmatprep.subr.mxu0 0.0
    %703 = vmatpush1.msra.mxu0 0.0
    %704 = vmatprep.subr.mxu0 0.0
    %705 = vmatpush1.msra.mxu0 0.0
    %706 = vmatprep.subr.mxu0 0.0
    %707 = vmatpush1.msra.mxu0 0.0
    %708 = vmatprep.subr.mxu0 0.0
    %709 = vmatpush1.msra.mxu0 0.0
    %710 = vmatprep.subr.mxu0 0.0
    %711 = vmatpush1.msra.mxu0 0.0
    %712 = vmatprep.subr.mxu0 0.0
    %713 = vmatpush1.msra.mxu0 0.0
    %714 = vmatprep.subr.mxu0 0.0
    %715 = vmatpush1.msra.mxu0 0.0
    %716 = vmatprep.subr.mxu0 0.0
    %717 = vmatpush1.msra.mxu0 0.0
    %718 = vmatprep.subr.mxu0 0.0
    %719 = vmatpush1.msra.mxu0 0.0
    %720 = vmatprep.subr.mxu0 0.0
    %721 = vmatpush1.msra.mxu0 0.0
    %722 = vmatprep.subr.mxu0 0.0
    %723 = vmatpush1.msra.mxu0 0.0
    %724 = vmatprep.subr.mxu0 0.0
    %725 = vmatpush1.msra.mxu0 0.0
    %726 = vmatprep.subr.mxu0 0.0
    %727 = vmatpush1.msra.mxu0 0.0
    %728 = vmatprep.subr.mxu0 0.0
    %729 = vmatpush1.msra.mxu0 0.0
    %730 = vmatprep.subr.mxu0 0.0
    %731 = vmatpush1.msra.mxu0 0.0
    %732 = vmatprep.subr.mxu0 0.0
    %733 = vmatpush1.msra.mxu0 0.0
    %734 = vmatprep.subr.mxu0 0.0
    %735 = vmatpush1.msra.mxu0 0.0
    %736 = vmatprep.subr.mxu0 0.0
    %737 = vmatpush1.msra.mxu0 0.0
    %738 = vmatprep.subr.mxu0 0.0
    %739 = vmatpush1.msra.mxu0 0.0
    %740 = vmatprep.subr.mxu0 0.0
    %741 = vmatpush1.msra.mxu0 0.0
    %742 = vmatprep.subr.mxu0 0.0
    %743 = vmatpush1.msra.mxu0 0.0
    %744 = vmatprep.subr.mxu0 0.0
    %745 = vmatpush1.msra.mxu0 0.0
    %746 = vmatprep.subr.mxu0 0.0
    %747 = vmatpush1.msra.mxu0 0.0
    %748 = vmatprep.mubr.f32.mxu0 0.0
    %749 = vmatmul.mubr.f32.gmra.mrb[0].mxu0 %v605
    %v750 = vpop.f32.mrb[0].mxu0
    %v751 = vadd.f32 0.0, %v750
    %v752 = vpop.f32.mrb[0].mxu0
    %753 = vdwg.mxu0
    %755 = vrot.lane.b32.xlu0 %v751, 32
    %v756 = vpop.permute.xlu0 %755
    %v758 = vadd.f32 %v201, %v756
    %v759 = vxor.u32 %v758, 2147483648
    %v760 = vmul.f32 %v759, 1.442695
    %v761 = vpow.pop %v760
    %v762 = vadd.f32 %v761, 1.0
    %v763 = vrcp.pop %v762
    %v764 = vmul.f32 1.0, %v763
    %765 = vmatprep.subr.mxu0 0.0
    %766 = vmatpush1.msra.mxu0 %v234
    %767 = vmatprep.subr.mxu0 0.0
    %768 = vmatpush1.msra.mxu0 %v235
    %769 = vmatprep.subr.mxu0 0.0
    %770 = vmatpush1.msra.mxu0 %v236
    %771 = vmatprep.subr.mxu0 0.0
    %772 = vmatpush1.msra.mxu0 %v237
    %773 = vmatprep.subr.mxu0 0.0
    %774 = vmatpush1.msra.mxu0 0.0
    %775 = vmatprep.subr.mxu0 0.0
    %776 = vmatpush1.msra.mxu0 0.0
    %777 = vmatprep.subr.mxu0 0.0
    %778 = vmatpush1.msra.mxu0 0.0
    %779 = vmatprep.subr.mxu0 0.0
    %780 = vmatpush1.msra.mxu0 0.0
    %781 = vmatprep.subr.mxu0 0.0
    %782 = vmatpush1.msra.mxu0 0.0
    %783 = vmatprep.subr.mxu0 0.0
    %784 = vmatpush1.msra.mxu0 0.0
    %785 = vmatprep.subr.mxu0 0.0
    %786 = vmatpush1.msra.mxu0 0.0
    %787 = vmatprep.subr.mxu0 0.0
    %788 = vmatpush1.msra.mxu0 0.0
    %789 = vmatprep.subr.mxu0 0.0
    %790 = vmatpush1.msra.mxu0 0.0
    %791 = vmatprep.subr.mxu0 0.0
    %792 = vmatpush1.msra.mxu0 0.0
    %793 = vmatprep.subr.mxu0 0.0
    %794 = vmatpush1.msra.mxu0 0.0
    %795 = vmatprep.subr.mxu0 0.0
    %796 = vmatpush1.msra.mxu0 0.0
    %797 = vmatprep.subr.mxu0 0.0
    %798 = vmatpush1.msra.mxu0 0.0
    %799 = vmatprep.subr.mxu0 0.0
    %800 = vmatpush1.msra.mxu0 0.0
    %801 = vmatprep.subr.mxu0 0.0
    %802 = vmatpush1.msra.mxu0 0.0
    %803 = vmatprep.subr.mxu0 0.0
    %804 = vmatpush1.msra.mxu0 0.0
    %805 = vmatprep.subr.mxu0 0.0
    %806 = vmatpush1.msra.mxu0 0.0
    %807 = vmatprep.subr.mxu0 0.0
    %808 = vmatpush1.msra.mxu0 0.0
    %809 = vmatprep.subr.mxu0 0.0
    %810 = vmatpush1.msra.mxu0 0.0
    %811 = vmatprep.subr.mxu0 0.0
    %812 = vmatpush1.msra.mxu0 0.0
    %813 = vmatprep.subr.mxu0 0.0
    %814 = vmatpush1.msra.mxu0 0.0
    %815 = vmatprep.subr.mxu0 0.0
    %816 = vmatpush1.msra.mxu0 0.0
    %817 = vmatprep.subr.mxu0 0.0
    %818 = vmatpush1.msra.mxu0 0.0
    %819 = vmatprep.subr.mxu0 0.0
    %820 = vmatpush1.msra.mxu0 0.0
    %821 = vmatprep.subr.mxu0 0.0
    %822 = vmatpush1.msra.mxu0 0.0
    %823 = vmatprep.subr.mxu0 0.0
    %824 = vmatpush1.msra.mxu0 0.0
    %825 = vmatprep.subr.mxu0 0.0
    %826 = vmatpush1.msra.mxu0 0.0
    %827 = vmatprep.subr.mxu0 0.0
    %828 = vmatpush1.msra.mxu0 0.0
    %829 = vmatprep.mubr.f32.mxu0 0.0
    %830 = vmatmul.mubr.f32.gmra.mrb[0].mxu0 %v605
    %v831 = vpop.f32.mrb[0].mxu0
    %v832 = vadd.f32 0.0, %v831
    %v833 = vpop.f32.mrb[0].mxu0
    %834 = vdwg.mxu0
    %836 = vrot.lane.b32.xlu0 %v832, 64
    %v837 = vpop.permute.xlu0 %836
    %v839 = vadd.f32 %v201, %v837
    %v840 = vtanh.pop %v839
    %841 = vmatprep.subr.mxu0 0.0
    %842 = vmatpush1.msra.mxu0 %v238
    %843 = vmatprep.subr.mxu0 0.0
    %844 = vmatpush1.msra.mxu0 %v239
    %845 = vmatprep.subr.mxu0 0.0
    %846 = vmatpush1.msra.mxu0 %v240
    %847 = vmatprep.subr.mxu0 0.0
    %848 = vmatpush1.msra.mxu0 %v241
    %849 = vmatprep.subr.mxu0 0.0
    %850 = vmatpush1.msra.mxu0 0.0
    %851 = vmatprep.subr.mxu0 0.0
    %852 = vmatpush1.msra.mxu0 0.0
    %853 = vmatprep.subr.mxu0 0.0
    %854 = vmatpush1.msra.mxu0 0.0
    %855 = vmatprep.subr.mxu0 0.0
    %856 = vmatpush1.msra.mxu0 0.0
    %857 = vmatprep.subr.mxu0 0.0
    %858 = vmatpush1.msra.mxu0 0.0
    %859 = vmatprep.subr.mxu0 0.0
    %860 = vmatpush1.msra.mxu0 0.0
    %861 = vmatprep.subr.mxu0 0.0
    %862 = vmatpush1.msra.mxu0 0.0
    %863 = vmatprep.subr.mxu0 0.0
    %864 = vmatpush1.msra.mxu0 0.0
    %865 = vmatprep.subr.mxu0 0.0
    %866 = vmatpush1.msra.mxu0 0.0
    %867 = vmatprep.subr.mxu0 0.0
    %868 = vmatpush1.msra.mxu0 0.0
    %869 = vmatprep.subr.mxu0 0.0
    %870 = vmatpush1.msra.mxu0 0.0
    %871 = vmatprep.subr.mxu0 0.0
    %872 = vmatpush1.msra.mxu0 0.0
    %873 = vmatprep.subr.mxu0 0.0
    %874 = vmatpush1.msra.mxu0 0.0
    %875 = vmatprep.subr.mxu0 0.0
    %876 = vmatpush1.msra.mxu0 0.0
    %877 = vmatprep.subr.mxu0 0.0
    %878 = vmatpush1.msra.mxu0 0.0
    %879 = vmatprep.subr.mxu0 0.0
    %880 = vmatpush1.msra.mxu0 0.0
    %881 = vmatprep.subr.mxu0 0.0
    %882 = vmatpush1.msra.mxu0 0.0
    %883 = vmatprep.subr.mxu0 0.0
    %884 = vmatpush1.msra.mxu0 0.0
    %885 = vmatprep.subr.mxu0 0.0
    %886 = vmatpush1.msra.mxu0 0.0
    %887 = vmatprep.subr.mxu0 0.0
    %888 = vmatpush1.msra.mxu0 0.0
    %889 = vmatprep.subr.mxu0 0.0
    %890 = vmatpush1.msra.mxu0 0.0
    %891 = vmatprep.subr.mxu0 0.0
    %892 = vmatpush1.msra.mxu0 0.0
    %893 = vmatprep.subr.mxu0 0.0
    %894 = vmatpush1.msra.mxu0 0.0
    %895 = vmatprep.subr.mxu0 0.0
    %896 = vmatpush1.msra.mxu0 0.0
    %897 = vmatprep.subr.mxu0 0.0
    %898 = vmatpush1.msra.mxu0 0.0
    %899 = vmatprep.subr.mxu0 0.0
    %900 = vmatpush1.msra.mxu0 0.0
    %901 = vmatprep.subr.mxu0 0.0
    %902 = vmatpush1.msra.mxu0 0.0
    %903 = vmatprep.subr.mxu0 0.0
    %904 = vmatpush1.msra.mxu0 0.0
    %905 = vmatprep.mubr.f32.mxu0 0.0
    %906 = vmatmul.mubr.f32.gmra.mrb[0].mxu0 %v605
    %v907 = vpop.f32.mrb[0].mxu0
    %v908 = vadd.f32 0.0, %v907
    %v909 = vpop.f32.mrb[0].mxu0
    %910 = vdwg.mxu0
    %912 = vrot.lane.b32.xlu0 %v908, 96
    %v913 = vpop.permute.xlu0 %912
    %v915 = vadd.f32 %v201, %v913
    %v916 = vxor.u32 %v915, 2147483648
    %v917 = vmul.f32 %v916, 1.442695
    %v918 = vpow.pop %v917
    %v919 = vadd.f32 %v918, 1.0
    %v920 = vrcp.pop %v919
    %v921 = vmul.f32 1.0, %v920
    %v922 = vmul.f32 %v764, %v594
    %924 = vrot.lane.b32.xlu0 %v840, 64
    %v925 = vpop.permute.xlu0 %924
    %v927 = vmul.f32 %v683, %v925
    %929 = vrot.lane.b32.xlu0 %v927, 32
    %v930 = vpop.permute.xlu0 %929
    %v932 = vadd.f32 %v922, %v930
    %v933 = vtanh.pop %v932
    %935 = vrot.lane.b32.xlu0 %v933, 64
    %v936 = vpop.permute.xlu0 %935
    %v938 = vmul.f32 %v921, %v936
    %v939 = vmax.f32 %v601, %v938
    %941 = vrot.lane.b32.xlu0 %v938, 32
    %v942 = vpop.permute.xlu0 %941
    %v943 = vsel %vm116, %v942, 0
    %945 = vmatprep.subr.mxu0 0.0
    %946 = vmatpush1.msra.mxu0 %v226
    %947 = vmatprep.subr.mxu0 0.0
    %948 = vmatpush1.msra.mxu0 %v227
    %949 = vmatprep.subr.mxu0 0.0
    %950 = vmatpush1.msra.mxu0 %v228
    %951 = vmatprep.subr.mxu0 0.0
    %952 = vmatpush1.msra.mxu0 %v229
    %953 = vmatprep.subr.mxu0 0.0
    %954 = vmatpush1.msra.mxu0 0.0
    %955 = vmatprep.subr.mxu0 0.0
    %956 = vmatpush1.msra.mxu0 0.0
    %957 = vmatprep.subr.mxu0 0.0
    %958 = vmatpush1.msra.mxu0 0.0
    %959 = vmatprep.subr.mxu0 0.0
    %960 = vmatpush1.msra.mxu0 0.0
    %961 = vmatprep.subr.mxu0 0.0
    %962 = vmatpush1.msra.mxu0 0.0
    %963 = vmatprep.subr.mxu0 0.0
    %964 = vmatpush1.msra.mxu0 0.0
    %965 = vmatprep.subr.mxu0 0.0
    %966 = vmatpush1.msra.mxu0 0.0
    %967 = vmatprep.subr.mxu0 0.0
    %968 = vmatpush1.msra.mxu0 0.0
    %969 = vmatprep.subr.mxu0 0.0
    %970 = vmatpush1.msra.mxu0 0.0
    %971 = vmatprep.subr.mxu0 0.0
    %972 = vmatpush1.msra.mxu0 0.0
    %973 = vmatprep.subr.mxu0 0.0
    %974 = vmatpush1.msra.mxu0 0.0
    %975 = vmatprep.subr.mxu0 0.0
    %976 = vmatpush1.msra.mxu0 0.0
    %977 = vmatprep.subr.mxu0 0.0
    %978 = vmatpush1.msra.mxu0 0.0
    %979 = vmatprep.subr.mxu0 0.0
    %980 = vmatpush1.msra.mxu0 0.0
    %981 = vmatprep.subr.mxu0 0.0
    %982 = vmatpush1.msra.mxu0 0.0
    %983 = vmatprep.subr.mxu0 0.0
    %984 = vmatpush1.msra.mxu0 0.0
    %985 = vmatprep.subr.mxu0 0.0
    %986 = vmatpush1.msra.mxu0 0.0
    %987 = vmatprep.subr.mxu0 0.0
    %988 = vmatpush1.msra.mxu0 0.0
    %989 = vmatprep.subr.mxu0 0.0
    %990 = vmatpush1.msra.mxu0 0.0
    %991 = vmatprep.subr.mxu0 0.0
    %992 = vmatpush1.msra.mxu0 0.0
    %993 = vmatprep.subr.mxu0 0.0
    %994 = vmatpush1.msra.mxu0 0.0
    %995 = vmatprep.subr.mxu0 0.0
    %996 = vmatpush1.msra.mxu0 0.0
    %997 = vmatprep.subr.mxu0 0.0
    %998 = vmatpush1.msra.mxu0 0.0
    %999 = vmatprep.subr.mxu0 0.0
    %1000 = vmatpush1.msra.mxu0 0.0
    %1001 = vmatprep.subr.mxu0 0.0
    %1002 = vmatpush1.msra.mxu0 0.0
    %1003 = vmatprep.subr.mxu0 0.0
    %1004 = vmatpush1.msra.mxu0 0.0
    %1005 = vmatprep.subr.mxu0 0.0
    %1006 = vmatpush1.msra.mxu0 0.0
    %1007 = vmatprep.subr.mxu0 0.0
    %1008 = vmatpush1.msra.mxu0 0.0
    %1009 = vmatprep.mubr.f32.mxu0 0.0
    %1010 = vmatmul.mubr.f32.gmra.mrb[0].mxu0 %v943
    %v1011 = vpop.f32.mrb[0].mxu0
    %v1012 = vadd.f32 0.0, %v1011
    %v1013 = vpop.f32.mrb[0].mxu0
    %1014 = vdwg.mxu0
    %v1015 = vadd.f32 %v219, %v1012
    %v1016 = vxor.u32 %v1015, 2147483648
    %v1017 = vmul.f32 %v1016, 1.442695
    %v1018 = vpow.pop %v1017
    %v1019 = vadd.f32 %v1018, 1.0
    %v1020 = vrcp.pop %v1019
    %v1021 = vmul.f32 1.0, %v1020
    %1022 = vmatprep.subr.mxu0 0.0
    %1023 = vmatpush1.msra.mxu0 %v230
    %1024 = vmatprep.subr.mxu0 0.0
    %1025 = vmatpush1.msra.mxu0 %v231
    %1026 = vmatprep.subr.mxu0 0.0
    %1027 = vmatpush1.msra.mxu0 %v232
    %1028 = vmatprep.subr.mxu0 0.0
    %1029 = vmatpush1.msra.mxu0 %v233
    %1030 = vmatprep.subr.mxu0 0.0
    %1031 = vmatpush1.msra.mxu0 0.0
    %1032 = vmatprep.subr.mxu0 0.0
    %1033 = vmatpush1.msra.mxu0 0.0
    %1034 = vmatprep.subr.mxu0 0.0
    %1035 = vmatpush1.msra.mxu0 0.0
    %1036 = vmatprep.subr.mxu0 0.0
    %1037 = vmatpush1.msra.mxu0 0.0
    %1038 = vmatprep.subr.mxu0 0.0
    %1039 = vmatpush1.msra.mxu0 0.0
    %1040 = vmatprep.subr.mxu0 0.0
    %1041 = vmatpush1.msra.mxu0 0.0
    %1042 = vmatprep.subr.mxu0 0.0
    %1043 = vmatpush1.msra.mxu0 0.0
    %1044 = vmatprep.subr.mxu0 0.0
    %1045 = vmatpush1.msra.mxu0 0.0
    %1046 = vmatprep.subr.mxu0 0.0
    %1047 = vmatpush1.msra.mxu0 0.0
    %1048 = vmatprep.subr.mxu0 0.0
    %1049 = vmatpush1.msra.mxu0 0.0
    %1050 = vmatprep.subr.mxu0 0.0
    %1051 = vmatpush1.msra.mxu0 0.0
    %1052 = vmatprep.subr.mxu0 0.0
    %1053 = vmatpush1.msra.mxu0 0.0
    %1054 = vmatprep.subr.mxu0 0.0
    %1055 = vmatpush1.msra.mxu0 0.0
    %1056 = vmatprep.subr.mxu0 0.0
    %1057 = vmatpush1.msra.mxu0 0.0
    %1058 = vmatprep.subr.mxu0 0.0
    %1059 = vmatpush1.msra.mxu0 0.0
    %1060 = vmatprep.subr.mxu0 0.0
    %1061 = vmatpush1.msra.mxu0 0.0
    %1062 = vmatprep.subr.mxu0 0.0
    %1063 = vmatpush1.msra.mxu0 0.0
    %1064 = vmatprep.subr.mxu0 0.0
    %1065 = vmatpush1.msra.mxu0 0.0
    %1066 = vmatprep.subr.mxu0 0.0
    %1067 = vmatpush1.msra.mxu0 0.0
    %1068 = vmatprep.subr.mxu0 0.0
    %1069 = vmatpush1.msra.mxu0 0.0
    %1070 = vmatprep.subr.mxu0 0.0
    %1071 = vmatpush1.msra.mxu0 0.0
    %1072 = vmatprep.subr.mxu0 0.0
    %1073 = vmatpush1.msra.mxu0 0.0
    %1074 = vmatprep.subr.mxu0 0.0
    %1075 = vmatpush1.msra.mxu0 0.0
    %1076 = vmatprep.subr.mxu0 0.0
    %1077 = vmatpush1.msra.mxu0 0.0
    %1078 = vmatprep.subr.mxu0 0.0
    %1079 = vmatpush1.msra.mxu0 0.0
    %1080 = vmatprep.subr.mxu0 0.0
    %1081 = vmatpush1.msra.mxu0 0.0
    %1082 = vmatprep.subr.mxu0 0.0
    %1083 = vmatpush1.msra.mxu0 0.0
    %1084 = vmatprep.subr.mxu0 0.0
    %1085 = vmatpush1.msra.mxu0 0.0
    %1086 = vmatprep.mubr.f32.mxu0 0.0
    %1087 = vmatmul.mubr.f32.gmra.mrb[0].mxu0 %v943
    %v1088 = vpop.f32.mrb[0].mxu0
    %v1089 = vadd.f32 0.0, %v1088
    %v1090 = vpop.f32.mrb[0].mxu0
    %1091 = vdwg.mxu0
    %1093 = vrot.lane.b32.xlu0 %v1089, 32
    %v1094 = vpop.permute.xlu0 %1093
    %v1096 = vadd.f32 %v219, %v1094
    %v1097 = vxor.u32 %v1096, 2147483648
    %v1098 = vmul.f32 %v1097, 1.442695
    %v1099 = vpow.pop %v1098
    %v1100 = vadd.f32 %v1099, 1.0
    %v1101 = vrcp.pop %v1100
    %v1102 = vmul.f32 1.0, %v1101
    %1103 = vmatprep.subr.mxu0 0.0
    %1104 = vmatpush1.msra.mxu0 %v234
    %1105 = vmatprep.subr.mxu0 0.0
    %1106 = vmatpush1.msra.mxu0 %v235
    %1107 = vmatprep.subr.mxu0 0.0
    %1108 = vmatpush1.msra.mxu0 %v236
    %1109 = vmatprep.subr.mxu0 0.0
    %1110 = vmatpush1.msra.mxu0 %v237
    %1111 = vmatprep.subr.mxu0 0.0
    %1112 = vmatpush1.msra.mxu0 0.0
    %1113 = vmatprep.subr.mxu0 0.0
    %1114 = vmatpush1.msra.mxu0 0.0
    %1115 = vmatprep.subr.mxu0 0.0
    %1116 = vmatpush1.msra.mxu0 0.0
    %1117 = vmatprep.subr.mxu0 0.0
    %1118 = vmatpush1.msra.mxu0 0.0
    %1119 = vmatprep.subr.mxu0 0.0
    %1120 = vmatpush1.msra.mxu0 0.0
    %1121 = vmatprep.subr.mxu0 0.0
    %1122 = vmatpush1.msra.mxu0 0.0
    %1123 = vmatprep.subr.mxu0 0.0
    %1124 = vmatpush1.msra.mxu0 0.0
    %1125 = vmatprep.subr.mxu0 0.0
    %1126 = vmatpush1.msra.mxu0 0.0
    %1127 = vmatprep.subr.mxu0 0.0
    %1128 = vmatpush1.msra.mxu0 0.0
    %1129 = vmatprep.subr.mxu0 0.0
    %1130 = vmatpush1.msra.mxu0 0.0
    %1131 = vmatprep.subr.mxu0 0.0
    %1132 = vmatpush1.msra.mxu0 0.0
    %1133 = vmatprep.subr.mxu0 0.0
    %1134 = vmatpush1.msra.mxu0 0.0
    %1135 = vmatprep.subr.mxu0 0.0
    %1136 = vmatpush1.msra.mxu0 0.0
    %1137 = vmatprep.subr.mxu0 0.0
    %1138 = vmatpush1.msra.mxu0 0.0
    %1139 = vmatprep.subr.mxu0 0.0
    %1140 = vmatpush1.msra.mxu0 0.0
    %1141 = vmatprep.subr.mxu0 0.0
    %1142 = vmatpush1.msra.mxu0 0.0
    %1143 = vmatprep.subr.mxu0 0.0
    %1144 = vmatpush1.msra.mxu0 0.0
    %1145 = vmatprep.subr.mxu0 0.0
    %1146 = vmatpush1.msra.mxu0 0.0
    %1147 = vmatprep.subr.mxu0 0.0
    %1148 = vmatpush1.msra.mxu0 0.0
    %1149 = vmatprep.subr.mxu0 0.0
    %1150 = vmatpush1.msra.mxu0 0.0
    %1151 = vmatprep.subr.mxu0 0.0
    %1152 = vmatpush1.msra.mxu0 0.0
    %1153 = vmatprep.subr.mxu0 0.0
    %1154 = vmatpush1.msra.mxu0 0.0
    %1155 = vmatprep.subr.mxu0 0.0
    %1156 = vmatpush1.msra.mxu0 0.0
    %1157 = vmatprep.subr.mxu0 0.0
    %1158 = vmatpush1.msra.mxu0 0.0
    %1159 = vmatprep.subr.mxu0 0.0
    %1160 = vmatpush1.msra.mxu0 0.0
    %1161 = vmatprep.subr.mxu0 0.0
    %1162 = vmatpush1.msra.mxu0 0.0
    %1163 = vmatprep.subr.mxu0 0.0
    %1164 = vmatpush1.msra.mxu0 0.0
    %1165 = vmatprep.subr.mxu0 0.0
    %1166 = vmatpush1.msra.mxu0 0.0
    %1167 = vmatprep.mubr.f32.mxu0 0.0
    %1168 = vmatmul.mubr.f32.gmra.mrb[0].mxu0 %v943
    %v1169 = vpop.f32.mrb[0].mxu0
    %v1170 = vadd.f32 0.0, %v1169
    %v1171 = vpop.f32.mrb[0].mxu0
    %1172 = vdwg.mxu0
    %1174 = vrot.lane.b32.xlu0 %v1170, 64
    %v1175 = vpop.permute.xlu0 %1174
    %v1177 = vadd.f32 %v219, %v1175
    %v1178 = vtanh.pop %v1177
    %1179 = vmatprep.subr.mxu0 0.0
    %1180 = vmatpush1.msra.mxu0 %v238
    %1181 = vmatprep.subr.mxu0 0.0
    %1182 = vmatpush1.msra.mxu0 %v239
    %1183 = vmatprep.subr.mxu0 0.0
    %1184 = vmatpush1.msra.mxu0 %v240
    %1185 = vmatprep.subr.mxu0 0.0
    %1186 = vmatpush1.msra.mxu0 %v241
    %1187 = vmatprep.subr.mxu0 0.0
    %1188 = vmatpush1.msra.mxu0 0.0
    %1189 = vmatprep.subr.mxu0 0.0
    %1190 = vmatpush1.msra.mxu0 0.0
    %1191 = vmatprep.subr.mxu0 0.0
    %1192 = vmatpush1.msra.mxu0 0.0
    %1193 = vmatprep.subr.mxu0 0.0
    %1194 = vmatpush1.msra.mxu0 0.0
    %1195 = vmatprep.subr.mxu0 0.0
    %1196 = vmatpush1.msra.mxu0 0.0
    %1197 = vmatprep.subr.mxu0 0.0
    %1198 = vmatpush1.msra.mxu0 0.0
    %1199 = vmatprep.subr.mxu0 0.0
    %1200 = vmatpush1.msra.mxu0 0.0
    %1201 = vmatprep.subr.mxu0 0.0
    %1202 = vmatpush1.msra.mxu0 0.0
    %1203 = vmatprep.subr.mxu0 0.0
    %1204 = vmatpush1.msra.mxu0 0.0
    %1205 = vmatprep.subr.mxu0 0.0
    %1206 = vmatpush1.msra.mxu0 0.0
    %1207 = vmatprep.subr.mxu0 0.0
    %1208 = vmatpush1.msra.mxu0 0.0
    %1209 = vmatprep.subr.mxu0 0.0
    %1210 = vmatpush1.msra.mxu0 0.0
    %1211 = vmatprep.subr.mxu0 0.0
    %1212 = vmatpush1.msra.mxu0 0.0
    %1213 = vmatprep.subr.mxu0 0.0
    %1214 = vmatpush1.msra.mxu0 0.0
    %1215 = vmatprep.subr.mxu0 0.0
    %1216 = vmatpush1.msra.mxu0 0.0
    %1217 = vmatprep.subr.mxu0 0.0
    %1218 = vmatpush1.msra.mxu0 0.0
    %1219 = vmatprep.subr.mxu0 0.0
    %1220 = vmatpush1.msra.mxu0 0.0
    %1221 = vmatprep.subr.mxu0 0.0
    %1222 = vmatpush1.msra.mxu0 0.0
    %1223 = vmatprep.subr.mxu0 0.0
    %1224 = vmatpush1.msra.mxu0 0.0
    %1225 = vmatprep.subr.mxu0 0.0
    %1226 = vmatpush1.msra.mxu0 0.0
    %1227 = vmatprep.subr.mxu0 0.0
    %1228 = vmatpush1.msra.mxu0 0.0
    %1229 = vmatprep.subr.mxu0 0.0
    %1230 = vmatpush1.msra.mxu0 0.0
    %1231 = vmatprep.subr.mxu0 0.0
    %1232 = vmatpush1.msra.mxu0 0.0
    %1233 = vmatprep.subr.mxu0 0.0
    %1234 = vmatpush1.msra.mxu0 0.0
    %1235 = vmatprep.subr.mxu0 0.0
    %1236 = vmatpush1.msra.mxu0 0.0
    %1237 = vmatprep.subr.mxu0 0.0
    %1238 = vmatpush1.msra.mxu0 0.0
    %1239 = vmatprep.subr.mxu0 0.0
    %1240 = vmatpush1.msra.mxu0 0.0
    %1241 = vmatprep.subr.mxu0 0.0
    %1242 = vmatpush1.msra.mxu0 0.0
    %1243 = vmatprep.mubr.f32.mxu0 0.0
    %1244 = vmatmul.mubr.f32.gmra.mrb[0].mxu0 %v943
    %v1245 = vpop.f32.mrb[0].mxu0
    %v1246 = vadd.f32 0.0, %v1245
    %v1247 = vpop.f32.mrb[0].mxu0
    %1248 = vdwg.mxu0
    %1250 = vrot.lane.b32.xlu0 %v1246, 96
    %v1251 = vpop.permute.xlu0 %1250
    %v1253 = vadd.f32 %v219, %v1251
    %v1254 = vxor.u32 %v1253, 2147483648
    %v1255 = vmul.f32 %v1254, 1.442695
    %v1256 = vpow.pop %v1255
    %v1257 = vadd.f32 %v1256, 1.0
    %v1258 = vrcp.pop %v1257
    %v1259 = vmul.f32 1.0, %v1258
    %v1260 = vmul.f32 %v1102, %v932
    %1262 = vrot.lane.b32.xlu0 %v1178, 64
    %v1263 = vpop.permute.xlu0 %1262
    %v1265 = vmul.f32 %v1021, %v1263
    %1267 = vrot.lane.b32.xlu0 %v1265, 32
    %v1268 = vpop.permute.xlu0 %1267
    %v1270 = vadd.f32 %v1260, %v1268
    %v1271 = vtanh.pop %v1270
    %1273 = vrot.lane.b32.xlu0 %v1271, 64
    %v1274 = vpop.permute.xlu0 %1273
    %v1276 = vmul.f32 %v1259, %v1274
    %v1277 = vmax.f32 %v939, %v1276
    %1279 = vrot.lane.b32.xlu0 %v1276, 32
    %v1280 = vpop.permute.xlu0 %1279
    %v1281 = vsel %vm116, %v1280, 0
    %1283 = vmatprep.subr.mxu0 0.0
    %1284 = vmatpush1.msra.mxu0 %v226
    %1285 = vmatprep.subr.mxu0 0.0
    %1286 = vmatpush1.msra.mxu0 %v227
    %1287 = vmatprep.subr.mxu0 0.0
    %1288 = vmatpush1.msra.mxu0 %v228
    %1289 = vmatprep.subr.mxu0 0.0
    %1290 = vmatpush1.msra.mxu0 %v229
    %1291 = vmatprep.subr.mxu0 0.0
    %1292 = vmatpush1.msra.mxu0 0.0
    %1293 = vmatprep.subr.mxu0 0.0
    %1294 = vmatpush1.msra.mxu0 0.0
    %1295 = vmatprep.subr.mxu0 0.0
    %1296 = vmatpush1.msra.mxu0 0.0
    %1297 = vmatprep.subr.mxu0 0.0
    %1298 = vmatpush1.msra.mxu0 0.0
    %1299 = vmatprep.subr.mxu0 0.0
    %1300 = vmatpush1.msra.mxu0 0.0
    %1301 = vmatprep.subr.mxu0 0.0
    %1302 = vmatpush1.msra.mxu0 0.0
    %1303 = vmatprep.subr.mxu0 0.0
    %1304 = vmatpush1.msra.mxu0 0.0
    %1305 = vmatprep.subr.mxu0 0.0
    %1306 = vmatpush1.msra.mxu0 0.0
    %1307 = vmatprep.subr.mxu0 0.0
    %1308 = vmatpush1.msra.mxu0 0.0
    %1309 = vmatprep.subr.mxu0 0.0
    %1310 = vmatpush1.msra.mxu0 0.0
    %1311 = vmatprep.subr.mxu0 0.0
    %1312 = vmatpush1.msra.mxu0 0.0
    %1313 = vmatprep.subr.mxu0 0.0
    %1314 = vmatpush1.msra.mxu0 0.0
    %1315 = vmatprep.subr.mxu0 0.0
    %1316 = vmatpush1.msra.mxu0 0.0
    %1317 = vmatprep.subr.mxu0 0.0
    %1318 = vmatpush1.msra.mxu0 0.0
    %1319 = vmatprep.subr.mxu0 0.0
    %1320 = vmatpush1.msra.mxu0 0.0
    %1321 = vmatprep.subr.mxu0 0.0
    %1322 = vmatpush1.msra.mxu0 0.0
    %1323 = vmatprep.subr.mxu0 0.0
    %1324 = vmatpush1.msra.mxu0 0.0
    %1325 = vmatprep.subr.mxu0 0.0
    %1326 = vmatpush1.msra.mxu0 0.0
    %1327 = vmatprep.subr.mxu0 0.0
    %1328 = vmatpush1.msra.mxu0 0.0
    %1329 = vmatprep.subr.mxu0 0.0
    %1330 = vmatpush1.msra.mxu0 0.0
    %1331 = vmatprep.subr.mxu0 0.0
    %1332 = vmatpush1.msra.mxu0 0.0
    %1333 = vmatprep.subr.mxu0 0.0
    %1334 = vmatpush1.msra.mxu0 0.0
    %1335 = vmatprep.subr.mxu0 0.0
    %1336 = vmatpush1.msra.mxu0 0.0
    %1337 = vmatprep.subr.mxu0 0.0
    %1338 = vmatpush1.msra.mxu0 0.0
    %1339 = vmatprep.subr.mxu0 0.0
    %1340 = vmatpush1.msra.mxu0 0.0
    %1341 = vmatprep.subr.mxu0 0.0
    %1342 = vmatpush1.msra.mxu0 0.0
    %1343 = vmatprep.subr.mxu0 0.0
    %1344 = vmatpush1.msra.mxu0 0.0
    %1345 = vmatprep.subr.mxu0 0.0
    %1346 = vmatpush1.msra.mxu0 0.0
    %1347 = vmatprep.mubr.f32.mxu0 0.0
    %1348 = vmatmul.mubr.f32.gmra.mrb[0].mxu0 %v1281
    %v1349 = vpop.f32.mrb[0].mxu0
    %v1350 = vadd.f32 0.0, %v1349
    %v1351 = vpop.f32.mrb[0].mxu0
    %1352 = vdwg.mxu0
    %v1353 = vadd.f32 %v206, %v1350
    %v1354 = vxor.u32 %v1353, 2147483648
    %v1355 = vmul.f32 %v1354, 1.442695
    %v1356 = vpow.pop %v1355
    %v1357 = vadd.f32 %v1356, 1.0
    %v1358 = vrcp.pop %v1357
    %v1359 = vmul.f32 1.0, %v1358
    %1360 = vmatprep.subr.mxu0 0.0
    %1361 = vmatpush1.msra.mxu0 %v230
    %1362 = vmatprep.subr.mxu0 0.0
    %1363 = vmatpush1.msra.mxu0 %v231
    %1364 = vmatprep.subr.mxu0 0.0
    %1365 = vmatpush1.msra.mxu0 %v232
    %1366 = vmatprep.subr.mxu0 0.0
    %1367 = vmatpush1.msra.mxu0 %v233
    %1368 = vmatprep.subr.mxu0 0.0
    %1369 = vmatpush1.msra.mxu0 0.0
    %1370 = vmatprep.subr.mxu0 0.0
    %1371 = vmatpush1.msra.mxu0 0.0
    %1372 = vmatprep.subr.mxu0 0.0
    %1373 = vmatpush1.msra.mxu0 0.0
    %1374 = vmatprep.subr.mxu0 0.0
    %1375 = vmatpush1.msra.mxu0 0.0
    %1376 = vmatprep.subr.mxu0 0.0
    %1377 = vmatpush1.msra.mxu0 0.0
    %1378 = vmatprep.subr.mxu0 0.0
    %1379 = vmatpush1.msra.mxu0 0.0
    %1380 = vmatprep.subr.mxu0 0.0
    %1381 = vmatpush1.msra.mxu0 0.0
    %1382 = vmatprep.subr.mxu0 0.0
    %1383 = vmatpush1.msra.mxu0 0.0
    %1384 = vmatprep.subr.mxu0 0.0
    %1385 = vmatpush1.msra.mxu0 0.0
    %1386 = vmatprep.subr.mxu0 0.0
    %1387 = vmatpush1.msra.mxu0 0.0
    %1388 = vmatprep.subr.mxu0 0.0
    %1389 = vmatpush1.msra.mxu0 0.0
    %1390 = vmatprep.subr.mxu0 0.0
    %1391 = vmatpush1.msra.mxu0 0.0
    %1392 = vmatprep.subr.mxu0 0.0
    %1393 = vmatpush1.msra.mxu0 0.0
    %1394 = vmatprep.subr.mxu0 0.0
    %1395 = vmatpush1.msra.mxu0 0.0
    %1396 = vmatprep.subr.mxu0 0.0
    %1397 = vmatpush1.msra.mxu0 0.0
    %1398 = vmatprep.subr.mxu0 0.0
    %1399 = vmatpush1.msra.mxu0 0.0
    %1400 = vmatprep.subr.mxu0 0.0
    %1401 = vmatpush1.msra.mxu0 0.0
    %1402 = vmatprep.subr.mxu0 0.0
    %1403 = vmatpush1.msra.mxu0 0.0
    %1404 = vmatprep.subr.mxu0 0.0
    %1405 = vmatpush1.msra.mxu0 0.0
    %1406 = vmatprep.subr.mxu0 0.0
    %1407 = vmatpush1.msra.mxu0 0.0
    %1408 = vmatprep.subr.mxu0 0.0
    %1409 = vmatpush1.msra.mxu0 0.0
    %1410 = vmatprep.subr.mxu0 0.0
    %1411 = vmatpush1.msra.mxu0 0.0
    %1412 = vmatprep.subr.mxu0 0.0
    %1413 = vmatpush1.msra.mxu0 0.0
    %1414 = vmatprep.subr.mxu0 0.0
    %1415 = vmatpush1.msra.mxu0 0.0
    %1416 = vmatprep.subr.mxu0 0.0
    %1417 = vmatpush1.msra.mxu0 0.0
    %1418 = vmatprep.subr.mxu0 0.0
    %1419 = vmatpush1.msra.mxu0 0.0
    %1420 = vmatprep.subr.mxu0 0.0
    %1421 = vmatpush1.msra.mxu0 0.0
    %1422 = vmatprep.subr.mxu0 0.0
    %1423 = vmatpush1.msra.mxu0 0.0
    %1424 = vmatprep.mubr.f32.mxu0 0.0
    %1425 = vmatmul.mubr.f32.gmra.mrb[0].mxu0 %v1281
    %v1426 = vpop.f32.mrb[0].mxu0
    %v1427 = vadd.f32 0.0, %v1426
    %v1428 = vpop.f32.mrb[0].mxu0
    %1429 = vdwg.mxu0
    %1431 = vrot.lane.b32.xlu0 %v1427, 32
    %v1432 = vpop.permute.xlu0 %1431
    %v1434 = vadd.f32 %v206, %v1432
    %v1435 = vxor.u32 %v1434, 2147483648
    %v1436 = vmul.f32 %v1435, 1.442695
    %v1437 = vpow.pop %v1436
    %v1438 = vadd.f32 %v1437, 1.0
    %v1439 = vrcp.pop %v1438
    %v1440 = vmul.f32 1.0, %v1439
    %1441 = vmatprep.subr.mxu0 0.0
    %1442 = vmatpush1.msra.mxu0 %v234
    %1443 = vmatprep.subr.mxu0 0.0
    %1444 = vmatpush1.msra.mxu0 %v235
    %1445 = vmatprep.subr.mxu0 0.0
    %1446 = vmatpush1.msra.mxu0 %v236
    %1447 = vmatprep.subr.mxu0 0.0
    %1448 = vmatpush1.msra.mxu0 %v237
    %1449 = vmatprep.subr.mxu0 0.0
    %1450 = vmatpush1.msra.mxu0 0.0
    %1451 = vmatprep.subr.mxu0 0.0
    %1452 = vmatpush1.msra.mxu0 0.0
    %1453 = vmatprep.subr.mxu0 0.0
    %1454 = vmatpush1.msra.mxu0 0.0
    %1455 = vmatprep.subr.mxu0 0.0
    %1456 = vmatpush1.msra.mxu0 0.0
    %1457 = vmatprep.subr.mxu0 0.0
    %1458 = vmatpush1.msra.mxu0 0.0
    %1459 = vmatprep.subr.mxu0 0.0
    %1460 = vmatpush1.msra.mxu0 0.0
    %1461 = vmatprep.subr.mxu0 0.0
    %1462 = vmatpush1.msra.mxu0 0.0
    %1463 = vmatprep.subr.mxu0 0.0
    %1464 = vmatpush1.msra.mxu0 0.0
    %1465 = vmatprep.subr.mxu0 0.0
    %1466 = vmatpush1.msra.mxu0 0.0
    %1467 = vmatprep.subr.mxu0 0.0
    %1468 = vmatpush1.msra.mxu0 0.0
    %1469 = vmatprep.subr.mxu0 0.0
    %1470 = vmatpush1.msra.mxu0 0.0
    %1471 = vmatprep.subr.mxu0 0.0
    %1472 = vmatpush1.msra.mxu0 0.0
    %1473 = vmatprep.subr.mxu0 0.0
    %1474 = vmatpush1.msra.mxu0 0.0
    %1475 = vmatprep.subr.mxu0 0.0
    %1476 = vmatpush1.msra.mxu0 0.0
    %1477 = vmatprep.subr.mxu0 0.0
    %1478 = vmatpush1.msra.mxu0 0.0
    %1479 = vmatprep.subr.mxu0 0.0
    %1480 = vmatpush1.msra.mxu0 0.0
    %1481 = vmatprep.subr.mxu0 0.0
    %1482 = vmatpush1.msra.mxu0 0.0
    %1483 = vmatprep.subr.mxu0 0.0
    %1484 = vmatpush1.msra.mxu0 0.0
    %1485 = vmatprep.subr.mxu0 0.0
    %1486 = vmatpush1.msra.mxu0 0.0
    %1487 = vmatprep.subr.mxu0 0.0
    %1488 = vmatpush1.msra.mxu0 0.0
    %1489 = vmatprep.subr.mxu0 0.0
    %1490 = vmatpush1.msra.mxu0 0.0
    %1491 = vmatprep.subr.mxu0 0.0
    %1492 = vmatpush1.msra.mxu0 0.0
    %1493 = vmatprep.subr.mxu0 0.0
    %1494 = vmatpush1.msra.mxu0 0.0
    %1495 = vmatprep.subr.mxu0 0.0
    %1496 = vmatpush1.msra.mxu0 0.0
    %1497 = vmatprep.subr.mxu0 0.0
    %1498 = vmatpush1.msra.mxu0 0.0
    %1499 = vmatprep.subr.mxu0 0.0
    %1500 = vmatpush1.msra.mxu0 0.0
    %1501 = vmatprep.subr.mxu0 0.0
    %1502 = vmatpush1.msra.mxu0 0.0
    %1503 = vmatprep.subr.mxu0 0.0
    %1504 = vmatpush1.msra.mxu0 0.0
    %1505 = vmatprep.mubr.f32.mxu0 0.0
    %1506 = vmatmul.mubr.f32.gmra.mrb[0].mxu0 %v1281
    %v1507 = vpop.f32.mrb[0].mxu0
    %v1508 = vadd.f32 0.0, %v1507
    %v1509 = vpop.f32.mrb[0].mxu0
    %1510 = vdwg.mxu0
    %1512 = vrot.lane.b32.xlu0 %v1508, 64
    %v1513 = vpop.permute.xlu0 %1512
    %v1515 = vadd.f32 %v206, %v1513
    %v1516 = vtanh.pop %v1515
    %1517 = vmatprep.subr.mxu0 0.0
    %1518 = vmatpush1.msra.mxu0 %v238
    %1519 = vmatprep.subr.mxu0 0.0
    %1520 = vmatpush1.msra.mxu0 %v239
    %1521 = vmatprep.subr.mxu0 0.0
    %1522 = vmatpush1.msra.mxu0 %v240
    %1523 = vmatprep.subr.mxu0 0.0
    %1524 = vmatpush1.msra.mxu0 %v241
    %1525 = vmatprep.subr.mxu0 0.0
    %1526 = vmatpush1.msra.mxu0 0.0
    %1527 = vmatprep.subr.mxu0 0.0
    %1528 = vmatpush1.msra.mxu0 0.0
    %1529 = vmatprep.subr.mxu0 0.0
    %1530 = vmatpush1.msra.mxu0 0.0
    %1531 = vmatprep.subr.mxu0 0.0
    %1532 = vmatpush1.msra.mxu0 0.0
    %1533 = vmatprep.subr.mxu0 0.0
    %1534 = vmatpush1.msra.mxu0 0.0
    %1535 = vmatprep.subr.mxu0 0.0
    %1536 = vmatpush1.msra.mxu0 0.0
    %1537 = vmatprep.subr.mxu0 0.0
    %1538 = vmatpush1.msra.mxu0 0.0
    %1539 = vmatprep.subr.mxu0 0.0
    %1540 = vmatpush1.msra.mxu0 0.0
    %1541 = vmatprep.subr.mxu0 0.0
    %1542 = vmatpush1.msra.mxu0 0.0
    %1543 = vmatprep.subr.mxu0 0.0
    %1544 = vmatpush1.msra.mxu0 0.0
    %1545 = vmatprep.subr.mxu0 0.0
    %1546 = vmatpush1.msra.mxu0 0.0
    %1547 = vmatprep.subr.mxu0 0.0
    %1548 = vmatpush1.msra.mxu0 0.0
    %1549 = vmatprep.subr.mxu0 0.0
    %1550 = vmatpush1.msra.mxu0 0.0
    %1551 = vmatprep.subr.mxu0 0.0
    %1552 = vmatpush1.msra.mxu0 0.0
    %1553 = vmatprep.subr.mxu0 0.0
    %1554 = vmatpush1.msra.mxu0 0.0
    %1555 = vmatprep.subr.mxu0 0.0
    %1556 = vmatpush1.msra.mxu0 0.0
    %1557 = vmatprep.subr.mxu0 0.0
    %1558 = vmatpush1.msra.mxu0 0.0
    %1559 = vmatprep.subr.mxu0 0.0
    %1560 = vmatpush1.msra.mxu0 0.0
    %1561 = vmatprep.subr.mxu0 0.0
    %1562 = vmatpush1.msra.mxu0 0.0
    %1563 = vmatprep.subr.mxu0 0.0
    %1564 = vmatpush1.msra.mxu0 0.0
    %1565 = vmatprep.subr.mxu0 0.0
    %1566 = vmatpush1.msra.mxu0 0.0
    %1567 = vmatprep.subr.mxu0 0.0
    %1568 = vmatpush1.msra.mxu0 0.0
    %1569 = vmatprep.subr.mxu0 0.0
    %1570 = vmatpush1.msra.mxu0 0.0
    %1571 = vmatprep.subr.mxu0 0.0
    %1572 = vmatpush1.msra.mxu0 0.0
    %1573 = vmatprep.subr.mxu0 0.0
    %1574 = vmatpush1.msra.mxu0 0.0
    %1575 = vmatprep.subr.mxu0 0.0
    %1576 = vmatpush1.msra.mxu0 0.0
    %1577 = vmatprep.subr.mxu0 0.0
    %1578 = vmatpush1.msra.mxu0 0.0
    %1579 = vmatprep.subr.mxu0 0.0
    %1580 = vmatpush1.msra.mxu0 0.0
    %1581 = vmatprep.mubr.f32.mxu0 0.0
    %1582 = vmatmul.mubr.f32.gmra.mrb[0].mxu0 %v1281
    %v1583 = vpop.f32.mrb[0].mxu0
    %v1584 = vadd.f32 0.0, %v1583
    %v1585 = vpop.f32.mrb[0].mxu0
    %1586 = vdwg.mxu0
    %1588 = vrot.lane.b32.xlu0 %v1584, 96
    %v1589 = vpop.permute.xlu0 %1588
    %v1591 = vadd.f32 %v206, %v1589
    %v1592 = vxor.u32 %v1591, 2147483648
    %v1593 = vmul.f32 %v1592, 1.442695
    %v1594 = vpow.pop %v1593
    %v1595 = vadd.f32 %v1594, 1.0
    %v1596 = vrcp.pop %v1595
    %v1597 = vmul.f32 1.0, %v1596
    %v1598 = vmul.f32 %v1440, %v1270
    %1600 = vrot.lane.b32.xlu0 %v1516, 64
    %v1601 = vpop.permute.xlu0 %1600
    %v1603 = vmul.f32 %v1359, %v1601
    %1605 = vrot.lane.b32.xlu0 %v1603, 32
    %v1606 = vpop.permute.xlu0 %1605
    %v1608 = vadd.f32 %v1598, %v1606
    %v1609 = vtanh.pop %v1608
    %1611 = vrot.lane.b32.xlu0 %v1609, 64
    %v1612 = vpop.permute.xlu0 %1611
    %v1614 = vmul.f32 %v1597, %v1612
    %v1615 = vmax.f32 %v1277, %v1614
    %1617 = vrot.lane.b32.xlu0 %v1614, 32
    %v1618 = vpop.permute.xlu0 %1617
    %v1619 = vsel %vm116, %v1618, 0
    %1621 = vmatprep.subr.mxu0 0.0
    %1622 = vmatpush1.msra.mxu0 %v226
    %1623 = vmatprep.subr.mxu0 0.0
    %1624 = vmatpush1.msra.mxu0 %v227
    %1625 = vmatprep.subr.mxu0 0.0
    %1626 = vmatpush1.msra.mxu0 %v228
    %1627 = vmatprep.subr.mxu0 0.0
    %1628 = vmatpush1.msra.mxu0 %v229
    %1629 = vmatprep.subr.mxu0 0.0
    %1630 = vmatpush1.msra.mxu0 0.0
    %1631 = vmatprep.subr.mxu0 0.0
    %1632 = vmatpush1.msra.mxu0 0.0
    %1633 = vmatprep.subr.mxu0 0.0
    %1634 = vmatpush1.msra.mxu0 0.0
    %1635 = vmatprep.subr.mxu0 0.0
    %1636 = vmatpush1.msra.mxu0 0.0
    %1637 = vmatprep.subr.mxu0 0.0
    %1638 = vmatpush1.msra.mxu0 0.0
    %1639 = vmatprep.subr.mxu0 0.0
    %1640 = vmatpush1.msra.mxu0 0.0
    %1641 = vmatprep.subr.mxu0 0.0
    %1642 = vmatpush1.msra.mxu0 0.0
    %1643 = vmatprep.subr.mxu0 0.0
    %1644 = vmatpush1.msra.mxu0 0.0
    %1645 = vmatprep.subr.mxu0 0.0
    %1646 = vmatpush1.msra.mxu0 0.0
    %1647 = vmatprep.subr.mxu0 0.0
    %1648 = vmatpush1.msra.mxu0 0.0
    %1649 = vmatprep.subr.mxu0 0.0
    %1650 = vmatpush1.msra.mxu0 0.0
    %1651 = vmatprep.subr.mxu0 0.0
    %1652 = vmatpush1.msra.mxu0 0.0
    %1653 = vmatprep.subr.mxu0 0.0
    %1654 = vmatpush1.msra.mxu0 0.0
    %1655 = vmatprep.subr.mxu0 0.0
    %1656 = vmatpush1.msra.mxu0 0.0
    %1657 = vmatprep.subr.mxu0 0.0
    %1658 = vmatpush1.msra.mxu0 0.0
    %1659 = vmatprep.subr.mxu0 0.0
    %1660 = vmatpush1.msra.mxu0 0.0
    %1661 = vmatprep.subr.mxu0 0.0
    %1662 = vmatpush1.msra.mxu0 0.0
    %1663 = vmatprep.subr.mxu0 0.0
    %1664 = vmatpush1.msra.mxu0 0.0
    %1665 = vmatprep.subr.mxu0 0.0
    %1666 = vmatpush1.msra.mxu0 0.0
    %1667 = vmatprep.subr.mxu0 0.0
    %1668 = vmatpush1.msra.mxu0 0.0
    %1669 = vmatprep.subr.mxu0 0.0
    %1670 = vmatpush1.msra.mxu0 0.0
    %1671 = vmatprep.subr.mxu0 0.0
    %1672 = vmatpush1.msra.mxu0 0.0
    %1673 = vmatprep.subr.mxu0 0.0
    %1674 = vmatpush1.msra.mxu0 0.0
    %1675 = vmatprep.subr.mxu0 0.0
    %1676 = vmatpush1.msra.mxu0 0.0
    %1677 = vmatprep.subr.mxu0 0.0
    %1678 = vmatpush1.msra.mxu0 0.0
    %1679 = vmatprep.subr.mxu0 0.0
    %1680 = vmatpush1.msra.mxu0 0.0
    %1681 = vmatprep.subr.mxu0 0.0
    %1682 = vmatpush1.msra.mxu0 0.0
    %1683 = vmatprep.subr.mxu0 0.0
    %1684 = vmatpush1.msra.mxu0 0.0
    %1685 = vmatprep.mubr.f32.mxu0 0.0
    %1686 = vmatmul.mubr.f32.gmra.mrb[0].mxu0 %v1619
    %v1687 = vpop.f32.mrb[0].mxu0
    %v1688 = vadd.f32 0.0, %v1687
    %v1689 = vpop.f32.mrb[0].mxu0
    %1690 = vdwg.mxu0
    %v1691 = vadd.f32 %v220, %v1688
    %v1692 = vxor.u32 %v1691, 2147483648
    %v1693 = vmul.f32 %v1692, 1.442695
    %v1694 = vpow.pop %v1693
    %v1695 = vadd.f32 %v1694, 1.0
    %v1696 = vrcp.pop %v1695
    %v1697 = vmul.f32 1.0, %v1696
    %1698 = vmatprep.subr.mxu0 0.0
    %1699 = vmatpush1.msra.mxu0 %v230
    %1700 = vmatprep.subr.mxu0 0.0
    %1701 = vmatpush1.msra.mxu0 %v231
    %1702 = vmatprep.subr.mxu0 0.0
    %1703 = vmatpush1.msra.mxu0 %v232
    %1704 = vmatprep.subr.mxu0 0.0
    %1705 = vmatpush1.msra.mxu0 %v233
    %1706 = vmatprep.subr.mxu0 0.0
    %1707 = vmatpush1.msra.mxu0 0.0
    %1708 = vmatprep.subr.mxu0 0.0
    %1709 = vmatpush1.msra.mxu0 0.0
    %1710 = vmatprep.subr.mxu0 0.0
    %1711 = vmatpush1.msra.mxu0 0.0
    %1712 = vmatprep.subr.mxu0 0.0
    %1713 = vmatpush1.msra.mxu0 0.0
    %1714 = vmatprep.subr.mxu0 0.0
    %1715 = vmatpush1.msra.mxu0 0.0
    %1716 = vmatprep.subr.mxu0 0.0
    %1717 = vmatpush1.msra.mxu0 0.0
    %1718 = vmatprep.subr.mxu0 0.0
    %1719 = vmatpush1.msra.mxu0 0.0
    %1720 = vmatprep.subr.mxu0 0.0
    %1721 = vmatpush1.msra.mxu0 0.0
    %1722 = vmatprep.subr.mxu0 0.0
    %1723 = vmatpush1.msra.mxu0 0.0
    %1724 = vmatprep.subr.mxu0 0.0
    %1725 = vmatpush1.msra.mxu0 0.0
    %1726 = vmatprep.subr.mxu0 0.0
    %1727 = vmatpush1.msra.mxu0 0.0
    %1728 = vmatprep.subr.mxu0 0.0
    %1729 = vmatpush1.msra.mxu0 0.0
    %1730 = vmatprep.subr.mxu0 0.0
    %1731 = vmatpush1.msra.mxu0 0.0
    %1732 = vmatprep.subr.mxu0 0.0
    %1733 = vmatpush1.msra.mxu0 0.0
    %1734 = vmatprep.subr.mxu0 0.0
    %1735 = vmatpush1.msra.mxu0 0.0
    %1736 = vmatprep.subr.mxu0 0.0
    %1737 = vmatpush1.msra.mxu0 0.0
    %1738 = vmatprep.subr.mxu0 0.0
    %1739 = vmatpush1.msra.mxu0 0.0
    %1740 = vmatprep.subr.mxu0 0.0
    %1741 = vmatpush1.msra.mxu0 0.0
    %1742 = vmatprep.subr.mxu0 0.0
    %1743 = vmatpush1.msra.mxu0 0.0
    %1744 = vmatprep.subr.mxu0 0.0
    %1745 = vmatpush1.msra.mxu0 0.0
    %1746 = vmatprep.subr.mxu0 0.0
    %1747 = vmatpush1.msra.mxu0 0.0
    %1748 = vmatprep.subr.mxu0 0.0
    %1749 = vmatpush1.msra.mxu0 0.0
    %1750 = vmatprep.subr.mxu0 0.0
    %1751 = vmatpush1.msra.mxu0 0.0
    %1752 = vmatprep.subr.mxu0 0.0
    %1753 = vmatpush1.msra.mxu0 0.0
    %1754 = vmatprep.subr.mxu0 0.0
    %1755 = vmatpush1.msra.mxu0 0.0
    %1756 = vmatprep.subr.mxu0 0.0
    %1757 = vmatpush1.msra.mxu0 0.0
    %1758 = vmatprep.subr.mxu0 0.0
    %1759 = vmatpush1.msra.mxu0 0.0
    %1760 = vmatprep.subr.mxu0 0.0
    %1761 = vmatpush1.msra.mxu0 0.0
    %1762 = vmatprep.mubr.f32.mxu0 0.0
    %1763 = vmatmul.mubr.f32.gmra.mrb[0].mxu0 %v1619
    %v1764 = vpop.f32.mrb[0].mxu0
    %v1765 = vadd.f32 0.0, %v1764
    %v1766 = vpop.f32.mrb[0].mxu0
    %1767 = vdwg.mxu0
    %1769 = vrot.lane.b32.xlu0 %v1765, 32
    %v1770 = vpop.permute.xlu0 %1769
    %v1772 = vadd.f32 %v220, %v1770
    %v1773 = vxor.u32 %v1772, 2147483648
    %v1774 = vmul.f32 %v1773, 1.442695
    %v1775 = vpow.pop %v1774
    %v1776 = vadd.f32 %v1775, 1.0
    %v1777 = vrcp.pop %v1776
    %v1778 = vmul.f32 1.0, %v1777
    %1779 = vmatprep.subr.mxu0 0.0
    %1780 = vmatpush1.msra.mxu0 %v234
    %1781 = vmatprep.subr.mxu0 0.0
    %1782 = vmatpush1.msra.mxu0 %v235
    %1783 = vmatprep.subr.mxu0 0.0
    %1784 = vmatpush1.msra.mxu0 %v236
    %1785 = vmatprep.subr.mxu0 0.0
    %1786 = vmatpush1.msra.mxu0 %v237
    %1787 = vmatprep.subr.mxu0 0.0
    %1788 = vmatpush1.msra.mxu0 0.0
    %1789 = vmatprep.subr.mxu0 0.0
    %1790 = vmatpush1.msra.mxu0 0.0
    %1791 = vmatprep.subr.mxu0 0.0
    %1792 = vmatpush1.msra.mxu0 0.0
    %1793 = vmatprep.subr.mxu0 0.0
    %1794 = vmatpush1.msra.mxu0 0.0
    %1795 = vmatprep.subr.mxu0 0.0
    %1796 = vmatpush1.msra.mxu0 0.0
    %1797 = vmatprep.subr.mxu0 0.0
    %1798 = vmatpush1.msra.mxu0 0.0
    %1799 = vmatprep.subr.mxu0 0.0
    %1800 = vmatpush1.msra.mxu0 0.0
    %1801 = vmatprep.subr.mxu0 0.0
    %1802 = vmatpush1.msra.mxu0 0.0
    %1803 = vmatprep.subr.mxu0 0.0
    %1804 = vmatpush1.msra.mxu0 0.0
    %1805 = vmatprep.subr.mxu0 0.0
    %1806 = vmatpush1.msra.mxu0 0.0
    %1807 = vmatprep.subr.mxu0 0.0
    %1808 = vmatpush1.msra.mxu0 0.0
    %1809 = vmatprep.subr.mxu0 0.0
    %1810 = vmatpush1.msra.mxu0 0.0
    %1811 = vmatprep.subr.mxu0 0.0
    %1812 = vmatpush1.msra.mxu0 0.0
    %1813 = vmatprep.subr.mxu0 0.0
    %1814 = vmatpush1.msra.mxu0 0.0
    %1815 = vmatprep.subr.mxu0 0.0
    %1816 = vmatpush1.msra.mxu0 0.0
    %1817 = vmatprep.subr.mxu0 0.0
    %1818 = vmatpush1.msra.mxu0 0.0
    %1819 = vmatprep.subr.mxu0 0.0
    %1820 = vmatpush1.msra.mxu0 0.0
    %1821 = vmatprep.subr.mxu0 0.0
    %1822 = vmatpush1.msra.mxu0 0.0
    %1823 = vmatprep.subr.mxu0 0.0
    %1824 = vmatpush1.msra.mxu0 0.0
    %1825 = vmatprep.subr.mxu0 0.0
    %1826 = vmatpush1.msra.mxu0 0.0
    %1827 = vmatprep.subr.mxu0 0.0
    %1828 = vmatpush1.msra.mxu0 0.0
    %1829 = vmatprep.subr.mxu0 0.0
    %1830 = vmatpush1.msra.mxu0 0.0
    %1831 = vmatprep.subr.mxu0 0.0
    %1832 = vmatpush1.msra.mxu0 0.0
    %1833 = vmatprep.subr.mxu0 0.0
    %1834 = vmatpush1.msra.mxu0 0.0
    %1835 = vmatprep.subr.mxu0 0.0
    %1836 = vmatpush1.msra.mxu0 0.0
    %1837 = vmatprep.subr.mxu0 0.0
    %1838 = vmatpush1.msra.mxu0 0.0
    %1839 = vmatprep.subr.mxu0 0.0
    %1840 = vmatpush1.msra.mxu0 0.0
    %1841 = vmatprep.subr.mxu0 0.0
    %1842 = vmatpush1.msra.mxu0 0.0
    %1843 = vmatprep.mubr.f32.mxu0 0.0
    %1844 = vmatmul.mubr.f32.gmra.mrb[0].mxu0 %v1619
    %v1845 = vpop.f32.mrb[0].mxu0
    %v1846 = vadd.f32 0.0, %v1845
    %v1847 = vpop.f32.mrb[0].mxu0
    %1848 = vdwg.mxu0
    %1850 = vrot.lane.b32.xlu0 %v1846, 64
    %v1851 = vpop.permute.xlu0 %1850
    %v1853 = vadd.f32 %v220, %v1851
    %v1854 = vtanh.pop %v1853
    %1855 = vmatprep.subr.mxu0 0.0
    %1856 = vmatpush1.msra.mxu0 %v238
    %1857 = vmatprep.subr.mxu0 0.0
    %1858 = vmatpush1.msra.mxu0 %v239
    %1859 = vmatprep.subr.mxu0 0.0
    %1860 = vmatpush1.msra.mxu0 %v240
    %1861 = vmatprep.subr.mxu0 0.0
    %1862 = vmatpush1.msra.mxu0 %v241
    %1863 = vmatprep.subr.mxu0 0.0
    %1864 = vmatpush1.msra.mxu0 0.0
    %1865 = vmatprep.subr.mxu0 0.0
    %1866 = vmatpush1.msra.mxu0 0.0
    %1867 = vmatprep.subr.mxu0 0.0
    %1868 = vmatpush1.msra.mxu0 0.0
    %1869 = vmatprep.subr.mxu0 0.0
    %1870 = vmatpush1.msra.mxu0 0.0
    %1871 = vmatprep.subr.mxu0 0.0
    %1872 = vmatpush1.msra.mxu0 0.0
    %1873 = vmatprep.subr.mxu0 0.0
    %1874 = vmatpush1.msra.mxu0 0.0
    %1875 = vmatprep.subr.mxu0 0.0
    %1876 = vmatpush1.msra.mxu0 0.0
    %1877 = vmatprep.subr.mxu0 0.0
    %1878 = vmatpush1.msra.mxu0 0.0
    %1879 = vmatprep.subr.mxu0 0.0
    %1880 = vmatpush1.msra.mxu0 0.0
    %1881 = vmatprep.subr.mxu0 0.0
    %1882 = vmatpush1.msra.mxu0 0.0
    %1883 = vmatprep.subr.mxu0 0.0
    %1884 = vmatpush1.msra.mxu0 0.0
    %1885 = vmatprep.subr.mxu0 0.0
    %1886 = vmatpush1.msra.mxu0 0.0
    %1887 = vmatprep.subr.mxu0 0.0
    %1888 = vmatpush1.msra.mxu0 0.0
    %1889 = vmatprep.subr.mxu0 0.0
    %1890 = vmatpush1.msra.mxu0 0.0
    %1891 = vmatprep.subr.mxu0 0.0
    %1892 = vmatpush1.msra.mxu0 0.0
    %1893 = vmatprep.subr.mxu0 0.0
    %1894 = vmatpush1.msra.mxu0 0.0
    %1895 = vmatprep.subr.mxu0 0.0
    %1896 = vmatpush1.msra.mxu0 0.0
    %1897 = vmatprep.subr.mxu0 0.0
    %1898 = vmatpush1.msra.mxu0 0.0
    %1899 = vmatprep.subr.mxu0 0.0
    %1900 = vmatpush1.msra.mxu0 0.0
    %1901 = vmatprep.subr.mxu0 0.0
    %1902 = vmatpush1.msra.mxu0 0.0
    %1903 = vmatprep.subr.mxu0 0.0
    %1904 = vmatpush1.msra.mxu0 0.0
    %1905 = vmatprep.subr.mxu0 0.0
    %1906 = vmatpush1.msra.mxu0 0.0
    %1907 = vmatprep.subr.mxu0 0.0
    %1908 = vmatpush1.msra.mxu0 0.0
    %1909 = vmatprep.subr.mxu0 0.0
    %1910 = vmatpush1.msra.mxu0 0.0
    %1911 = vmatprep.subr.mxu0 0.0
    %1912 = vmatpush1.msra.mxu0 0.0
    %1913 = vmatprep.subr.mxu0 0.0
    %1914 = vmatpush1.msra.mxu0 0.0
    %1915 = vmatprep.subr.mxu0 0.0
    %1916 = vmatpush1.msra.mxu0 0.0
    %1917 = vmatprep.subr.mxu0 0.0
    %1918 = vmatpush1.msra.mxu0 0.0
    %1919 = vmatprep.mubr.f32.mxu0 0.0
    %1920 = vmatmul.mubr.f32.gmra.mrb[0].mxu0 %v1619
    %v1921 = vpop.f32.mrb[0].mxu0
    %v1922 = vadd.f32 0.0, %v1921
    %v1923 = vpop.f32.mrb[0].mxu0
    %1924 = vdwg.mxu0
    %1926 = vrot.lane.b32.xlu0 %v1922, 96
    %v1927 = vpop.permute.xlu0 %1926
    %v1929 = vadd.f32 %v220, %v1927
    %v1930 = vxor.u32 %v1929, 2147483648
    %v1931 = vmul.f32 %v1930, 1.442695
    %v1932 = vpow.pop %v1931
    %v1933 = vadd.f32 %v1932, 1.0
    %v1934 = vrcp.pop %v1933
    %v1935 = vmul.f32 1.0, %v1934
    %v1936 = vmul.f32 %v1778, %v1608
    %1938 = vrot.lane.b32.xlu0 %v1854, 64
    %v1939 = vpop.permute.xlu0 %1938
    %v1941 = vmul.f32 %v1697, %v1939
    %1943 = vrot.lane.b32.xlu0 %v1941, 32
    %v1944 = vpop.permute.xlu0 %1943
    %v1946 = vadd.f32 %v1936, %v1944
    %v1947 = vtanh.pop %v1946
    %1949 = vrot.lane.b32.xlu0 %v1947, 64
    %v1950 = vpop.permute.xlu0 %1949
    %v1952 = vmul.f32 %v1935, %v1950
    %v1953 = vmax.f32 %v1615, %v1952
    %1955 = vrot.lane.b32.xlu0 %v1952, 32
    %v1956 = vpop.permute.xlu0 %1955
    %v1957 = vsel %vm116, %v1956, 0
    %1959 = vmatprep.subr.mxu0 0.0
    %1960 = vmatpush1.msra.mxu0 %v226
    %1961 = vmatprep.subr.mxu0 0.0
    %1962 = vmatpush1.msra.mxu0 %v227
    %1963 = vmatprep.subr.mxu0 0.0
    %1964 = vmatpush1.msra.mxu0 %v228
    %1965 = vmatprep.subr.mxu0 0.0
    %1966 = vmatpush1.msra.mxu0 %v229
    %1967 = vmatprep.subr.mxu0 0.0
    %1968 = vmatpush1.msra.mxu0 0.0
    %1969 = vmatprep.subr.mxu0 0.0
    %1970 = vmatpush1.msra.mxu0 0.0
    %1971 = vmatprep.subr.mxu0 0.0
    %1972 = vmatpush1.msra.mxu0 0.0
    %1973 = vmatprep.subr.mxu0 0.0
    %1974 = vmatpush1.msra.mxu0 0.0
    %1975 = vmatprep.subr.mxu0 0.0
    %1976 = vmatpush1.msra.mxu0 0.0
    %1977 = vmatprep.subr.mxu0 0.0
    %1978 = vmatpush1.msra.mxu0 0.0
    %1979 = vmatprep.subr.mxu0 0.0
    %1980 = vmatpush1.msra.mxu0 0.0
    %1981 = vmatprep.subr.mxu0 0.0
    %1982 = vmatpush1.msra.mxu0 0.0
    %1983 = vmatprep.subr.mxu0 0.0
    %1984 = vmatpush1.msra.mxu0 0.0
    %1985 = vmatprep.subr.mxu0 0.0
    %1986 = vmatpush1.msra.mxu0 0.0
    %1987 = vmatprep.subr.mxu0 0.0
    %1988 = vmatpush1.msra.mxu0 0.0
    %1989 = vmatprep.subr.mxu0 0.0
    %1990 = vmatpush1.msra.mxu0 0.0
    %1991 = vmatprep.subr.mxu0 0.0
    %1992 = vmatpush1.msra.mxu0 0.0
    %1993 = vmatprep.subr.mxu0 0.0
    %1994 = vmatpush1.msra.mxu0 0.0
    %1995 = vmatprep.subr.mxu0 0.0
    %1996 = vmatpush1.msra.mxu0 0.0
    %1997 = vmatprep.subr.mxu0 0.0
    %1998 = vmatpush1.msra.mxu0 0.0
    %1999 = vmatprep.subr.mxu0 0.0
    %2000 = vmatpush1.msra.mxu0 0.0
    %2001 = vmatprep.subr.mxu0 0.0
    %2002 = vmatpush1.msra.mxu0 0.0
    %2003 = vmatprep.subr.mxu0 0.0
    %2004 = vmatpush1.msra.mxu0 0.0
    %2005 = vmatprep.subr.mxu0 0.0
    %2006 = vmatpush1.msra.mxu0 0.0
    %2007 = vmatprep.subr.mxu0 0.0
    %2008 = vmatpush1.msra.mxu0 0.0
    %2009 = vmatprep.subr.mxu0 0.0
    %2010 = vmatpush1.msra.mxu0 0.0
    %2011 = vmatprep.subr.mxu0 0.0
    %2012 = vmatpush1.msra.mxu0 0.0
    %2013 = vmatprep.subr.mxu0 0.0
    %2014 = vmatpush1.msra.mxu0 0.0
    %2015 = vmatprep.subr.mxu0 0.0
    %2016 = vmatpush1.msra.mxu0 0.0
    %2017 = vmatprep.subr.mxu0 0.0
    %2018 = vmatpush1.msra.mxu0 0.0
    %2019 = vmatprep.subr.mxu0 0.0
    %2020 = vmatpush1.msra.mxu0 0.0
    %2021 = vmatprep.subr.mxu0 0.0
    %2022 = vmatpush1.msra.mxu0 0.0
    %2023 = vmatprep.mubr.f32.mxu0 0.0
    %2024 = vmatmul.mubr.f32.gmra.mrb[0].mxu0 %v1957
    %v2025 = vpop.f32.mrb[0].mxu0
    %v2026 = vadd.f32 0.0, %v2025
    %v2027 = vpop.f32.mrb[0].mxu0
    %2028 = vdwg.mxu0
    %v2029 = vadd.f32 %v211, %v2026
    %v2030 = vxor.u32 %v2029, 2147483648
    %v2031 = vmul.f32 %v2030, 1.442695
    %v2032 = vpow.pop %v2031
    %v2033 = vadd.f32 %v2032, 1.0
    %v2034 = vrcp.pop %v2033
    %v2035 = vmul.f32 1.0, %v2034
    %2036 = vmatprep.subr.mxu0 0.0
    %2037 = vmatpush1.msra.mxu0 %v230
    %2038 = vmatprep.subr.mxu0 0.0
    %2039 = vmatpush1.msra.mxu0 %v231
    %2040 = vmatprep.subr.mxu0 0.0
    %2041 = vmatpush1.msra.mxu0 %v232
    %2042 = vmatprep.subr.mxu0 0.0
    %2043 = vmatpush1.msra.mxu0 %v233
    %2044 = vmatprep.subr.mxu0 0.0
    %2045 = vmatpush1.msra.mxu0 0.0
    %2046 = vmatprep.subr.mxu0 0.0
    %2047 = vmatpush1.msra.mxu0 0.0
    %2048 = vmatprep.subr.mxu0 0.0
    %2049 = vmatpush1.msra.mxu0 0.0
    %2050 = vmatprep.subr.mxu0 0.0
    %2051 = vmatpush1.msra.mxu0 0.0
    %2052 = vmatprep.subr.mxu0 0.0
    %2053 = vmatpush1.msra.mxu0 0.0
    %2054 = vmatprep.subr.mxu0 0.0
    %2055 = vmatpush1.msra.mxu0 0.0
    %2056 = vmatprep.subr.mxu0 0.0
    %2057 = vmatpush1.msra.mxu0 0.0
    %2058 = vmatprep.subr.mxu0 0.0
    %2059 = vmatpush1.msra.mxu0 0.0
    %2060 = vmatprep.subr.mxu0 0.0
    %2061 = vmatpush1.msra.mxu0 0.0
    %2062 = vmatprep.subr.mxu0 0.0
    %2063 = vmatpush1.msra.mxu0 0.0
    %2064 = vmatprep.subr.mxu0 0.0
    %2065 = vmatpush1.msra.mxu0 0.0
    %2066 = vmatprep.subr.mxu0 0.0
    %2067 = vmatpush1.msra.mxu0 0.0
    %2068 = vmatprep.subr.mxu0 0.0
    %2069 = vmatpush1.msra.mxu0 0.0
    %2070 = vmatprep.subr.mxu0 0.0
    %2071 = vmatpush1.msra.mxu0 0.0
    %2072 = vmatprep.subr.mxu0 0.0
    %2073 = vmatpush1.msra.mxu0 0.0
    %2074 = vmatprep.subr.mxu0 0.0
    %2075 = vmatpush1.msra.mxu0 0.0
    %2076 = vmatprep.subr.mxu0 0.0
    %2077 = vmatpush1.msra.mxu0 0.0
    %2078 = vmatprep.subr.mxu0 0.0
    %2079 = vmatpush1.msra.mxu0 0.0
    %2080 = vmatprep.subr.mxu0 0.0
    %2081 = vmatpush1.msra.mxu0 0.0
    %2082 = vmatprep.subr.mxu0 0.0
    %2083 = vmatpush1.msra.mxu0 0.0
    %2084 = vmatprep.subr.mxu0 0.0
    %2085 = vmatpush1.msra.mxu0 0.0
    %2086 = vmatprep.subr.mxu0 0.0
    %2087 = vmatpush1.msra.mxu0 0.0
    %2088 = vmatprep.subr.mxu0 0.0
    %2089 = vmatpush1.msra.mxu0 0.0
    %2090 = vmatprep.subr.mxu0 0.0
    %2091 = vmatpush1.msra.mxu0 0.0
    %2092 = vmatprep.subr.mxu0 0.0
    %2093 = vmatpush1.msra.mxu0 0.0
    %2094 = vmatprep.subr.mxu0 0.0
    %2095 = vmatpush1.msra.mxu0 0.0
    %2096 = vmatprep.subr.mxu0 0.0
    %2097 = vmatpush1.msra.mxu0 0.0
    %2098 = vmatprep.subr.mxu0 0.0
    %2099 = vmatpush1.msra.mxu0 0.0
    %2100 = vmatprep.mubr.f32.mxu0 0.0
    %2101 = vmatmul.mubr.f32.gmra.mrb[0].mxu0 %v1957
    %v2102 = vpop.f32.mrb[0].mxu0
    %v2103 = vadd.f32 0.0, %v2102
    %v2104 = vpop.f32.mrb[0].mxu0
    %2105 = vdwg.mxu0
    %2107 = vrot.lane.b32.xlu0 %v2103, 32
    %v2108 = vpop.permute.xlu0 %2107
    %v2110 = vadd.f32 %v211, %v2108
    %v2111 = vxor.u32 %v2110, 2147483648
    %v2112 = vmul.f32 %v2111, 1.442695
    %v2113 = vpow.pop %v2112
    %v2114 = vadd.f32 %v2113, 1.0
    %v2115 = vrcp.pop %v2114
    %v2116 = vmul.f32 1.0, %v2115
    %2117 = vmatprep.subr.mxu0 0.0
    %2118 = vmatpush1.msra.mxu0 %v234
    %2119 = vmatprep.subr.mxu0 0.0
    %2120 = vmatpush1.msra.mxu0 %v235
    %2121 = vmatprep.subr.mxu0 0.0
    %2122 = vmatpush1.msra.mxu0 %v236
    %2123 = vmatprep.subr.mxu0 0.0
    %2124 = vmatpush1.msra.mxu0 %v237
    %2125 = vmatprep.subr.mxu0 0.0
    %2126 = vmatpush1.msra.mxu0 0.0
    %2127 = vmatprep.subr.mxu0 0.0
    %2128 = vmatpush1.msra.mxu0 0.0
    %2129 = vmatprep.subr.mxu0 0.0
    %2130 = vmatpush1.msra.mxu0 0.0
    %2131 = vmatprep.subr.mxu0 0.0
    %2132 = vmatpush1.msra.mxu0 0.0
    %2133 = vmatprep.subr.mxu0 0.0
    %2134 = vmatpush1.msra.mxu0 0.0
    %2135 = vmatprep.subr.mxu0 0.0
    %2136 = vmatpush1.msra.mxu0 0.0
    %2137 = vmatprep.subr.mxu0 0.0
    %2138 = vmatpush1.msra.mxu0 0.0
    %2139 = vmatprep.subr.mxu0 0.0
    %2140 = vmatpush1.msra.mxu0 0.0
    %2141 = vmatprep.subr.mxu0 0.0
    %2142 = vmatpush1.msra.mxu0 0.0
    %2143 = vmatprep.subr.mxu0 0.0
    %2144 = vmatpush1.msra.mxu0 0.0
    %2145 = vmatprep.subr.mxu0 0.0
    %2146 = vmatpush1.msra.mxu0 0.0
    %2147 = vmatprep.subr.mxu0 0.0
    %2148 = vmatpush1.msra.mxu0 0.0
    %2149 = vmatprep.subr.mxu0 0.0
    %2150 = vmatpush1.msra.mxu0 0.0
    %2151 = vmatprep.subr.mxu0 0.0
    %2152 = vmatpush1.msra.mxu0 0.0
    %2153 = vmatprep.subr.mxu0 0.0
    %2154 = vmatpush1.msra.mxu0 0.0
    %2155 = vmatprep.subr.mxu0 0.0
    %2156 = vmatpush1.msra.mxu0 0.0
    %2157 = vmatprep.subr.mxu0 0.0
    %2158 = vmatpush1.msra.mxu0 0.0
    %2159 = vmatprep.subr.mxu0 0.0
    %2160 = vmatpush1.msra.mxu0 0.0
    %2161 = vmatprep.subr.mxu0 0.0
    %2162 = vmatpush1.msra.mxu0 0.0
    %2163 = vmatprep.subr.mxu0 0.0
    %2164 = vmatpush1.msra.mxu0 0.0
    %2165 = vmatprep.subr.mxu0 0.0
    %2166 = vmatpush1.msra.mxu0 0.0
    %2167 = vmatprep.subr.mxu0 0.0
    %2168 = vmatpush1.msra.mxu0 0.0
    %2169 = vmatprep.subr.mxu0 0.0
    %2170 = vmatpush1.msra.mxu0 0.0
    %2171 = vmatprep.subr.mxu0 0.0
    %2172 = vmatpush1.msra.mxu0 0.0
    %2173 = vmatprep.subr.mxu0 0.0
    %2174 = vmatpush1.msra.mxu0 0.0
    %2175 = vmatprep.subr.mxu0 0.0
    %2176 = vmatpush1.msra.mxu0 0.0
    %2177 = vmatprep.subr.mxu0 0.0
    %2178 = vmatpush1.msra.mxu0 0.0
    %2179 = vmatprep.subr.mxu0 0.0
    %2180 = vmatpush1.msra.mxu0 0.0
    %2181 = vmatprep.mubr.f32.mxu0 0.0
    %2182 = vmatmul.mubr.f32.gmra.mrb[0].mxu0 %v1957
    %v2183 = vpop.f32.mrb[0].mxu0
    %v2184 = vadd.f32 0.0, %v2183
    %v2185 = vpop.f32.mrb[0].mxu0
    %2186 = vdwg.mxu0
    %2188 = vrot.lane.b32.xlu0 %v2184, 64
    %v2189 = vpop.permute.xlu0 %2188
    %v2191 = vadd.f32 %v211, %v2189
    %v2192 = vtanh.pop %v2191
    %2193 = vmatprep.subr.mxu0 0.0
    %2194 = vmatpush1.msra.mxu0 %v238
    %2195 = vmatprep.subr.mxu0 0.0
    %2196 = vmatpush1.msra.mxu0 %v239
    %2197 = vmatprep.subr.mxu0 0.0
    %2198 = vmatpush1.msra.mxu0 %v240
    %2199 = vmatprep.subr.mxu0 0.0
    %2200 = vmatpush1.msra.mxu0 %v241
    %2201 = vmatprep.subr.mxu0 0.0
    %2202 = vmatpush1.msra.mxu0 0.0
    %2203 = vmatprep.subr.mxu0 0.0
    %2204 = vmatpush1.msra.mxu0 0.0
    %2205 = vmatprep.subr.mxu0 0.0
    %2206 = vmatpush1.msra.mxu0 0.0
    %2207 = vmatprep.subr.mxu0 0.0
    %2208 = vmatpush1.msra.mxu0 0.0
    %2209 = vmatprep.subr.mxu0 0.0
    %2210 = vmatpush1.msra.mxu0 0.0
    %2211 = vmatprep.subr.mxu0 0.0
    %2212 = vmatpush1.msra.mxu0 0.0
    %2213 = vmatprep.subr.mxu0 0.0
    %2214 = vmatpush1.msra.mxu0 0.0
    %2215 = vmatprep.subr.mxu0 0.0
    %2216 = vmatpush1.msra.mxu0 0.0
    %2217 = vmatprep.subr.mxu0 0.0
    %2218 = vmatpush1.msra.mxu0 0.0
    %2219 = vmatprep.subr.mxu0 0.0
    %2220 = vmatpush1.msra.mxu0 0.0
    %2221 = vmatprep.subr.mxu0 0.0
    %2222 = vmatpush1.msra.mxu0 0.0
    %2223 = vmatprep.subr.mxu0 0.0
    %2224 = vmatpush1.msra.mxu0 0.0
    %2225 = vmatprep.subr.mxu0 0.0
    %2226 = vmatpush1.msra.mxu0 0.0
    %2227 = vmatprep.subr.mxu0 0.0
    %2228 = vmatpush1.msra.mxu0 0.0
    %2229 = vmatprep.subr.mxu0 0.0
    %2230 = vmatpush1.msra.mxu0 0.0
    %2231 = vmatprep.subr.mxu0 0.0
    %2232 = vmatpush1.msra.mxu0 0.0
    %2233 = vmatprep.subr.mxu0 0.0
    %2234 = vmatpush1.msra.mxu0 0.0
    %2235 = vmatprep.subr.mxu0 0.0
    %2236 = vmatpush1.msra.mxu0 0.0
    %2237 = vmatprep.subr.mxu0 0.0
    %2238 = vmatpush1.msra.mxu0 0.0
    %2239 = vmatprep.subr.mxu0 0.0
    %2240 = vmatpush1.msra.mxu0 0.0
    %2241 = vmatprep.subr.mxu0 0.0
    %2242 = vmatpush1.msra.mxu0 0.0
    %2243 = vmatprep.subr.mxu0 0.0
    %2244 = vmatpush1.msra.mxu0 0.0
    %2245 = vmatprep.subr.mxu0 0.0
    %2246 = vmatpush1.msra.mxu0 0.0
    %2247 = vmatprep.subr.mxu0 0.0
    %2248 = vmatpush1.msra.mxu0 0.0
    %2249 = vmatprep.subr.mxu0 0.0
    %2250 = vmatpush1.msra.mxu0 0.0
    %2251 = vmatprep.subr.mxu0 0.0
    %2252 = vmatpush1.msra.mxu0 0.0
    %2253 = vmatprep.subr.mxu0 0.0
    %2254 = vmatpush1.msra.mxu0 0.0
    %2255 = vmatprep.subr.mxu0 0.0
    %2256 = vmatpush1.msra.mxu0 0.0
    %2257 = vmatprep.mubr.f32.mxu0 0.0
    %2258 = vmatmul.mubr.f32.gmra.mrb[0].mxu0 %v1957
    %v2259 = vpop.f32.mrb[0].mxu0
    %v2260 = vadd.f32 0.0, %v2259
    %v2261 = vpop.f32.mrb[0].mxu0
    %2262 = vdwg.mxu0
    %2264 = vrot.lane.b32.xlu0 %v2260, 96
    %v2265 = vpop.permute.xlu0 %2264
    %v2267 = vadd.f32 %v211, %v2265
    %v2268 = vxor.u32 %v2267, 2147483648
    %v2269 = vmul.f32 %v2268, 1.442695
    %v2270 = vpow.pop %v2269
    %v2271 = vadd.f32 %v2270, 1.0
    %v2272 = vrcp.pop %v2271
    %v2273 = vmul.f32 1.0, %v2272
    %v2274 = vmul.f32 %v2116, %v1946
    %2276 = vrot.lane.b32.xlu0 %v2192, 64
    %v2277 = vpop.permute.xlu0 %2276
    %v2279 = vmul.f32 %v2035, %v2277
    %2281 = vrot.lane.b32.xlu0 %v2279, 32
    %v2282 = vpop.permute.xlu0 %2281
    %v2284 = vadd.f32 %v2274, %v2282
    %v2285 = vtanh.pop %v2284
    %2287 = vrot.lane.b32.xlu0 %v2285, 64
    %v2288 = vpop.permute.xlu0 %2287
    %v2290 = vmul.f32 %v2273, %v2288
    %v2291 = vmax.f32 %v1953, %v2290
    %2293 = vrot.lane.b32.xlu0 %v2290, 32
    %v2294 = vpop.permute.xlu0 %2293
    %v2295 = vsel %vm116, %v2294, 0
    %2297 = vmatprep.subr.mxu0 0.0
    %2298 = vmatpush1.msra.mxu0 %v226
    %2299 = vmatprep.subr.mxu0 0.0
    %2300 = vmatpush1.msra.mxu0 %v227
    %2301 = vmatprep.subr.mxu0 0.0
    %2302 = vmatpush1.msra.mxu0 %v228
    %2303 = vmatprep.subr.mxu0 0.0
    %2304 = vmatpush1.msra.mxu0 %v229
    %2305 = vmatprep.subr.mxu0 0.0
    %2306 = vmatpush1.msra.mxu0 0.0
    %2307 = vmatprep.subr.mxu0 0.0
    %2308 = vmatpush1.msra.mxu0 0.0
    %2309 = vmatprep.subr.mxu0 0.0
    %2310 = vmatpush1.msra.mxu0 0.0
    %2311 = vmatprep.subr.mxu0 0.0
    %2312 = vmatpush1.msra.mxu0 0.0
    %2313 = vmatprep.subr.mxu0 0.0
    %2314 = vmatpush1.msra.mxu0 0.0
    %2315 = vmatprep.subr.mxu0 0.0
    %2316 = vmatpush1.msra.mxu0 0.0
    %2317 = vmatprep.subr.mxu0 0.0
    %2318 = vmatpush1.msra.mxu0 0.0
    %2319 = vmatprep.subr.mxu0 0.0
    %2320 = vmatpush1.msra.mxu0 0.0
    %2321 = vmatprep.subr.mxu0 0.0
    %2322 = vmatpush1.msra.mxu0 0.0
    %2323 = vmatprep.subr.mxu0 0.0
    %2324 = vmatpush1.msra.mxu0 0.0
    %2325 = vmatprep.subr.mxu0 0.0
    %2326 = vmatpush1.msra.mxu0 0.0
    %2327 = vmatprep.subr.mxu0 0.0
    %2328 = vmatpush1.msra.mxu0 0.0
    %2329 = vmatprep.subr.mxu0 0.0
    %2330 = vmatpush1.msra.mxu0 0.0
    %2331 = vmatprep.subr.mxu0 0.0
    %2332 = vmatpush1.msra.mxu0 0.0
    %2333 = vmatprep.subr.mxu0 0.0
    %2334 = vmatpush1.msra.mxu0 0.0
    %2335 = vmatprep.subr.mxu0 0.0
    %2336 = vmatpush1.msra.mxu0 0.0
    %2337 = vmatprep.subr.mxu0 0.0
    %2338 = vmatpush1.msra.mxu0 0.0
    %2339 = vmatprep.subr.mxu0 0.0
    %2340 = vmatpush1.msra.mxu0 0.0
    %2341 = vmatprep.subr.mxu0 0.0
    %2342 = vmatpush1.msra.mxu0 0.0
    %2343 = vmatprep.subr.mxu0 0.0
    %2344 = vmatpush1.msra.mxu0 0.0
    %2345 = vmatprep.subr.mxu0 0.0
    %2346 = vmatpush1.msra.mxu0 0.0
    %2347 = vmatprep.subr.mxu0 0.0
    %2348 = vmatpush1.msra.mxu0 0.0
    %2349 = vmatprep.subr.mxu0 0.0
    %2350 = vmatpush1.msra.mxu0 0.0
    %2351 = vmatprep.subr.mxu0 0.0
    %2352 = vmatpush1.msra.mxu0 0.0
    %2353 = vmatprep.subr.mxu0 0.0
    %2354 = vmatpush1.msra.mxu0 0.0
    %2355 = vmatprep.subr.mxu0 0.0
    %2356 = vmatpush1.msra.mxu0 0.0
    %2357 = vmatprep.subr.mxu0 0.0
    %2358 = vmatpush1.msra.mxu0 0.0
    %2359 = vmatprep.subr.mxu0 0.0
    %2360 = vmatpush1.msra.mxu0 0.0
    %2361 = vmatprep.mubr.f32.mxu0 0.0
    %2362 = vmatmul.mubr.f32.gmra.mrb[0].mxu0 %v2295
    %v2363 = vpop.f32.mrb[0].mxu0
    %v2364 = vadd.f32 0.0, %v2363
    %v2365 = vpop.f32.mrb[0].mxu0
    %2366 = vdwg.mxu0
    %v2367 = vadd.f32 %v221, %v2364
    %v2368 = vxor.u32 %v2367, 2147483648
    %v2369 = vmul.f32 %v2368, 1.442695
    %v2370 = vpow.pop %v2369
    %v2371 = vadd.f32 %v2370, 1.0
    %v2372 = vrcp.pop %v2371
    %v2373 = vmul.f32 1.0, %v2372
    %2374 = vmatprep.subr.mxu0 0.0
    %2375 = vmatpush1.msra.mxu0 %v230
    %2376 = vmatprep.subr.mxu0 0.0
    %2377 = vmatpush1.msra.mxu0 %v231
    %2378 = vmatprep.subr.mxu0 0.0
    %2379 = vmatpush1.msra.mxu0 %v232
    %2380 = vmatprep.subr.mxu0 0.0
    %2381 = vmatpush1.msra.mxu0 %v233
    %2382 = vmatprep.subr.mxu0 0.0
    %2383 = vmatpush1.msra.mxu0 0.0
    %2384 = vmatprep.subr.mxu0 0.0
    %2385 = vmatpush1.msra.mxu0 0.0
    %2386 = vmatprep.subr.mxu0 0.0
    %2387 = vmatpush1.msra.mxu0 0.0
    %2388 = vmatprep.subr.mxu0 0.0
    %2389 = vmatpush1.msra.mxu0 0.0
    %2390 = vmatprep.subr.mxu0 0.0
    %2391 = vmatpush1.msra.mxu0 0.0
    %2392 = vmatprep.subr.mxu0 0.0
    %2393 = vmatpush1.msra.mxu0 0.0
    %2394 = vmatprep.subr.mxu0 0.0
    %2395 = vmatpush1.msra.mxu0 0.0
    %2396 = vmatprep.subr.mxu0 0.0
    %2397 = vmatpush1.msra.mxu0 0.0
    %2398 = vmatprep.subr.mxu0 0.0
    %2399 = vmatpush1.msra.mxu0 0.0
    %2400 = vmatprep.subr.mxu0 0.0
    %2401 = vmatpush1.msra.mxu0 0.0
    %2402 = vmatprep.subr.mxu0 0.0
    %2403 = vmatpush1.msra.mxu0 0.0
    %2404 = vmatprep.subr.mxu0 0.0
    %2405 = vmatpush1.msra.mxu0 0.0
    %2406 = vmatprep.subr.mxu0 0.0
    %2407 = vmatpush1.msra.mxu0 0.0
    %2408 = vmatprep.subr.mxu0 0.0
    %2409 = vmatpush1.msra.mxu0 0.0
    %2410 = vmatprep.subr.mxu0 0.0
    %2411 = vmatpush1.msra.mxu0 0.0
    %2412 = vmatprep.subr.mxu0 0.0
    %2413 = vmatpush1.msra.mxu0 0.0
    %2414 = vmatprep.subr.mxu0 0.0
    %2415 = vmatpush1.msra.mxu0 0.0
    %2416 = vmatprep.subr.mxu0 0.0
    %2417 = vmatpush1.msra.mxu0 0.0
    %2418 = vmatprep.subr.mxu0 0.0
    %2419 = vmatpush1.msra.mxu0 0.0
    %2420 = vmatprep.subr.mxu0 0.0
    %2421 = vmatpush1.msra.mxu0 0.0
    %2422 = vmatprep.subr.mxu0 0.0
    %2423 = vmatpush1.msra.mxu0 0.0
    %2424 = vmatprep.subr.mxu0 0.0
    %2425 = vmatpush1.msra.mxu0 0.0
    %2426 = vmatprep.subr.mxu0 0.0
    %2427 = vmatpush1.msra.mxu0 0.0
    %2428 = vmatprep.subr.mxu0 0.0
    %2429 = vmatpush1.msra.mxu0 0.0
    %2430 = vmatprep.subr.mxu0 0.0
    %2431 = vmatpush1.msra.mxu0 0.0
    %2432 = vmatprep.subr.mxu0 0.0
    %2433 = vmatpush1.msra.mxu0 0.0
    %2434 = vmatprep.subr.mxu0 0.0
    %2435 = vmatpush1.msra.mxu0 0.0
    %2436 = vmatprep.subr.mxu0 0.0
    %2437 = vmatpush1.msra.mxu0 0.0
    %2438 = vmatprep.mubr.f32.mxu0 0.0
    %2439 = vmatmul.mubr.f32.gmra.mrb[0].mxu0 %v2295
    %v2440 = vpop.f32.mrb[0].mxu0
    %v2441 = vadd.f32 0.0, %v2440
    %v2442 = vpop.f32.mrb[0].mxu0
    %2443 = vdwg.mxu0
    %2445 = vrot.lane.b32.xlu0 %v2441, 32
    %v2446 = vpop.permute.xlu0 %2445
    %v2448 = vadd.f32 %v221, %v2446
    %v2449 = vxor.u32 %v2448, 2147483648
    %v2450 = vmul.f32 %v2449, 1.442695
    %v2451 = vpow.pop %v2450
    %v2452 = vadd.f32 %v2451, 1.0
    %v2453 = vrcp.pop %v2452
    %v2454 = vmul.f32 1.0, %v2453
    %2455 = vmatprep.subr.mxu0 0.0
    %2456 = vmatpush1.msra.mxu0 %v234
    %2457 = vmatprep.subr.mxu0 0.0
    %2458 = vmatpush1.msra.mxu0 %v235
    %2459 = vmatprep.subr.mxu0 0.0
    %2460 = vmatpush1.msra.mxu0 %v236
    %2461 = vmatprep.subr.mxu0 0.0
    %2462 = vmatpush1.msra.mxu0 %v237
    %2463 = vmatprep.subr.mxu0 0.0
    %2464 = vmatpush1.msra.mxu0 0.0
    %2465 = vmatprep.subr.mxu0 0.0
    %2466 = vmatpush1.msra.mxu0 0.0
    %2467 = vmatprep.subr.mxu0 0.0
    %2468 = vmatpush1.msra.mxu0 0.0
    %2469 = vmatprep.subr.mxu0 0.0
    %2470 = vmatpush1.msra.mxu0 0.0
    %2471 = vmatprep.subr.mxu0 0.0
    %2472 = vmatpush1.msra.mxu0 0.0
    %2473 = vmatprep.subr.mxu0 0.0
    %2474 = vmatpush1.msra.mxu0 0.0
    %2475 = vmatprep.subr.mxu0 0.0
    %2476 = vmatpush1.msra.mxu0 0.0
    %2477 = vmatprep.subr.mxu0 0.0
    %2478 = vmatpush1.msra.mxu0 0.0
    %2479 = vmatprep.subr.mxu0 0.0
    %2480 = vmatpush1.msra.mxu0 0.0
    %2481 = vmatprep.subr.mxu0 0.0
    %2482 = vmatpush1.msra.mxu0 0.0
    %2483 = vmatprep.subr.mxu0 0.0
    %2484 = vmatpush1.msra.mxu0 0.0
    %2485 = vmatprep.subr.mxu0 0.0
    %2486 = vmatpush1.msra.mxu0 0.0
    %2487 = vmatprep.subr.mxu0 0.0
    %2488 = vmatpush1.msra.mxu0 0.0
    %2489 = vmatprep.subr.mxu0 0.0
    %2490 = vmatpush1.msra.mxu0 0.0
    %2491 = vmatprep.subr.mxu0 0.0
    %2492 = vmatpush1.msra.mxu0 0.0
    %2493 = vmatprep.subr.mxu0 0.0
    %2494 = vmatpush1.msra.mxu0 0.0
    %2495 = vmatprep.subr.mxu0 0.0
    %2496 = vmatpush1.msra.mxu0 0.0
    %2497 = vmatprep.subr.mxu0 0.0
    %2498 = vmatpush1.msra.mxu0 0.0
    %2499 = vmatprep.subr.mxu0 0.0
    %2500 = vmatpush1.msra.mxu0 0.0
    %2501 = vmatprep.subr.mxu0 0.0
    %2502 = vmatpush1.msra.mxu0 0.0
    %2503 = vmatprep.subr.mxu0 0.0
    %2504 = vmatpush1.msra.mxu0 0.0
    %2505 = vmatprep.subr.mxu0 0.0
    %2506 = vmatpush1.msra.mxu0 0.0
    %2507 = vmatprep.subr.mxu0 0.0
    %2508 = vmatpush1.msra.mxu0 0.0
    %2509 = vmatprep.subr.mxu0 0.0
    %2510 = vmatpush1.msra.mxu0 0.0
    %2511 = vmatprep.subr.mxu0 0.0
    %2512 = vmatpush1.msra.mxu0 0.0
    %2513 = vmatprep.subr.mxu0 0.0
    %2514 = vmatpush1.msra.mxu0 0.0
    %2515 = vmatprep.subr.mxu0 0.0
    %2516 = vmatpush1.msra.mxu0 0.0
    %2517 = vmatprep.subr.mxu0 0.0
    %2518 = vmatpush1.msra.mxu0 0.0
    %2519 = vmatprep.mubr.f32.mxu0 0.0
    %2520 = vmatmul.mubr.f32.gmra.mrb[0].mxu0 %v2295
    %v2521 = vpop.f32.mrb[0].mxu0
    %v2522 = vadd.f32 0.0, %v2521
    %v2523 = vpop.f32.mrb[0].mxu0
    %2524 = vdwg.mxu0
    %2526 = vrot.lane.b32.xlu0 %v2522, 64
    %v2527 = vpop.permute.xlu0 %2526
    %v2529 = vadd.f32 %v221, %v2527
    %v2530 = vtanh.pop %v2529
    %2531 = vmatprep.subr.mxu0 0.0
    %2532 = vmatpush1.msra.mxu0 %v238
    %2533 = vmatprep.subr.mxu0 0.0
    %2534 = vmatpush1.msra.mxu0 %v239
    %2535 = vmatprep.subr.mxu0 0.0
    %2536 = vmatpush1.msra.mxu0 %v240
    %2537 = vmatprep.subr.mxu0 0.0
    %2538 = vmatpush1.msra.mxu0 %v241
    %2539 = vmatprep.subr.mxu0 0.0
    %2540 = vmatpush1.msra.mxu0 0.0
    %2541 = vmatprep.subr.mxu0 0.0
    %2542 = vmatpush1.msra.mxu0 0.0
    %2543 = vmatprep.subr.mxu0 0.0
    %2544 = vmatpush1.msra.mxu0 0.0
    %2545 = vmatprep.subr.mxu0 0.0
    %2546 = vmatpush1.msra.mxu0 0.0
    %2547 = vmatprep.subr.mxu0 0.0
    %2548 = vmatpush1.msra.mxu0 0.0
    %2549 = vmatprep.subr.mxu0 0.0
    %2550 = vmatpush1.msra.mxu0 0.0
    %2551 = vmatprep.subr.mxu0 0.0
    %2552 = vmatpush1.msra.mxu0 0.0
    %2553 = vmatprep.subr.mxu0 0.0
    %2554 = vmatpush1.msra.mxu0 0.0
    %2555 = vmatprep.subr.mxu0 0.0
    %2556 = vmatpush1.msra.mxu0 0.0
    %2557 = vmatprep.subr.mxu0 0.0
    %2558 = vmatpush1.msra.mxu0 0.0
    %2559 = vmatprep.subr.mxu0 0.0
    %2560 = vmatpush1.msra.mxu0 0.0
    %2561 = vmatprep.subr.mxu0 0.0
    %2562 = vmatpush1.msra.mxu0 0.0
    %2563 = vmatprep.subr.mxu0 0.0
    %2564 = vmatpush1.msra.mxu0 0.0
    %2565 = vmatprep.subr.mxu0 0.0
    %2566 = vmatpush1.msra.mxu0 0.0
    %2567 = vmatprep.subr.mxu0 0.0
    %2568 = vmatpush1.msra.mxu0 0.0
    %2569 = vmatprep.subr.mxu0 0.0
    %2570 = vmatpush1.msra.mxu0 0.0
    %2571 = vmatprep.subr.mxu0 0.0
    %2572 = vmatpush1.msra.mxu0 0.0
    %2573 = vmatprep.subr.mxu0 0.0
    %2574 = vmatpush1.msra.mxu0 0.0
    %2575 = vmatprep.subr.mxu0 0.0
    %2576 = vmatpush1.msra.mxu0 0.0
    %2577 = vmatprep.subr.mxu0 0.0
    %2578 = vmatpush1.msra.mxu0 0.0
    %2579 = vmatprep.subr.mxu0 0.0
    %2580 = vmatpush1.msra.mxu0 0.0
    %2581 = vmatprep.subr.mxu0 0.0
    %2582 = vmatpush1.msra.mxu0 0.0
    %2583 = vmatprep.subr.mxu0 0.0
    %2584 = vmatpush1.msra.mxu0 0.0
    %2585 = vmatprep.subr.mxu0 0.0
    %2586 = vmatpush1.msra.mxu0 0.0
    %2587 = vmatprep.subr.mxu0 0.0
    %2588 = vmatpush1.msra.mxu0 0.0
    %2589 = vmatprep.subr.mxu0 0.0
    %2590 = vmatpush1.msra.mxu0 0.0
    %2591 = vmatprep.subr.mxu0 0.0
    %2592 = vmatpush1.msra.mxu0 0.0
    %2593 = vmatprep.subr.mxu0 0.0
    %2594 = vmatpush1.msra.mxu0 0.0
    %2595 = vmatprep.mubr.f32.mxu0 0.0
    %2596 = vmatmul.mubr.f32.gmra.mrb[0].mxu0 %v2295
    %v2597 = vpop.f32.mrb[0].mxu0
    %v2598 = vadd.f32 0.0, %v2597
    %v2599 = vpop.f32.mrb[0].mxu0
    %2600 = vdwg.mxu0
    %2602 = vrot.lane.b32.xlu0 %v2598, 96
    %v2603 = vpop.permute.xlu0 %2602
    %v2605 = vadd.f32 %v221, %v2603
    %v2606 = vxor.u32 %v2605, 2147483648
    %v2607 = vmul.f32 %v2606, 1.442695
    %v2608 = vpow.pop %v2607
    %v2609 = vadd.f32 %v2608, 1.0
    %v2610 = vrcp.pop %v2609
    %v2611 = vmul.f32 1.0, %v2610
    %v2612 = vmul.f32 %v2454, %v2284
    %2614 = vrot.lane.b32.xlu0 %v2530, 64
    %v2615 = vpop.permute.xlu0 %2614
    %v2617 = vmul.f32 %v2373, %v2615
    %2619 = vrot.lane.b32.xlu0 %v2617, 32
    %v2620 = vpop.permute.xlu0 %2619
    %v2622 = vadd.f32 %v2612, %v2620
    %v2623 = vtanh.pop %v2622
    %2625 = vrot.lane.b32.xlu0 %v2623, 64
    %v2626 = vpop.permute.xlu0 %2625
    %v2628 = vmul.f32 %v2611, %v2626
    %v2629 = vmax.f32 %v2291, %v2628
    %v2630 = vtanh.pop %v2629
    %v2631 = vtanh.pop %v2630
    %v2632 = vld [vmem:[%s7] sm:$0xff]
    %v2633 = vld [vmem:[%s7 + $0x8] sm:$0xff]
    %v2634 = vld [vmem:[%s7 + $0x10] sm:$0xff]
    %v2635 = vld [vmem:[%s7 + $0x18] sm:$0xff]
    %v2636 = vld [vmem:[%s8] sm:$0x1]
    %v2638 = vlaneseq
    %v2639 = vshrl.u32 %v2638, 7
    %v2640 = vsub.s32 0, %v2639
    %v2641 = vrot.slane %v2636, %v2640
    %2644 = vrot.lane.b32.xlu0 %v2631, 32
    %v2645 = vpop.permute.xlu0 %2644
    %v2646 = vsel %vm116, %v2645, 0
    %2648 = vmatprep.subr.mxu0 0.0
    %2649 = vmatpush1.msra.mxu0 %v2632
    %2650 = vmatprep.subr.mxu0 0.0
    %2651 = vmatpush1.msra.mxu0 %v2633
    %2652 = vmatprep.subr.mxu0 0.0
    %2653 = vmatpush1.msra.mxu0 %v2634
    %2654 = vmatprep.subr.mxu0 0.0
    %2655 = vmatpush1.msra.mxu0 %v2635
    %2656 = vmatprep.subr.mxu0 0.0
    %2657 = vmatpush1.msra.mxu0 0.0
    %2658 = vmatprep.subr.mxu0 0.0
    %2659 = vmatpush1.msra.mxu0 0.0
    %2660 = vmatprep.subr.mxu0 0.0
    %2661 = vmatpush1.msra.mxu0 0.0
    %2662 = vmatprep.subr.mxu0 0.0
    %2663 = vmatpush1.msra.mxu0 0.0
    %2664 = vmatprep.subr.mxu0 0.0
    %2665 = vmatpush1.msra.mxu0 0.0
    %2666 = vmatprep.subr.mxu0 0.0
    %2667 = vmatpush1.msra.mxu0 0.0
    %2668 = vmatprep.subr.mxu0 0.0
    %2669 = vmatpush1.msra.mxu0 0.0
    %2670 = vmatprep.subr.mxu0 0.0
    %2671 = vmatpush1.msra.mxu0 0.0
    %2672 = vmatprep.subr.mxu0 0.0
    %2673 = vmatpush1.msra.mxu0 0.0
    %2674 = vmatprep.subr.mxu0 0.0
    %2675 = vmatpush1.msra.mxu0 0.0
    %2676 = vmatprep.subr.mxu0 0.0
    %2677 = vmatpush1.msra.mxu0 0.0
    %2678 = vmatprep.subr.mxu0 0.0
    %2679 = vmatpush1.msra.mxu0 0.0
    %2680 = vmatprep.subr.mxu0 0.0
    %2681 = vmatpush1.msra.mxu0 0.0
    %2682 = vmatprep.subr.mxu0 0.0
    %2683 = vmatpush1.msra.mxu0 0.0
    %2684 = vmatprep.subr.mxu0 0.0
    %2685 = vmatpush1.msra.mxu0 0.0
    %2686 = vmatprep.subr.mxu0 0.0
    %2687 = vmatpush1.msra.mxu0 0.0
    %2688 = vmatprep.subr.mxu0 0.0
    %2689 = vmatpush1.msra.mxu0 0.0
    %2690 = vmatprep.subr.mxu0 0.0
    %2691 = vmatpush1.msra.mxu0 0.0
    %2692 = vmatprep.subr.mxu0 0.0
    %2693 = vmatpush1.msra.mxu0 0.0
    %2694 = vmatprep.subr.mxu0 0.0
    %2695 = vmatpush1.msra.mxu0 0.0
    %2696 = vmatprep.subr.mxu0 0.0
    %2697 = vmatpush1.msra.mxu0 0.0
    %2698 = vmatprep.subr.mxu0 0.0
    %2699 = vmatpush1.msra.mxu0 0.0
    %2700 = vmatprep.subr.mxu0 0.0
    %2701 = vmatpush1.msra.mxu0 0.0
    %2702 = vmatprep.subr.mxu0 0.0
    %2703 = vmatpush1.msra.mxu0 0.0
    %2704 = vmatprep.subr.mxu0 0.0
    %2705 = vmatpush1.msra.mxu0 0.0
    %2706 = vmatprep.subr.mxu0 0.0
    %2707 = vmatpush1.msra.mxu0 0.0
    %2708 = vmatprep.subr.mxu0 0.0
    %2709 = vmatpush1.msra.mxu0 0.0
    %2710 = vmatprep.subr.mxu0 0.0
    %2711 = vmatpush1.msra.mxu0 0.0
    %2712 = vmatprep.mubr.f32.mxu0 0.0
    %2713 = vmatmul.mubr.f32.gmra.mrb[0].mxu0 %v2646
    %v2714 = vpop.f32.mrb[0].mxu0
    %v2715 = vadd.f32 %v2641, %v2714
    %v2716 = vpop.f32.mrb[0].mxu0
    %2717 = vdwg.mxu0
    %vm2718 = vcmask 27648
    %v2719 = vsel %vm2718, %v2715, -inf
    %2720 = vmax.xlane.f32.xlu0 %v2719
    %v2721 = vpop.xlane.xlu0 %2720
    %v2722 = vsub.f32 %v2715, %v2721
    %v2723 = vmul.f32 %v2722, 1.442695
    %v2724 = vpow.pop %v2723
    %v2725 = vsel %vm2718, %v2724, 0.0
    %2726 = vadd.xlane.f32.xlu0 %v2725
    %v2727 = vpop.xlane.xlu0 %2726
    %v2728 = vrcp.pop %v2727
    %v2729 = vmul.f32 %v2724, %v2728
    %2730 = vst.msk [vmem:[#allocation11] sm:$0xf] %vm2718, %v2729
    // Predicated region
    $region58: #{lstm_forward.1} parent=1 // pred_check
      _
    $region59: #{lstm_forward.1} parent=1 // pred_check_branch
      %2732 = sbr.rel (0) target = $region61
    $region60: #{lstm_forward.1} parent=1 // pred_region
      %s2734 = ssub.s32 64, 64
      %2735 = vsyncadd [#allocation4], %s2734
      %s2737 = sshll.u32 [#allocation11], 4
      %s2738 = int_to_ptr.vmem [resolvable:$true] %s2737
      %2740 = dma.vmem_to_hbm [thread:$0]  %s2738, 64, %s9, [#allocation4]
    $region61: #{lstm_forward.1} parent=1 // pred_fallthru
      _
    // Predicated region
    $region62: #{lstm_forward.1} parent=1 // pred_check
      _
    $region63: #{lstm_forward.1} parent=1 // pred_check_branch
      %2742 = sbr.rel (0) target = $region65
    $region64: #{lstm_forward.1} parent=1 // pred_region
      %2743 = dma.done [#allocation4], 64
    $region65: #{lstm_forward.1} parent=1 // pred_fallthru
      _
    %2744 = vsyncpa [#allocation3], 1
    %2745 = vsyncpa [#allocation6], 1
    %2746 = vsyncpa [#allocation9], 1
    %2747 = vsyncpa [#allocation4], 1

</llo_original>
